<compile_context>
chip_gen: v6e
topology: v6e:2x2x1
jax: 0.10.0
libtpu: 0.0.40
codegen_flags: <defaults>
</compile_context>

<pallas_src>
import jax
import jax.numpy as jnp
from jax.experimental import pallas as pl
from jax.experimental.pallas import tpu as pltpu

LANES = 128
_TM_CANDIDATES = (512, 384, 256, 128, 64, 32, 16)


# ----------------------------- Pallas kernels ------------------------------ #

def _mm_bias_kernel(x_ref, w_ref, b_ref, o_ref):
    """o = x @ w + b  (bf16 operands, f32 accumulate, f32 epilogue)."""
    y = jnp.dot(x_ref[...], w_ref[...], preferred_element_type=jnp.float32)
    o_ref[...] = (y + b_ref[...]).astype(o_ref.dtype)


def _mm_bias_relu_kernel(x_ref, w_ref, b_ref, o_ref):
    """o = relu(x @ w + b)."""
    y = jnp.dot(x_ref[...], w_ref[...], preferred_element_type=jnp.float32)
    o_ref[...] = jnp.maximum(y + b_ref[...], 0.0).astype(o_ref.dtype)


def _mm_bias_res_relu_kernel(x_ref, w_ref, b_ref, r_ref, o_ref):
    """o = relu(r + x @ w + b)  — fused residual add for ResidualBlock."""
    y = jnp.dot(x_ref[...], w_ref[...], preferred_element_type=jnp.float32)
    o_ref[...] = jnp.maximum(y + b_ref[...] + r_ref[...], 0.0).astype(o_ref.dtype)


def _maxpool4_kernel(x_ref, o_ref):
    """2x2 max-pool: pool-mates live in four 128-lane chunks of the row."""
    x = x_ref[...]                                          # (tm, 4*128)
    o_ref[...] = jnp.maximum(
        jnp.maximum(x[:, 0 * LANES:1 * LANES], x[:, 1 * LANES:2 * LANES]),
        jnp.maximum(x[:, 2 * LANES:3 * LANES], x[:, 3 * LANES:4 * LANES]))


# ------------------------------- helpers ------------------------------------ #

def _cparams():
    return pltpu.CompilerParams(
        dimension_semantics=("parallel",),     # row grid shards across TCs (v7x)
        vmem_limit_bytes=32 * 1024 * 1024,     # safe on v5e/v6e/v7x
    )


def _round_up(x, m):
    return (x + m - 1) // m * m


def _pick_row_tiling(m):
    """Return (row_tile, padded_m). Prefer a divisor of m; else pad to 256-tiles."""
    if m <= 512:
        return m, m                            # single full block (always legal)
    for tm in _TM_CANDIDATES:
        if m % tm == 0:
            return tm, m
    return 256, _round_up(m, 256)


def _matmul_lane128(patches, w_pad, b_pad, residual=None, relu=True):
    """(relu)(patches @ w_pad + b_pad (+ residual)); output lane dim = 128."""
    m, k = patches.shape
    tm, mp = _pick_row_tiling(m)
    x = patches.astype(jnp.bfloat16)
    if mp != m:
        x = jnp.pad(x, ((0, mp - m), (0, 0)))
        if residual is not None:
            residual = jnp.pad(residual, ((0, mp - m), (0, 0)))

    in_specs = [
        pl.BlockSpec((tm, k), lambda i: (i, 0)),           # patches row tile
        pl.BlockSpec((k, LANES), lambda i: (0, 0)),        # weight: resident
        pl.BlockSpec((1, LANES), lambda i: (0, 0)),        # bias:   resident
    ]
    args = [x, w_pad, b_pad]
    if residual is not None:
        in_specs.append(pl.BlockSpec((tm, LANES), lambda i: (i, 0)))
        args.append(residual.astype(jnp.float32))
        kernel = _mm_bias_res_relu_kernel
    else:
        kernel = _mm_bias_relu_kernel if relu else _mm_bias_kernel

    out = pl.pallas_call(
        kernel,
        grid=(mp // tm,),
        in_specs=in_specs,
        out_specs=pl.BlockSpec((tm, LANES), lambda i: (i, 0)),
        out_shape=jax.ShapeDtypeStruct((mp, LANES), jnp.float32),
        compiler_params=_cparams(),
    )(*args)
    return out[:m] if mp != m else out


def _maxpool_grouped(y, n_windows):
    """y: (4*n_windows, 128) f32, the 4 pool-mates of each window consecutive."""
    x = y.reshape(n_windows, 4 * LANES)        # row-major reshape: no data movement
    tm, mp = _pick_row_tiling(n_windows)
    if mp != n_windows:
        x = jnp.pad(x, ((0, mp - n_windows), (0, 0)))
    out = pl.pallas_call(
        _maxpool4_kernel,
        grid=(mp // tm,),
        in_specs=[pl.BlockSpec((tm, 4 * LANES), lambda i: (i, 0))],
        out_specs=pl.BlockSpec((tm, LANES), lambda i: (i, 0)),
        out_shape=jax.ShapeDtypeStruct((mp, LANES), jnp.float32),
        compiler_params=_cparams(),
    )(x)
    return out[:n_windows] if mp != n_windows else out


def _im2col_nhwc(x, k, pad):
    """x: (N,H,W,C) -> patches (N,Ho,Wo,k*k*C); column order (kh, kw, cin)."""
    if pad:
        x = jnp.pad(x, ((0, 0), (pad, pad), (pad, pad), (0, 0)))
    n, h, w, c = x.shape
    ho, wo = h - k + 1, w - k + 1
    cols = [x[:, i:i + ho, j:j + wo, :] for i in range(k) for j in range(k)]
    return jnp.concatenate(cols, axis=-1), ho, wo


def _prep_weight(w):
    """PyTorch conv weight (Cout,Cin,k,k) -> (k*k*Cin, 128) bf16, zero-padded cols."""
    cout, cin, k, _ = w.shape
    wm = w.transpose(2, 3, 1, 0).reshape(k * k * cin, cout)   # rows: (kh, kw, cin)
    return jnp.pad(wm, ((0, 0), (0, LANES - cout))).astype(jnp.bfloat16)


def _prep_bias(b):
    return jnp.pad(b, (0, LANES - b.shape[0])).reshape(1, LANES).astype(jnp.float32)


# ------------------------------ Net pieces ---------------------------------- #

def conv_relu_pool(x, w, b):
    """maxpool2x2(relu(conv_valid(x, w) + b)) with NHWC activations."""
    n = x.shape[0]
    cout, _, k, _ = w.shape
    p, ho, wo = _im2col_nhwc(x, k, pad=0)
    kcols = p.shape[-1]
    # Reorder rows to (n, oh, ow, ph, pw): each output pixel's 4 pool-mates are
    # consecutive, so pooling becomes a lane-chunk max after a free reshape.
    p = p.reshape(n, ho // 2, 2, wo // 2, 2, kcols)
    p = p.transpose(0, 1, 3, 2, 4, 5).reshape(n * (ho // 2) * (wo // 2) * 4, kcols)
    y = _matmul_lane128(p, _prep_weight(w), _prep_bias(b), relu=True)   # (M, 128)
    n_win = n * (ho // 2) * (wo // 2)
    y = _maxpool_grouped(y, n_win)                                      # (n_win, 128)
    return y[:, :cout].reshape(n, ho // 2, wo // 2, cout)


def residual_block(x, w1, b1, w2, b2):
    """relu(x + conv2(relu(conv1(x)))); 3x3 convs, padding 1, NHWC layout."""
    n, h, w, c = x.shape
    m = n * h * w
    p1, _, _ = _im2col_nhwc(x, 3, pad=1)
    y = _matmul_lane128(p1.reshape(m, -1), _prep_weight(w1), _prep_bias(b1),
                        relu=True)
    y = y[:, :c].reshape(n, h, w, c)
    p2, _, _ = _im2col_nhwc(y, 3, pad=1)
    r = jnp.pad(x.reshape(m, c), ((0, 0), (0, LANES - c)))
    out = _matmul_lane128(p2.reshape(m, -1), _prep_weight(w2), _prep_bias(b2),
                          residual=r)                     # fused add + ReLU
    return out[:, :c].reshape(n, h, w, c)


def linear(x, w, b):
    """x: (N, Din), w: (Din, Dout), b: (Dout,)."""
    dout = w.shape[1]
    wm = jnp.pad(w, ((0, 0), (0, LANES - dout))).astype(jnp.bfloat16)
    y = _matmul_lane128(x, wm, _prep_bias(b), relu=False)
    return y[:, :dout]


def net_forward(x_nchw, p):
    n = x_nchw.shape[0]
    x = jnp.transpose(x_nchw, (0, 2, 3, 1))                    # NCHW -> NHWC once
    x = conv_relu_pool(x, p["conv1_w"], p["conv1_b"])          # (N,12,12,16)
    x = residual_block(x, p["rb1_c1_w"], p["rb1_c1_b"],
                       p["rb1_c2_w"], p["rb1_c2_b"])           # (N,12,12,16)
    x = conv_relu_pool(x, p["conv2_w"], p["conv2_b"])          # (N,4,4,32)
    x = residual_block(x, p["rb2_c1_w"], p["rb2_c1_b"],
                       p["rb2_c2_w"], p["rb2_c2_b"])           # (N,4,4,32)
    # PyTorch flattens NCHW (c,h,w); our activation is NHWC (h,w,c) — permute
    # the (tiny) fc weight rows instead of transposing the activation.
    _, hh, ww, cc = x.shape
    w_fc = p["fc_w"].reshape(cc, hh, ww, -1).transpose(1, 2, 0, 3)
    w_fc = w_fc.reshape(hh * ww * cc, -1)
    return linear(x.reshape(n, hh * ww * cc), w_fc, p["fc_b"])  # (N,10)


# ------------------------------ params / main -------------------------------- #

def init_params(key):
    ks = jax.random.split(key, 7)

    def w(k, shape, fan_in):
        return (jax.random.normal(k, shape, jnp.float32) / jnp.sqrt(fan_in))

    return {
        "conv1_w": w(ks[0], (16, 1, 5, 5), 1 * 25),
        "conv1_b": jnp.zeros((16,), jnp.float32),
        "conv2_w": w(ks[1], (32, 16, 5, 5), 16 * 25),
        "conv2_b": jnp.zeros((32,), jnp.float32),
        "rb1_c1_w": w(ks[2], (16, 16, 3, 3), 16 * 9),
        "rb1_c1_b": jnp.zeros((16,), jnp.float32),
        "rb1_c2_w": w(ks[3], (16, 16, 3, 3), 16 * 9),
        "rb1_c2_b": jnp.zeros((16,), jnp.float32),
        "rb2_c1_w": w(ks[4], (32, 32, 3, 3), 32 * 9),
        "rb2_c1_b": jnp.zeros((32,), jnp.float32),
        "rb2_c2_w": w(ks[5], (32, 32, 3, 3), 32 * 9),
        "rb2_c2_b": jnp.zeros((32,), jnp.float32),
        "fc_w": w(ks[6], (512, 10), 512),
        "fc_b": jnp.zeros((10,), jnp.float32),
    }


if __name__ == "__main__":
    key = jax.random.PRNGKey(0)
    k_params, k_x = jax.random.split(key)
    params = init_params(k_params)
    # MNIST-shaped input (fc's 512 = 32*4*4 pins H=W=28); small batch.
    x = jax.random.normal(k_x, (2, 1, 28, 28), jnp.float32)
    out = jax.jit(net_forward)(x, params)
    out = jax.block_until_ready(out)
    assert out.shape == (2, 10) and out.dtype == jnp.float32
    print("KERNEL_OK")
</pallas_src>

<mosaic_0001>
module attributes {stable_mosaic.version = 11 : i64} {
  func.func @_mm_bias_relu_kernel(%arg0: i32, %arg1: memref<384x25xbf16, #tpu.memory_space<vmem>>, %arg2: memref<25x128xbf16, #tpu.memory_space<vmem>>, %arg3: memref<1x128xf32, #tpu.memory_space<vmem>>, %arg4: memref<384x128xf32, #tpu.memory_space<vmem>>) attributes {dimension_semantics = [#tpu.dimension_semantics<parallel>], iteration_bounds = array<i64: 3>, scalar_prefetch = 0 : i64, scratch_operands = 0 : i64, tpu.core_type = #tpu.core_type<tc>, window_params = [{transform_indices = @transform_0, window_bounds = array<i64: 384, 25>}, {pipeline_mode = #tpu.pipeline_mode<synchronous>, transform_indices = @transform_1, window_bounds = array<i64: 25, 128>}, {pipeline_mode = #tpu.pipeline_mode<synchronous>, transform_indices = @transform_2, window_bounds = array<i64: 1, 128>}, {transform_indices = @transform_3, window_bounds = array<i64: 384, 128>}]} {
    %c0 = arith.constant 0 : index
    %c0_0 = arith.constant 0 : index
    %0 = vector.load %arg1[%c0, %c0_0] : memref<384x25xbf16, #tpu.memory_space<vmem>>, vector<384x25xbf16>
    %c0_1 = arith.constant 0 : index
    %c0_2 = arith.constant 0 : index
    %1 = vector.load %arg2[%c0_1, %c0_2] : memref<25x128xbf16, #tpu.memory_space<vmem>>, vector<25x128xbf16>
    %cst = arith.constant dense<0.000000e+00> : vector<384x128xf32>
    %2 = tpu.matmul %0, %1, %cst {dimension_numbers = #tpu.dot_dimension_numbers<[1], [0], [0], [1], [0, 0, 1, 1], [], []>} : vector<384x25xbf16>, vector<25x128xbf16>, vector<384x128xf32> -> vector<384x128xf32>
    %c0_3 = arith.constant 0 : index
    %c0_4 = arith.constant 0 : index
    %3 = vector.load %arg3[%c0_3, %c0_4] : memref<1x128xf32, #tpu.memory_space<vmem>>, vector<1x128xf32>
    %4 = vector.broadcast %3 : vector<1x128xf32> to vector<384x128xf32>
    %5 = arith.addf %2, %4 : vector<384x128xf32>
    %cst_5 = arith.constant 0.000000e+00 : f32
    %6 = vector.broadcast %cst_5 : f32 to vector<384x128xf32>
    %7 = arith.maximumf %5, %6 : vector<384x128xf32>
    %c0_6 = arith.constant 0 : index
    %c0_7 = arith.constant 0 : index
    %8 = vector.load %arg4[%c0_6, %c0_7] : memref<384x128xf32, #tpu.memory_space<vmem>>, vector<384x128xf32>
    tpu.vector_store %arg4[%c0_6, %c0_7], %7 {strides = array<i32>} : memref<384x128xf32, #tpu.memory_space<vmem>>, vector<384x128xf32>,
    return
  }
  func.func @transform_0(%arg0: i32) -> (i32, i32) {
    %c0_i32 = arith.constant 0 : i32
    %c0_i32_0 = arith.constant 0 : i32
    return %arg0, %c0_i32 : i32, i32
  }
  func.func @transform_1(%arg0: i32) -> (i32, i32) {
    %c0_i32 = arith.constant 0 : i32
    %c0_i32_0 = arith.constant 0 : i32
    %c0_i32_1 = arith.constant 0 : i32
    return %c0_i32, %c0_i32_0 : i32, i32
  }
  func.func @transform_2(%arg0: i32) -> (i32, i32) {
    %c0_i32 = arith.constant 0 : i32
    %c0_i32_0 = arith.constant 0 : i32
    %c0_i32_1 = arith.constant 0 : i32
    return %c0_i32, %c0_i32_0 : i32, i32
  }
  func.func @transform_3(%arg0: i32) -> (i32, i32) {
    %c0_i32 = arith.constant 0 : i32
    %c0_i32_0 = arith.constant 0 : i32
    return %arg0, %c0_i32 : i32, i32
  }
}

module attributes {stable_mosaic.version = 11 : i64} {
  func.func @_maxpool4_kernel(%arg0: i32, %arg1: memref<288x512xf32, #tpu.memory_space<vmem>>, %arg2: memref<288x128xf32, #tpu.memory_space<vmem>>) attributes {dimension_semantics = [#tpu.dimension_semantics<parallel>], iteration_bounds = array<i64: 1>, scalar_prefetch = 0 : i64, scratch_operands = 0 : i64, tpu.core_type = #tpu.core_type<tc>, window_params = [{transform_indices = @transform_0, window_bounds = array<i64: 288, 512>}, {transform_indices = @transform_1, window_bounds = array<i64: 288, 128>}]} {
    %c0 = arith.constant 0 : index
    %c0_0 = arith.constant 0 : index
    %0 = vector.load %arg1[%c0, %c0_0] : memref<288x512xf32, #tpu.memory_space<vmem>>, vector<288x512xf32>
    %1 = vector.extract_strided_slice %0 {offsets = [0, 0], sizes = [288, 128], strides = [1, 1]} : vector<288x512xf32> to vector<288x128xf32>
    %2 = vector.extract_strided_slice %0 {offsets = [0, 128], sizes = [288, 128], strides = [1, 1]} : vector<288x512xf32> to vector<288x128xf32>
    %3 = arith.maximumf %1, %2 : vector<288x128xf32>
    %4 = vector.extract_strided_slice %0 {offsets = [0, 256], sizes = [288, 128], strides = [1, 1]} : vector<288x512xf32> to vector<288x128xf32>
    %5 = vector.extract_strided_slice %0 {offsets = [0, 384], sizes = [288, 128], strides = [1, 1]} : vector<288x512xf32> to vector<288x128xf32>
    %6 = arith.maximumf %4, %5 : vector<288x128xf32>
    %7 = arith.maximumf %3, %6 : vector<288x128xf32>
    %c0_1 = arith.constant 0 : index
    %c0_2 = arith.constant 0 : index
    %8 = vector.load %arg2[%c0_1, %c0_2] : memref<288x128xf32, #tpu.memory_space<vmem>>, vector<288x128xf32>
    tpu.vector_store %arg2[%c0_1, %c0_2], %7 {strides = array<i32>} : memref<288x128xf32, #tpu.memory_space<vmem>>, vector<288x128xf32>,
    return
  }
  func.func @transform_0(%arg0: i32) -> (i32, i32) {
    %c0_i32 = arith.constant 0 : i32
    %c0_i32_0 = arith.constant 0 : i32
    return %arg0, %c0_i32 : i32, i32
  }
  func.func @transform_1(%arg0: i32) -> (i32, i32) {
    %c0_i32 = arith.constant 0 : i32
    %c0_i32_0 = arith.constant 0 : i32
    return %arg0, %c0_i32 : i32, i32
  }
}

module attributes {stable_mosaic.version = 11 : i64} {
  func.func @_mm_bias_relu_kernel(%arg0: i32, %arg1: memref<288x144xbf16, #tpu.memory_space<vmem>>, %arg2: memref<144x128xbf16, #tpu.memory_space<vmem>>, %arg3: memref<1x128xf32, #tpu.memory_space<vmem>>, %arg4: memref<288x128xf32, #tpu.memory_space<vmem>>) attributes {dimension_semantics = [#tpu.dimension_semantics<parallel>], iteration_bounds = array<i64: 1>, scalar_prefetch = 0 : i64, scratch_operands = 0 : i64, tpu.core_type = #tpu.core_type<tc>, window_params = [{transform_indices = @transform_0, window_bounds = array<i64: 288, 144>}, {pipeline_mode = #tpu.pipeline_mode<synchronous>, transform_indices = @transform_1, window_bounds = array<i64: 144, 128>}, {pipeline_mode = #tpu.pipeline_mode<synchronous>, transform_indices = @transform_2, window_bounds = array<i64: 1, 128>}, {transform_indices = @transform_3, window_bounds = array<i64: 288, 128>}]} {
    %c0 = arith.constant 0 : index
    %c0_0 = arith.constant 0 : index
    %0 = vector.load %arg1[%c0, %c0_0] : memref<288x144xbf16, #tpu.memory_space<vmem>>, vector<288x144xbf16>
    %c0_1 = arith.constant 0 : index
    %c0_2 = arith.constant 0 : index
    %1 = vector.load %arg2[%c0_1, %c0_2] : memref<144x128xbf16, #tpu.memory_space<vmem>>, vector<144x128xbf16>
    %cst = arith.constant dense<0.000000e+00> : vector<288x128xf32>
    %2 = tpu.matmul %0, %1, %cst {dimension_numbers = #tpu.dot_dimension_numbers<[1], [0], [0], [1], [0, 0, 1, 1], [], []>} : vector<288x144xbf16>, vector<144x128xbf16>, vector<288x128xf32> -> vector<288x128xf32>
    %c0_3 = arith.constant 0 : index
    %c0_4 = arith.constant 0 : index
    %3 = vector.load %arg3[%c0_3, %c0_4] : memref<1x128xf32, #tpu.memory_space<vmem>>, vector<1x128xf32>
    %4 = vector.broadcast %3 : vector<1x128xf32> to vector<288x128xf32>
    %5 = arith.addf %2, %4 : vector<288x128xf32>
    %cst_5 = arith.constant 0.000000e+00 : f32
    %6 = vector.broadcast %cst_5 : f32 to vector<288x128xf32>
    %7 = arith.maximumf %5, %6 : vector<288x128xf32>
    %c0_6 = arith.constant 0 : index
    %c0_7 = arith.constant 0 : index
    %8 = vector.load %arg4[%c0_6, %c0_7] : memref<288x128xf32, #tpu.memory_space<vmem>>, vector<288x128xf32>
    tpu.vector_store %arg4[%c0_6, %c0_7], %7 {strides = array<i32>} : memref<288x128xf32, #tpu.memory_space<vmem>>, vector<288x128xf32>,
    return
  }
  func.func @transform_0(%arg0: i32) -> (i32, i32) {
    %c0_i32 = arith.constant 0 : i32
    %c0_i32_0 = arith.constant 0 : i32
    return %arg0, %c0_i32 : i32, i32
  }
  func.func @transform_1(%arg0: i32) -> (i32, i32) {
    %c0_i32 = arith.constant 0 : i32
    %c0_i32_0 = arith.constant 0 : i32
    %c0_i32_1 = arith.constant 0 : i32
    return %c0_i32, %c0_i32_0 : i32, i32
  }
  func.func @transform_2(%arg0: i32) -> (i32, i32) {
    %c0_i32 = arith.constant 0 : i32
    %c0_i32_0 = arith.constant 0 : i32
    %c0_i32_1 = arith.constant 0 : i32
    return %c0_i32, %c0_i32_0 : i32, i32
  }
  func.func @transform_3(%arg0: i32) -> (i32, i32) {
    %c0_i32 = arith.constant 0 : i32
    %c0_i32_0 = arith.constant 0 : i32
    return %arg0, %c0_i32 : i32, i32
  }
}

module attributes {stable_mosaic.version = 11 : i64} {
  func.func @_mm_bias_res_relu_kernel(%arg0: i32, %arg1: memref<288x144xbf16, #tpu.memory_space<vmem>>, %arg2: memref<144x128xbf16, #tpu.memory_space<vmem>>, %arg3: memref<1x128xf32, #tpu.memory_space<vmem>>, %arg4: memref<288x128xf32, #tpu.memory_space<vmem>>, %arg5: memref<288x128xf32, #tpu.memory_space<vmem>>) attributes {dimension_semantics = [#tpu.dimension_semantics<parallel>], iteration_bounds = array<i64: 1>, scalar_prefetch = 0 : i64, scratch_operands = 0 : i64, tpu.core_type = #tpu.core_type<tc>, window_params = [{transform_indices = @transform_0, window_bounds = array<i64: 288, 144>}, {pipeline_mode = #tpu.pipeline_mode<synchronous>, transform_indices = @transform_1, window_bounds = array<i64: 144, 128>}, {pipeline_mode = #tpu.pipeline_mode<synchronous>, transform_indices = @transform_2, window_bounds = array<i64: 1, 128>}, {transform_indices = @transform_3, window_bounds = array<i64: 288, 128>}, {transform_indices = @transform_4, window_bounds = array<i64: 288, 128>}]} {
    %c0 = arith.constant 0 : index
    %c0_0 = arith.constant 0 : index
    %0 = vector.load %arg1[%c0, %c0_0] : memref<288x144xbf16, #tpu.memory_space<vmem>>, vector<288x144xbf16>
    %c0_1 = arith.constant 0 : index
    %c0_2 = arith.constant 0 : index
    %1 = vector.load %arg2[%c0_1, %c0_2] : memref<144x128xbf16, #tpu.memory_space<vmem>>, vector<144x128xbf16>
    %cst = arith.constant dense<0.000000e+00> : vector<288x128xf32>
    %2 = tpu.matmul %0, %1, %cst {dimension_numbers = #tpu.dot_dimension_numbers<[1], [0], [0], [1], [0, 0, 1, 1], [], []>} : vector<288x144xbf16>, vector<144x128xbf16>, vector<288x128xf32> -> vector<288x128xf32>
    %c0_3 = arith.constant 0 : index
    %c0_4 = arith.constant 0 : index
    %3 = vector.load %arg3[%c0_3, %c0_4] : memref<1x128xf32, #tpu.memory_space<vmem>>, vector<1x128xf32>
    %4 = vector.broadcast %3 : vector<1x128xf32> to vector<288x128xf32>
    %5 = arith.addf %2, %4 : vector<288x128xf32>
    %c0_5 = arith.constant 0 : index
    %c0_6 = arith.constant 0 : index
    %6 = vector.load %arg4[%c0_5, %c0_6] : memref<288x128xf32, #tpu.memory_space<vmem>>, vector<288x128xf32>
    %7 = arith.addf %5, %6 : vector<288x128xf32>
    %cst_7 = arith.constant 0.000000e+00 : f32
    %8 = vector.broadcast %cst_7 : f32 to vector<288x128xf32>
    %9 = arith.maximumf %7, %8 : vector<288x128xf32>
    %c0_8 = arith.constant 0 : index
    %c0_9 = arith.constant 0 : index
    %10 = vector.load %arg5[%c0_8, %c0_9] : memref<288x128xf32, #tpu.memory_space<vmem>>, vector<288x128xf32>
    tpu.vector_store %arg5[%c0_8, %c0_9], %9 {strides = array<i32>} : memref<288x128xf32, #tpu.memory_space<vmem>>, vector<288x128xf32>,
    return
  }
  func.func @transform_0(%arg0: i32) -> (i32, i32) {
    %c0_i32 = arith.constant 0 : i32
    %c0_i32_0 = arith.constant 0 : i32
    return %arg0, %c0_i32 : i32, i32
  }
  func.func @transform_1(%arg0: i32) -> (i32, i32) {
    %c0_i32 = arith.constant 0 : i32
    %c0_i32_0 = arith.constant 0 : i32
    %c0_i32_1 = arith.constant 0 : i32
    return %c0_i32, %c0_i32_0 : i32, i32
  }
  func.func @transform_2(%arg0: i32) -> (i32, i32) {
    %c0_i32 = arith.constant 0 : i32
    %c0_i32_0 = arith.constant 0 : i32
    %c0_i32_1 = arith.constant 0 : i32
    return %c0_i32, %c0_i32_0 : i32, i32
  }
  func.func @transform_3(%arg0: i32) -> (i32, i32) {
    %c0_i32 = arith.constant 0 : i32
    %c0_i32_0 = arith.constant 0 : i32
    return %arg0, %c0_i32 : i32, i32
  }
  func.func @transform_4(%arg0: i32) -> (i32, i32) {
    %c0_i32 = arith.constant 0 : i32
    %c0_i32_0 = arith.constant 0 : i32
    return %arg0, %c0_i32 : i32, i32
  }
}

module attributes {stable_mosaic.version = 11 : i64} {
  func.func @_mm_bias_relu_kernel(%arg0: i32, %arg1: memref<128x400xbf16, #tpu.memory_space<vmem>>, %arg2: memref<400x128xbf16, #tpu.memory_space<vmem>>, %arg3: memref<1x128xf32, #tpu.memory_space<vmem>>, %arg4: memref<128x128xf32, #tpu.memory_space<vmem>>) attributes {dimension_semantics = [#tpu.dimension_semantics<parallel>], iteration_bounds = array<i64: 1>, scalar_prefetch = 0 : i64, scratch_operands = 0 : i64, tpu.core_type = #tpu.core_type<tc>, window_params = [{transform_indices = @transform_0, window_bounds = array<i64: 128, 400>}, {pipeline_mode = #tpu.pipeline_mode<synchronous>, transform_indices = @transform_1, window_bounds = array<i64: 400, 128>}, {pipeline_mode = #tpu.pipeline_mode<synchronous>, transform_indices = @transform_2, window_bounds = array<i64: 1, 128>}, {transform_indices = @transform_3, window_bounds = array<i64: 128, 128>}]} {
    %c0 = arith.constant 0 : index
    %c0_0 = arith.constant 0 : index
    %0 = vector.load %arg1[%c0, %c0_0] : memref<128x400xbf16, #tpu.memory_space<vmem>>, vector<128x400xbf16>
    %c0_1 = arith.constant 0 : index
    %c0_2 = arith.constant 0 : index
    %1 = vector.load %arg2[%c0_1, %c0_2] : memref<400x128xbf16, #tpu.memory_space<vmem>>, vector<400x128xbf16>
    %cst = arith.constant dense<0.000000e+00> : vector<128x128xf32>
    %2 = tpu.matmul %0, %1, %cst {dimension_numbers = #tpu.dot_dimension_numbers<[1], [0], [0], [1], [0, 0, 1, 1], [], []>} : vector<128x400xbf16>, vector<400x128xbf16>, vector<128x128xf32> -> vector<128x128xf32>
    %c0_3 = arith.constant 0 : index
    %c0_4 = arith.constant 0 : index
    %3 = vector.load %arg3[%c0_3, %c0_4] : memref<1x128xf32, #tpu.memory_space<vmem>>, vector<1x128xf32>
    %4 = vector.broadcast %3 : vector<1x128xf32> to vector<128x128xf32>
    %5 = arith.addf %2, %4 : vector<128x128xf32>
    %cst_5 = arith.constant 0.000000e+00 : f32
    %6 = vector.broadcast %cst_5 : f32 to vector<128x128xf32>
    %7 = arith.maximumf %5, %6 : vector<128x128xf32>
    %c0_6 = arith.constant 0 : index
    %c0_7 = arith.constant 0 : index
    %8 = vector.load %arg4[%c0_6, %c0_7] : memref<128x128xf32, #tpu.memory_space<vmem>>, vector<128x128xf32>
    tpu.vector_store %arg4[%c0_6, %c0_7], %7 {strides = array<i32>} : memref<128x128xf32, #tpu.memory_space<vmem>>, vector<128x128xf32>,
    return
  }
  func.func @transform_0(%arg0: i32) -> (i32, i32) {
    %c0_i32 = arith.constant 0 : i32
    %c0_i32_0 = arith.constant 0 : i32
    return %arg0, %c0_i32 : i32, i32
  }
  func.func @transform_1(%arg0: i32) -> (i32, i32) {
    %c0_i32 = arith.constant 0 : i32
    %c0_i32_0 = arith.constant 0 : i32
    %c0_i32_1 = arith.constant 0 : i32
    return %c0_i32, %c0_i32_0 : i32, i32
  }
  func.func @transform_2(%arg0: i32) -> (i32, i32) {
    %c0_i32 = arith.constant 0 : i32
    %c0_i32_0 = arith.constant 0 : i32
    %c0_i32_1 = arith.constant 0 : i32
    return %c0_i32, %c0_i32_0 : i32, i32
  }
  func.func @transform_3(%arg0: i32) -> (i32, i32) {
    %c0_i32 = arith.constant 0 : i32
    %c0_i32_0 = arith.constant 0 : i32
    return %arg0, %c0_i32 : i32, i32
  }
}

module attributes {stable_mosaic.version = 11 : i64} {
  func.func @_maxpool4_kernel(%arg0: i32, %arg1: memref<32x512xf32, #tpu.memory_space<vmem>>, %arg2: memref<32x128xf32, #tpu.memory_space<vmem>>) attributes {dimension_semantics = [#tpu.dimension_semantics<parallel>], iteration_bounds = array<i64: 1>, scalar_prefetch = 0 : i64, scratch_operands = 0 : i64, tpu.core_type = #tpu.core_type<tc>, window_params = [{transform_indices = @transform_0, window_bounds = array<i64: 32, 512>}, {transform_indices = @transform_1, window_bounds = array<i64: 32, 128>}]} {
    %c0 = arith.constant 0 : index
    %c0_0 = arith.constant 0 : index
    %0 = vector.load %arg1[%c0, %c0_0] : memref<32x512xf32, #tpu.memory_space<vmem>>, vector<32x512xf32>
    %1 = vector.extract_strided_slice %0 {offsets = [0, 0], sizes = [32, 128], strides = [1, 1]} : vector<32x512xf32> to vector<32x128xf32>
    %2 = vector.extract_strided_slice %0 {offsets = [0, 128], sizes = [32, 128], strides = [1, 1]} : vector<32x512xf32> to vector<32x128xf32>
    %3 = arith.maximumf %1, %2 : vector<32x128xf32>
    %4 = vector.extract_strided_slice %0 {offsets = [0, 256], sizes = [32, 128], strides = [1, 1]} : vector<32x512xf32> to vector<32x128xf32>
    %5 = vector.extract_strided_slice %0 {offsets = [0, 384], sizes = [32, 128], strides = [1, 1]} : vector<32x512xf32> to vector<32x128xf32>
    %6 = arith.maximumf %4, %5 : vector<32x128xf32>
    %7 = arith.maximumf %3, %6 : vector<32x128xf32>
    %c0_1 = arith.constant 0 : index
    %c0_2 = arith.constant 0 : index
    %8 = vector.load %arg2[%c0_1, %c0_2] : memref<32x128xf32, #tpu.memory_space<vmem>>, vector<32x128xf32>
    tpu.vector_store %arg2[%c0_1, %c0_2], %7 {strides = array<i32>} : memref<32x128xf32, #tpu.memory_space<vmem>>, vector<32x128xf32>,
    return
  }
  func.func @transform_0(%arg0: i32) -> (i32, i32) {
    %c0_i32 = arith.constant 0 : i32
    %c0_i32_0 = arith.constant 0 : i32
    return %arg0, %c0_i32 : i32, i32
  }
  func.func @transform_1(%arg0: i32) -> (i32, i32) {
    %c0_i32 = arith.constant 0 : i32
    %c0_i32_0 = arith.constant 0 : i32
    return %arg0, %c0_i32 : i32, i32
  }
}

module attributes {stable_mosaic.version = 11 : i64} {
  func.func @_mm_bias_relu_kernel(%arg0: i32, %arg1: memref<32x288xbf16, #tpu.memory_space<vmem>>, %arg2: memref<288x128xbf16, #tpu.memory_space<vmem>>, %arg3: memref<1x128xf32, #tpu.memory_space<vmem>>, %arg4: memref<32x128xf32, #tpu.memory_space<vmem>>) attributes {dimension_semantics = [#tpu.dimension_semantics<parallel>], iteration_bounds = array<i64: 1>, scalar_prefetch = 0 : i64, scratch_operands = 0 : i64, tpu.core_type = #tpu.core_type<tc>, window_params = [{transform_indices = @transform_0, window_bounds = array<i64: 32, 288>}, {pipeline_mode = #tpu.pipeline_mode<synchronous>, transform_indices = @transform_1, window_bounds = array<i64: 288, 128>}, {pipeline_mode = #tpu.pipeline_mode<synchronous>, transform_indices = @transform_2, window_bounds = array<i64: 1, 128>}, {transform_indices = @transform_3, window_bounds = array<i64: 32, 128>}]} {
    %c0 = arith.constant 0 : index
    %c0_0 = arith.constant 0 : index
    %0 = vector.load %arg1[%c0, %c0_0] : memref<32x288xbf16, #tpu.memory_space<vmem>>, vector<32x288xbf16>
    %c0_1 = arith.constant 0 : index
    %c0_2 = arith.constant 0 : index
    %1 = vector.load %arg2[%c0_1, %c0_2] : memref<288x128xbf16, #tpu.memory_space<vmem>>, vector<288x128xbf16>
    %cst = arith.constant dense<0.000000e+00> : vector<32x128xf32>
    %2 = tpu.matmul %0, %1, %cst {dimension_numbers = #tpu.dot_dimension_numbers<[1], [0], [0], [1], [0, 0, 1, 1], [], []>} : vector<32x288xbf16>, vector<288x128xbf16>, vector<32x128xf32> -> vector<32x128xf32>
    %c0_3 = arith.constant 0 : index
    %c0_4 = arith.constant 0 : index
    %3 = vector.load %arg3[%c0_3, %c0_4] : memref<1x128xf32, #tpu.memory_space<vmem>>, vector<1x128xf32>
    %4 = vector.broadcast %3 : vector<1x128xf32> to vector<32x128xf32>
    %5 = arith.addf %2, %4 : vector<32x128xf32>
    %cst_5 = arith.constant 0.000000e+00 : f32
    %6 = vector.broadcast %cst_5 : f32 to vector<32x128xf32>
    %7 = arith.maximumf %5, %6 : vector<32x128xf32>
    %c0_6 = arith.constant 0 : index
    %c0_7 = arith.constant 0 : index
    %8 = vector.load %arg4[%c0_6, %c0_7] : memref<32x128xf32, #tpu.memory_space<vmem>>, vector<32x128xf32>
    tpu.vector_store %arg4[%c0_6, %c0_7], %7 {strides = array<i32>} : memref<32x128xf32, #tpu.memory_space<vmem>>, vector<32x128xf32>,
    return
  }
  func.func @transform_0(%arg0: i32) -> (i32, i32) {
    %c0_i32 = arith.constant 0 : i32
    %c0_i32_0 = arith.constant 0 : i32
    return %arg0, %c0_i32 : i32, i32
  }
  func.func @transform_1(%arg0: i32) -> (i32, i32) {
    %c0_i32 = arith.constant 0 : i32
    %c0_i32_0 = arith.constant 0 : i32
    %c0_i32_1 = arith.constant 0 : i32
    return %c0_i32, %c0_i32_0 : i32, i32
  }
  func.func @transform_2(%arg0: i32) -> (i32, i32) {
    %c0_i32 = arith.constant 0 : i32
    %c0_i32_0 = arith.constant 0 : i32
    %c0_i32_1 = arith.constant 0 : i32
    return %c0_i32, %c0_i32_0 : i32, i32
  }
  func.func @transform_3(%arg0: i32) -> (i32, i32) {
    %c0_i32 = arith.constant 0 : i32
    %c0_i32_0 = arith.constant 0 : i32
    return %arg0, %c0_i32 : i32, i32
  }
}

module attributes {stable_mosaic.version = 11 : i64} {
  func.func @_mm_bias_res_relu_kernel(%arg0: i32, %arg1: memref<32x288xbf16, #tpu.memory_space<vmem>>, %arg2: memref<288x128xbf16, #tpu.memory_space<vmem>>, %arg3: memref<1x128xf32, #tpu.memory_space<vmem>>, %arg4: memref<32x128xf32, #tpu.memory_space<vmem>>, %arg5: memref<32x128xf32, #tpu.memory_space<vmem>>) attributes {dimension_semantics = [#tpu.dimension_semantics<parallel>], iteration_bounds = array<i64: 1>, scalar_prefetch = 0 : i64, scratch_operands = 0 : i64, tpu.core_type = #tpu.core_type<tc>, window_params = [{transform_indices = @transform_0, window_bounds = array<i64: 32, 288>}, {pipeline_mode = #tpu.pipeline_mode<synchronous>, transform_indices = @transform_1, window_bounds = array<i64: 288, 128>}, {pipeline_mode = #tpu.pipeline_mode<synchronous>, transform_indices = @transform_2, window_bounds = array<i64: 1, 128>}, {transform_indices = @transform_3, window_bounds = array<i64: 32, 128>}, {transform_indices = @transform_4, window_bounds = array<i64: 32, 128>}]} {
    %c0 = arith.constant 0 : index
    %c0_0 = arith.constant 0 : index
    %0 = vector.load %arg1[%c0, %c0_0] : memref<32x288xbf16, #tpu.memory_space<vmem>>, vector<32x288xbf16>
    %c0_1 = arith.constant 0 : index
    %c0_2 = arith.constant 0 : index
    %1 = vector.load %arg2[%c0_1, %c0_2] : memref<288x128xbf16, #tpu.memory_space<vmem>>, vector<288x128xbf16>
    %cst = arith.constant dense<0.000000e+00> : vector<32x128xf32>
    %2 = tpu.matmul %0, %1, %cst {dimension_numbers = #tpu.dot_dimension_numbers<[1], [0], [0], [1], [0, 0, 1, 1], [], []>} : vector<32x288xbf16>, vector<288x128xbf16>, vector<32x128xf32> -> vector<32x128xf32>
    %c0_3 = arith.constant 0 : index
    %c0_4 = arith.constant 0 : index
    %3 = vector.load %arg3[%c0_3, %c0_4] : memref<1x128xf32, #tpu.memory_space<vmem>>, vector<1x128xf32>
    %4 = vector.broadcast %3 : vector<1x128xf32> to vector<32x128xf32>
    %5 = arith.addf %2, %4 : vector<32x128xf32>
    %c0_5 = arith.constant 0 : index
    %c0_6 = arith.constant 0 : index
    %6 = vector.load %arg4[%c0_5, %c0_6] : memref<32x128xf32, #tpu.memory_space<vmem>>, vector<32x128xf32>
    %7 = arith.addf %5, %6 : vector<32x128xf32>
    %cst_7 = arith.constant 0.000000e+00 : f32
    %8 = vector.broadcast %cst_7 : f32 to vector<32x128xf32>
    %9 = arith.maximumf %7, %8 : vector<32x128xf32>
    %c0_8 = arith.constant 0 : index
    %c0_9 = arith.constant 0 : index
    %10 = vector.load %arg5[%c0_8, %c0_9] : memref<32x128xf32, #tpu.memory_space<vmem>>, vector<32x128xf32>
    tpu.vector_store %arg5[%c0_8, %c0_9], %9 {strides = array<i32>} : memref<32x128xf32, #tpu.memory_space<vmem>>, vector<32x128xf32>,
    return
  }
  func.func @transform_0(%arg0: i32) -> (i32, i32) {
    %c0_i32 = arith.constant 0 : i32
    %c0_i32_0 = arith.constant 0 : i32
    return %arg0, %c0_i32 : i32, i32
  }
  func.func @transform_1(%arg0: i32) -> (i32, i32) {
    %c0_i32 = arith.constant 0 : i32
    %c0_i32_0 = arith.constant 0 : i32
    %c0_i32_1 = arith.constant 0 : i32
    return %c0_i32, %c0_i32_0 : i32, i32
  }
  func.func @transform_2(%arg0: i32) -> (i32, i32) {
    %c0_i32 = arith.constant 0 : i32
    %c0_i32_0 = arith.constant 0 : i32
    %c0_i32_1 = arith.constant 0 : i32
    return %c0_i32, %c0_i32_0 : i32, i32
  }
  func.func @transform_3(%arg0: i32) -> (i32, i32) {
    %c0_i32 = arith.constant 0 : i32
    %c0_i32_0 = arith.constant 0 : i32
    return %arg0, %c0_i32 : i32, i32
  }
  func.func @transform_4(%arg0: i32) -> (i32, i32) {
    %c0_i32 = arith.constant 0 : i32
    %c0_i32_0 = arith.constant 0 : i32
    return %arg0, %c0_i32 : i32, i32
  }
}

module attributes {stable_mosaic.version = 11 : i64} {
  func.func @_mm_bias_kernel(%arg0: i32, %arg1: memref<2x512xbf16, #tpu.memory_space<vmem>>, %arg2: memref<512x128xbf16, #tpu.memory_space<vmem>>, %arg3: memref<1x128xf32, #tpu.memory_space<vmem>>, %arg4: memref<2x128xf32, #tpu.memory_space<vmem>>) attributes {dimension_semantics = [#tpu.dimension_semantics<parallel>], iteration_bounds = array<i64: 1>, scalar_prefetch = 0 : i64, scratch_operands = 0 : i64, tpu.core_type = #tpu.core_type<tc>, window_params = [{transform_indices = @transform_0, window_bounds = array<i64: 2, 512>}, {pipeline_mode = #tpu.pipeline_mode<synchronous>, transform_indices = @transform_1, window_bounds = array<i64: 512, 128>}, {pipeline_mode = #tpu.pipeline_mode<synchronous>, transform_indices = @transform_2, window_bounds = array<i64: 1, 128>}, {transform_indices = @transform_3, window_bounds = array<i64: 2, 128>}]} {
    %c0 = arith.constant 0 : index
    %c0_0 = arith.constant 0 : index
    %0 = vector.load %arg1[%c0, %c0_0] : memref<2x512xbf16, #tpu.memory_space<vmem>>, vector<2x512xbf16>
    %c0_1 = arith.constant 0 : index
    %c0_2 = arith.constant 0 : index
    %1 = vector.load %arg2[%c0_1, %c0_2] : memref<512x128xbf16, #tpu.memory_space<vmem>>, vector<512x128xbf16>
    %cst = arith.constant dense<0.000000e+00> : vector<2x128xf32>
    %2 = tpu.matmul %0, %1, %cst {dimension_numbers = #tpu.dot_dimension_numbers<[1], [0], [0], [1], [0, 0, 1, 1], [], []>} : vector<2x512xbf16>, vector<512x128xbf16>, vector<2x128xf32> -> vector<2x128xf32>
    %c0_3 = arith.constant 0 : index
    %c0_4 = arith.constant 0 : index
    %3 = vector.load %arg3[%c0_3, %c0_4] : memref<1x128xf32, #tpu.memory_space<vmem>>, vector<1x128xf32>
    %4 = vector.broadcast %3 : vector<1x128xf32> to vector<2x128xf32>
    %5 = arith.addf %2, %4 : vector<2x128xf32>
    %c0_5 = arith.constant 0 : index
    %c0_6 = arith.constant 0 : index
    %6 = vector.load %arg4[%c0_5, %c0_6] : memref<2x128xf32, #tpu.memory_space<vmem>>, vector<2x128xf32>
    tpu.vector_store %arg4[%c0_5, %c0_6], %5 {strides = array<i32>} : memref<2x128xf32, #tpu.memory_space<vmem>>, vector<2x128xf32>,
    return
  }
  func.func @transform_0(%arg0: i32) -> (i32, i32) {
    %c0_i32 = arith.constant 0 : i32
    %c0_i32_0 = arith.constant 0 : i32
    return %arg0, %c0_i32 : i32, i32
  }
  func.func @transform_1(%arg0: i32) -> (i32, i32) {
    %c0_i32 = arith.constant 0 : i32
    %c0_i32_0 = arith.constant 0 : i32
    %c0_i32_1 = arith.constant 0 : i32
    return %c0_i32, %c0_i32_0 : i32, i32
  }
  func.func @transform_2(%arg0: i32) -> (i32, i32) {
    %c0_i32 = arith.constant 0 : i32
    %c0_i32_0 = arith.constant 0 : i32
    %c0_i32_1 = arith.constant 0 : i32
    return %c0_i32, %c0_i32_0 : i32, i32
  }
  func.func @transform_3(%arg0: i32) -> (i32, i32) {
    %c0_i32 = arith.constant 0 : i32
    %c0_i32_0 = arith.constant 0 : i32
    return %arg0, %c0_i32 : i32, i32
  }
}

</mosaic_0001>

<llo_original>
// kernel: net_forward.10
$region0: #{net_forward.10}
  #allocation0 [shape = 'u32[]', space=smem, size = 0x4, offset = 0x4, fixed_abs, tag = 'smem constant byte address 0x4 - core index']
  #allocation1 [shape = 'u32[144,128]{1,0:T(1,128)}', space=vmem, size = 0x12000, scoped, tag = 'internal scratch']
  %s0 = inlined_call_operand.vmem [shape: f32[288,512], index: 0, kind: input, shape index: {}]
  %s1 = inlined_call_operand.vmem [shape: f32[288,128], index: 1, kind: output, shape index: {}]
  %s2 = sld [smem:[#allocation0]]
  $region14: #{net_forward.10} parent=0
    _
  %s4 = ssub.s32 1, %s2
  %s5 = scalar_select 0, %s4, %s2
  // Predicated region
  $region2: #{net_forward.10} parent=0 // pred_check
    _
  $region3: #{net_forward.10} parent=0 // pred_check_branch
    %7 = sbr.rel (0) target = $region5
  $region4: #{net_forward.10} parent=0 // pred_region
    _
  $region5: #{net_forward.10} parent=0 // pred_fallthru
    _
  %v8 = vld [vmem:[%s0] sm:$0xff]
  %v9 = vld [vmem:[%s0 + $0x8] sm:$0xff]
  %v10 = vld [vmem:[%s0 + $0x10] sm:$0xff]
  %v11 = vld [vmem:[%s0 + $0x18] sm:$0xff]
  %v12 = vld [vmem:[%s0 + $0x20] sm:$0xff]
  %v13 = vld [vmem:[%s0 + $0x28] sm:$0xff]
  %v14 = vld [vmem:[%s0 + $0x30] sm:$0xff]
  %v15 = vld [vmem:[%s0 + $0x38] sm:$0xff]
  %v16 = vld [vmem:[%s0 + $0x40] sm:$0xff]
  %v17 = vld [vmem:[%s0 + $0x48] sm:$0xff]
  %v18 = vld [vmem:[%s0 + $0x50] sm:$0xff]
  %v19 = vld [vmem:[%s0 + $0x58] sm:$0xff]
  %v20 = vld [vmem:[%s0 + $0x60] sm:$0xff]
  %v21 = vld [vmem:[%s0 + $0x68] sm:$0xff]
  %v22 = vld [vmem:[%s0 + $0x70] sm:$0xff]
  %v23 = vld [vmem:[%s0 + $0x78] sm:$0xff]
  %v24 = vld [vmem:[%s0 + $0x80] sm:$0xff]
  %v25 = vld [vmem:[%s0 + $0x88] sm:$0xff]
  %v26 = vld [vmem:[%s0 + $0x90] sm:$0xff]
  %v27 = vld [vmem:[%s0 + $0x98] sm:$0xff]
  %v28 = vld [vmem:[%s0 + $0xa0] sm:$0xff]
  %v29 = vld [vmem:[%s0 + $0xa8] sm:$0xff]
  %v30 = vld [vmem:[%s0 + $0xb0] sm:$0xff]
  %v31 = vld [vmem:[%s0 + $0xb8] sm:$0xff]
  %v32 = vld [vmem:[%s0 + $0xc0] sm:$0xff]
  %v33 = vld [vmem:[%s0 + $0xc8] sm:$0xff]
  %v34 = vld [vmem:[%s0 + $0xd0] sm:$0xff]
  %v35 = vld [vmem:[%s0 + $0xd8] sm:$0xff]
  %v36 = vld [vmem:[%s0 + $0xe0] sm:$0xff]
  %v37 = vld [vmem:[%s0 + $0xe8] sm:$0xff]
  %v38 = vld [vmem:[%s0 + $0xf0] sm:$0xff]
  %v39 = vld [vmem:[%s0 + $0xf8] sm:$0xff]
  %v40 = vld [vmem:[%s0 + $0x100] sm:$0xff]
  %v41 = vld [vmem:[%s0 + $0x108] sm:$0xff]
  %v42 = vld [vmem:[%s0 + $0x110] sm:$0xff]
  %v43 = vld [vmem:[%s0 + $0x118] sm:$0xff]
  %v44 = vld [vmem:[%s0 + $0x120] sm:$0xff]
  %v45 = vld [vmem:[%s0 + $0x128] sm:$0xff]
  %v46 = vld [vmem:[%s0 + $0x130] sm:$0xff]
  %v47 = vld [vmem:[%s0 + $0x138] sm:$0xff]
  %v48 = vld [vmem:[%s0 + $0x140] sm:$0xff]
  %v49 = vld [vmem:[%s0 + $0x148] sm:$0xff]
  %v50 = vld [vmem:[%s0 + $0x150] sm:$0xff]
  %v51 = vld [vmem:[%s0 + $0x158] sm:$0xff]
  %v52 = vld [vmem:[%s0 + $0x160] sm:$0xff]
  %v53 = vld [vmem:[%s0 + $0x168] sm:$0xff]
  %v54 = vld [vmem:[%s0 + $0x170] sm:$0xff]
  %v55 = vld [vmem:[%s0 + $0x178] sm:$0xff]
  %v56 = vld [vmem:[%s0 + $0x180] sm:$0xff]
  %v57 = vld [vmem:[%s0 + $0x188] sm:$0xff]
  %v58 = vld [vmem:[%s0 + $0x190] sm:$0xff]
  %v59 = vld [vmem:[%s0 + $0x198] sm:$0xff]
  %v60 = vld [vmem:[%s0 + $0x1a0] sm:$0xff]
  %v61 = vld [vmem:[%s0 + $0x1a8] sm:$0xff]
  %v62 = vld [vmem:[%s0 + $0x1b0] sm:$0xff]
  %v63 = vld [vmem:[%s0 + $0x1b8] sm:$0xff]
  %v64 = vld [vmem:[%s0 + $0x1c0] sm:$0xff]
  %v65 = vld [vmem:[%s0 + $0x1c8] sm:$0xff]
  %v66 = vld [vmem:[%s0 + $0x1d0] sm:$0xff]
  %v67 = vld [vmem:[%s0 + $0x1d8] sm:$0xff]
  %v68 = vld [vmem:[%s0 + $0x1e0] sm:$0xff]
  %v69 = vld [vmem:[%s0 + $0x1e8] sm:$0xff]
  %v70 = vld [vmem:[%s0 + $0x1f0] sm:$0xff]
  %v71 = vld [vmem:[%s0 + $0x1f8] sm:$0xff]
  %v72 = vld [vmem:[%s0 + $0x200] sm:$0xff]
  %v73 = vld [vmem:[%s0 + $0x208] sm:$0xff]
  %v74 = vld [vmem:[%s0 + $0x210] sm:$0xff]
  %v75 = vld [vmem:[%s0 + $0x218] sm:$0xff]
  %v76 = vld [vmem:[%s0 + $0x220] sm:$0xff]
  %v77 = vld [vmem:[%s0 + $0x228] sm:$0xff]
  %v78 = vld [vmem:[%s0 + $0x230] sm:$0xff]
  %v79 = vld [vmem:[%s0 + $0x238] sm:$0xff]
  %v80 = vld [vmem:[%s0 + $0x240] sm:$0xff]
  %v81 = vld [vmem:[%s0 + $0x248] sm:$0xff]
  %v82 = vld [vmem:[%s0 + $0x250] sm:$0xff]
  %v83 = vld [vmem:[%s0 + $0x258] sm:$0xff]
  %v84 = vld [vmem:[%s0 + $0x260] sm:$0xff]
  %v85 = vld [vmem:[%s0 + $0x268] sm:$0xff]
  %v86 = vld [vmem:[%s0 + $0x270] sm:$0xff]
  %v87 = vld [vmem:[%s0 + $0x278] sm:$0xff]
  %v88 = vld [vmem:[%s0 + $0x280] sm:$0xff]
  %v89 = vld [vmem:[%s0 + $0x288] sm:$0xff]
  %v90 = vld [vmem:[%s0 + $0x290] sm:$0xff]
  %v91 = vld [vmem:[%s0 + $0x298] sm:$0xff]
  %v92 = vld [vmem:[%s0 + $0x2a0] sm:$0xff]
  %v93 = vld [vmem:[%s0 + $0x2a8] sm:$0xff]
  %v94 = vld [vmem:[%s0 + $0x2b0] sm:$0xff]
  %v95 = vld [vmem:[%s0 + $0x2b8] sm:$0xff]
  %v96 = vld [vmem:[%s0 + $0x2c0] sm:$0xff]
  %v97 = vld [vmem:[%s0 + $0x2c8] sm:$0xff]
  %v98 = vld [vmem:[%s0 + $0x2d0] sm:$0xff]
  %v99 = vld [vmem:[%s0 + $0x2d8] sm:$0xff]
  %v100 = vld [vmem:[%s0 + $0x2e0] sm:$0xff]
  %v101 = vld [vmem:[%s0 + $0x2e8] sm:$0xff]
  %v102 = vld [vmem:[%s0 + $0x2f0] sm:$0xff]
  %v103 = vld [vmem:[%s0 + $0x2f8] sm:$0xff]
  %v104 = vld [vmem:[%s0 + $0x300] sm:$0xff]
  %v105 = vld [vmem:[%s0 + $0x308] sm:$0xff]
  %v106 = vld [vmem:[%s0 + $0x310] sm:$0xff]
  %v107 = vld [vmem:[%s0 + $0x318] sm:$0xff]
  %v108 = vld [vmem:[%s0 + $0x320] sm:$0xff]
  %v109 = vld [vmem:[%s0 + $0x328] sm:$0xff]
  %v110 = vld [vmem:[%s0 + $0x330] sm:$0xff]
  %v111 = vld [vmem:[%s0 + $0x338] sm:$0xff]
  %v112 = vld [vmem:[%s0 + $0x340] sm:$0xff]
  %v113 = vld [vmem:[%s0 + $0x348] sm:$0xff]
  %v114 = vld [vmem:[%s0 + $0x350] sm:$0xff]
  %v115 = vld [vmem:[%s0 + $0x358] sm:$0xff]
  %v116 = vld [vmem:[%s0 + $0x360] sm:$0xff]
  %v117 = vld [vmem:[%s0 + $0x368] sm:$0xff]
  %v118 = vld [vmem:[%s0 + $0x370] sm:$0xff]
  %v119 = vld [vmem:[%s0 + $0x378] sm:$0xff]
  %v120 = vld [vmem:[%s0 + $0x380] sm:$0xff]
  %v121 = vld [vmem:[%s0 + $0x388] sm:$0xff]
  %v122 = vld [vmem:[%s0 + $0x390] sm:$0xff]
  %v123 = vld [vmem:[%s0 + $0x398] sm:$0xff]
  %v124 = vld [vmem:[%s0 + $0x3a0] sm:$0xff]
  %v125 = vld [vmem:[%s0 + $0x3a8] sm:$0xff]
  %v126 = vld [vmem:[%s0 + $0x3b0] sm:$0xff]
  %v127 = vld [vmem:[%s0 + $0x3b8] sm:$0xff]
  %v128 = vld [vmem:[%s0 + $0x3c0] sm:$0xff]
  %v129 = vld [vmem:[%s0 + $0x3c8] sm:$0xff]
  %v130 = vld [vmem:[%s0 + $0x3d0] sm:$0xff]
  %v131 = vld [vmem:[%s0 + $0x3d8] sm:$0xff]
  %v132 = vld [vmem:[%s0 + $0x3e0] sm:$0xff]
  %v133 = vld [vmem:[%s0 + $0x3e8] sm:$0xff]
  %v134 = vld [vmem:[%s0 + $0x3f0] sm:$0xff]
  %v135 = vld [vmem:[%s0 + $0x3f8] sm:$0xff]
  %v136 = vld [vmem:[%s0 + $0x400] sm:$0xff]
  %v137 = vld [vmem:[%s0 + $0x408] sm:$0xff]
  %v138 = vld [vmem:[%s0 + $0x410] sm:$0xff]
  %v139 = vld [vmem:[%s0 + $0x418] sm:$0xff]
  %v140 = vld [vmem:[%s0 + $0x420] sm:$0xff]
  %v141 = vld [vmem:[%s0 + $0x428] sm:$0xff]
  %v142 = vld [vmem:[%s0 + $0x430] sm:$0xff]
  %v143 = vld [vmem:[%s0 + $0x438] sm:$0xff]
  %v144 = vld [vmem:[%s0 + $0x440] sm:$0xff]
  %v145 = vld [vmem:[%s0 + $0x448] sm:$0xff]
  %v146 = vld [vmem:[%s0 + $0x450] sm:$0xff]
  %v147 = vld [vmem:[%s0 + $0x458] sm:$0xff]
  %v148 = vld [vmem:[%s0 + $0x460] sm:$0xff]
  %v149 = vld [vmem:[%s0 + $0x468] sm:$0xff]
  %v150 = vld [vmem:[%s0 + $0x470] sm:$0xff]
  %v151 = vld [vmem:[%s0 + $0x478] sm:$0xff]
  %v152 = vmax.f32 %v8, %v9
  %v153 = vmax.f32 %v12, %v13
  %v154 = vmax.f32 %v16, %v17
  %v155 = vmax.f32 %v20, %v21
  %v156 = vmax.f32 %v24, %v25
  %v157 = vmax.f32 %v28, %v29
  %v158 = vmax.f32 %v32, %v33
  %v159 = vmax.f32 %v36, %v37
  %v160 = vmax.f32 %v40, %v41
  %v161 = vmax.f32 %v44, %v45
  %v162 = vmax.f32 %v48, %v49
  %v163 = vmax.f32 %v52, %v53
  %v164 = vmax.f32 %v56, %v57
  %v165 = vmax.f32 %v60, %v61
  %v166 = vmax.f32 %v64, %v65
  %v167 = vmax.f32 %v68, %v69
  %v168 = vmax.f32 %v72, %v73
  %v169 = vmax.f32 %v76, %v77
  %v170 = vmax.f32 %v80, %v81
  %v171 = vmax.f32 %v84, %v85
  %v172 = vmax.f32 %v88, %v89
  %v173 = vmax.f32 %v92, %v93
  %v174 = vmax.f32 %v96, %v97
  %v175 = vmax.f32 %v100, %v101
  %v176 = vmax.f32 %v104, %v105
  %v177 = vmax.f32 %v108, %v109
  %v178 = vmax.f32 %v112, %v113
  %v179 = vmax.f32 %v116, %v117
  %v180 = vmax.f32 %v120, %v121
  %v181 = vmax.f32 %v124, %v125
  %v182 = vmax.f32 %v128, %v129
  %v183 = vmax.f32 %v132, %v133
  %v184 = vmax.f32 %v136, %v137
  %v185 = vmax.f32 %v140, %v141
  %v186 = vmax.f32 %v144, %v145
  %v187 = vmax.f32 %v148, %v149
  %v188 = vmax.f32 %v10, %v11
  %v189 = vmax.f32 %v14, %v15
  %v190 = vmax.f32 %v18, %v19
  %v191 = vmax.f32 %v22, %v23
  %v192 = vmax.f32 %v26, %v27
  %v193 = vmax.f32 %v30, %v31
  %v194 = vmax.f32 %v34, %v35
  %v195 = vmax.f32 %v38, %v39
  %v196 = vmax.f32 %v42, %v43
  %v197 = vmax.f32 %v46, %v47
  %v198 = vmax.f32 %v50, %v51
  %v199 = vmax.f32 %v54, %v55
  %v200 = vmax.f32 %v58, %v59
  %v201 = vmax.f32 %v62, %v63
  %v202 = vmax.f32 %v66, %v67
  %v203 = vmax.f32 %v70, %v71
  %v204 = vmax.f32 %v74, %v75
  %v205 = vmax.f32 %v78, %v79
  %v206 = vmax.f32 %v82, %v83
  %v207 = vmax.f32 %v86, %v87
  %v208 = vmax.f32 %v90, %v91
  %v209 = vmax.f32 %v94, %v95
  %v210 = vmax.f32 %v98, %v99
  %v211 = vmax.f32 %v102, %v103
  %v212 = vmax.f32 %v106, %v107
  %v213 = vmax.f32 %v110, %v111
  %v214 = vmax.f32 %v114, %v115
  %v215 = vmax.f32 %v118, %v119
  %v216 = vmax.f32 %v122, %v123
  %v217 = vmax.f32 %v126, %v127
  %v218 = vmax.f32 %v130, %v131
  %v219 = vmax.f32 %v134, %v135
  %v220 = vmax.f32 %v138, %v139
  %v221 = vmax.f32 %v142, %v143
  %v222 = vmax.f32 %v146, %v147
  %v223 = vmax.f32 %v150, %v151
  %v224 = vmax.f32 %v152, %v188
  %v225 = vmax.f32 %v153, %v189
  %v226 = vmax.f32 %v154, %v190
  %v227 = vmax.f32 %v155, %v191
  %v228 = vmax.f32 %v156, %v192
  %v229 = vmax.f32 %v157, %v193
  %v230 = vmax.f32 %v158, %v194
  %v231 = vmax.f32 %v159, %v195
  %v232 = vmax.f32 %v160, %v196
  %v233 = vmax.f32 %v161, %v197
  %v234 = vmax.f32 %v162, %v198
  %v235 = vmax.f32 %v163, %v199
  %v236 = vmax.f32 %v164, %v200
  %v237 = vmax.f32 %v165, %v201
  %v238 = vmax.f32 %v166, %v202
  %v239 = vmax.f32 %v167, %v203
  %v240 = vmax.f32 %v168, %v204
  %v241 = vmax.f32 %v169, %v205
  %v242 = vmax.f32 %v170, %v206
  %v243 = vmax.f32 %v171, %v207
  %v244 = vmax.f32 %v172, %v208
  %v245 = vmax.f32 %v173, %v209
  %v246 = vmax.f32 %v174, %v210
  %v247 = vmax.f32 %v175, %v211
  %v248 = vmax.f32 %v176, %v212
  %v249 = vmax.f32 %v177, %v213
  %v250 = vmax.f32 %v178, %v214
  %v251 = vmax.f32 %v179, %v215
  %v252 = vmax.f32 %v180, %v216
  %v253 = vmax.f32 %v181, %v217
  %v254 = vmax.f32 %v182, %v218
  %v255 = vmax.f32 %v183, %v219
  %v256 = vmax.f32 %v184, %v220
  %v257 = vmax.f32 %v185, %v221
  %v258 = vmax.f32 %v186, %v222
  %v259 = vmax.f32 %v187, %v223
  %260 = vst [vmem:[%s1] sm:$0xff] %v224
  %261 = vst [vmem:[%s1 + $0x8] sm:$0xff] %v225
  %262 = vst [vmem:[%s1 + $0x10] sm:$0xff] %v226
  %263 = vst [vmem:[%s1 + $0x18] sm:$0xff] %v227
  %264 = vst [vmem:[%s1 + $0x20] sm:$0xff] %v228
  %265 = vst [vmem:[%s1 + $0x28] sm:$0xff] %v229
  %266 = vst [vmem:[%s1 + $0x30] sm:$0xff] %v230
  %267 = vst [vmem:[%s1 + $0x38] sm:$0xff] %v231
  %268 = vst [vmem:[%s1 + $0x40] sm:$0xff] %v232
  %269 = vst [vmem:[%s1 + $0x48] sm:$0xff] %v233
  %270 = vst [vmem:[%s1 + $0x50] sm:$0xff] %v234
  %271 = vst [vmem:[%s1 + $0x58] sm:$0xff] %v235
  %272 = vst [vmem:[%s1 + $0x60] sm:$0xff] %v236
  %273 = vst [vmem:[%s1 + $0x68] sm:$0xff] %v237
  %274 = vst [vmem:[%s1 + $0x70] sm:$0xff] %v238
  %275 = vst [vmem:[%s1 + $0x78] sm:$0xff] %v239
  %276 = vst [vmem:[%s1 + $0x80] sm:$0xff] %v240
  %277 = vst [vmem:[%s1 + $0x88] sm:$0xff] %v241
  %278 = vst [vmem:[%s1 + $0x90] sm:$0xff] %v242
  %279 = vst [vmem:[%s1 + $0x98] sm:$0xff] %v243
  %280 = vst [vmem:[%s1 + $0xa0] sm:$0xff] %v244
  %281 = vst [vmem:[%s1 + $0xa8] sm:$0xff] %v245
  %282 = vst [vmem:[%s1 + $0xb0] sm:$0xff] %v246
  %283 = vst [vmem:[%s1 + $0xb8] sm:$0xff] %v247
  %284 = vst [vmem:[%s1 + $0xc0] sm:$0xff] %v248
  %285 = vst [vmem:[%s1 + $0xc8] sm:$0xff] %v249
  %286 = vst [vmem:[%s1 + $0xd0] sm:$0xff] %v250
  %287 = vst [vmem:[%s1 + $0xd8] sm:$0xff] %v251
  %288 = vst [vmem:[%s1 + $0xe0] sm:$0xff] %v252
  %289 = vst [vmem:[%s1 + $0xe8] sm:$0xff] %v253
  %290 = vst [vmem:[%s1 + $0xf0] sm:$0xff] %v254
  %291 = vst [vmem:[%s1 + $0xf8] sm:$0xff] %v255
  %292 = vst [vmem:[%s1 + $0x100] sm:$0xff] %v256
  %293 = vst [vmem:[%s1 + $0x108] sm:$0xff] %v257
  %294 = vst [vmem:[%s1 + $0x110] sm:$0xff] %v258
  %295 = vst [vmem:[%s1 + $0x118] sm:$0xff] %v259
  // Predicated region
  $region6: #{net_forward.10} parent=0 // pred_check
    _
  $region7: #{net_forward.10} parent=0 // pred_check_branch
    %297 = sbr.rel (0) target = $region9
  $region8: #{net_forward.10} parent=0 // pred_region
    _
  $region9: #{net_forward.10} parent=0 // pred_fallthru
    _
  // Predicated region
  $region10: #{net_forward.10} parent=0 // pred_check
    _
  $region11: #{net_forward.10} parent=0 // pred_check_branch
    %299 = sbr.rel (0) target = $region13
  $region12: #{net_forward.10} parent=0 // pred_region
    _
  $region13: #{net_forward.10} parent=0 // pred_fallthru
    _

// kernel: net_forward.9
$region0: #{net_forward.9}
  #allocation0 [shape = 'u32[]', space=smem, size = 0x4, offset = 0x4, fixed_abs, tag = 'smem constant byte address 0x4 - core index']
  #allocation1 [shape = 'u32[144,128]{1,0:T(1,128)}', space=vmem, size = 0x12000, scoped, tag = 'internal scratch']
  %s0 = inlined_call_operand.vmem [shape: bf16[1152,25], index: 0, kind: input, shape index: {}]
  %s1 = inlined_call_operand.vmem [shape: bf16[25,128], index: 1, kind: input, shape index: {}]
  %s2 = inlined_call_operand.vmem [shape: f32[1,128], index: 2, kind: input, shape index: {}]
  %s3 = inlined_call_operand.vmem [shape: f32[1152,128], index: 3, kind: output, shape index: {}]
  %s4 = sld [smem:[#allocation0]]
  $region45: #{net_forward.9} parent=0
    _
  %s6 = ssub.s32 1, %s4
  %s7 = scalar_select 0, %s6, %s4
  loop: start=0, step=1, limit=5
  $region2: #{net_forward.9} parent=0 // loop_pre_header
    _
  $region3: #{net_forward.9} parent=0 // loop_header
    %s9 = sphi 0, %s13
    %p10 = scmp.ge.s32.totalorder %s9, 5
    %s19 = sphi 0, %s21
    %s22 = sphi 0, %s19
    %s23 = sphi 0, %s22
    %s39 = sphi 0, %s23
    %s43 = sphi 0, %s43
    %s45 = sphi 0, %s43
    %s46 = sphi 0, %s45
    %s60 = sphi 0, %s46
    %s64 = sphi 0, %s64
    %s66 = sphi 0, %s64
    %s67 = sphi 0, %s66
    %s81 = sphi 0, %s67
    %s87 = sphi 0, %s89
    %s90 = sphi 0, %s87
    %s91 = sphi 0, %s90
    %s107 = sphi 0, %s91
  $region4: #{net_forward.9} parent=0 // loop_header_branch
    %12 = sbr.rel (%p10) target = $region8
  $region5: #{net_forward.9} parent=0 // loop_body
    %s14 = ssub.s32 %s9, 1
    %s15 = ssub.s32 %s9, 2
    %s16 = sadd.s32 %s9, 1
    %s17 = ssub.s32 %s9, %s16
    %p18 = scmp.eq.s32.totalorder %s17, 0
    %s20 = sadd.s32 %s19, 1
    %s21 = scalar_select %p18, %s19, %s20
    %p24 = pneg %p18
    %p25 = scmp.eq.s32.totalorder %s9, 2
    %p26 = por %p24, %p25
    %p27 = scmp.ne.s32.totalorder %s19, %s22
    %p28 = scmp.eq.s32.totalorder %s9, 0
    %p29 = por %p27, %p28
    %p30 = scmp.ne.s32.totalorder %s19, %s22
    %p31 = scmp.eq.s32.totalorder %s14, 2
    %p32 = por %p30, %p31
    %p33 = scmp.ne.s32.totalorder %s22, %s23
    %p34 = scmp.eq.s32.totalorder %s14, 0
    %p35 = por %p33, %p34
    %p36 = scmp.ne.s32.totalorder %s22, %s23
    %p37 = scmp.eq.s32.totalorder %s15, 2
    %p38 = por %p36, %p37
    %p40 = scmp.ne.s32.totalorder %s23, %s39
    %p41 = scmp.eq.s32.totalorder %s15, 0
    %p42 = por %p40, %p41
    %s44 = sadd.s32 %s43, 1
    %p47 = scmp.eq.s32.totalorder %s9, 2
    %p48 = scmp.ne.s32.totalorder %s43, %s45
    %p49 = scmp.eq.s32.totalorder %s9, 0
    %p50 = por %p48, %p49
    %p51 = scmp.ne.s32.totalorder %s43, %s45
    %p52 = scmp.eq.s32.totalorder %s14, 2
    %p53 = por %p51, %p52
    %p54 = scmp.ne.s32.totalorder %s45, %s46
    %p55 = scmp.eq.s32.totalorder %s14, 0
    %p56 = por %p54, %p55
    %p57 = scmp.ne.s32.totalorder %s45, %s46
    %p58 = scmp.eq.s32.totalorder %s15, 2
    %p59 = por %p57, %p58
    %p61 = scmp.ne.s32.totalorder %s46, %s60
    %p62 = scmp.eq.s32.totalorder %s15, 0
    %p63 = por %p61, %p62
    %s65 = sadd.s32 %s64, 1
    %p68 = scmp.eq.s32.totalorder %s9, 2
    %p69 = scmp.ne.s32.totalorder %s64, %s66
    %p70 = scmp.eq.s32.totalorder %s9, 0
    %p71 = por %p69, %p70
    %p72 = scmp.ne.s32.totalorder %s64, %s66
    %p73 = scmp.eq.s32.totalorder %s14, 2
    %p74 = por %p72, %p73
    %p75 = scmp.ne.s32.totalorder %s66, %s67
    %p76 = scmp.eq.s32.totalorder %s14, 0
    %p77 = por %p75, %p76
    %p78 = scmp.ne.s32.totalorder %s66, %s67
    %p79 = scmp.eq.s32.totalorder %s15, 2
    %p80 = por %p78, %p79
    %p82 = scmp.ne.s32.totalorder %s67, %s81
    %p83 = scmp.eq.s32.totalorder %s15, 0
    %p84 = por %p82, %p83
    %s85 = ssub.s32 %s9, %s16
    %p86 = scmp.eq.s32.totalorder %s85, 0
    %s88 = sadd.s32 %s87, 1
    %s89 = scalar_select %p86, %s87, %s88
    %p92 = pneg %p86
    %p93 = scmp.eq.s32.totalorder %s9, 2
    %p94 = por %p92, %p93
    %p95 = scmp.ne.s32.totalorder %s87, %s90
    %p96 = scmp.eq.s32.totalorder %s9, 0
    %p97 = por %p95, %p96
    %p98 = scmp.ne.s32.totalorder %s87, %s90
    %p99 = scmp.eq.s32.totalorder %s14, 2
    %p100 = por %p98, %p99
    %p101 = scmp.ne.s32.totalorder %s90, %s91
    %p102 = scmp.eq.s32.totalorder %s14, 0
    %p103 = por %p101, %p102
    %p104 = scmp.ne.s32.totalorder %s90, %s91
    %p105 = scmp.eq.s32.totalorder %s15, 2
    %p106 = por %p104, %p105
    %p108 = scmp.ne.s32.totalorder %s91, %s107
    %p109 = scmp.eq.s32.totalorder %s15, 0
    %p110 = por %p108, %p109
    %p111 = scmp.le.s32.totalorder 1, %s9
    %p112 = scmp.lt.s32.totalorder %s9, 4
    %p113 = pnand %p111, %p112
    %p114 = pneg %p113
    // Predicated region
    $region9: #{net_forward.9} parent=5 // pred_check
      _
    $region10: #{net_forward.9} parent=5 // pred_check_branch
      %116 = sbr.rel (%p113) target = $region12
    $region11: #{net_forward.9} parent=5 // pred_region
      %s117 = ssub.s32 %s9, 1
      // Predicated region
      $region13: #{net_forward.9} parent=11 // pred_check
        %p118 = pneg %p56
      $region14: #{net_forward.9} parent=11 // pred_check_branch
        %120 = sbr.rel (%p118) target = $region16
      $region15: #{net_forward.9} parent=11 // pred_region
        _
      $region16: #{net_forward.9} parent=11 // pred_fallthru
        _
      // Predicated region
      $region17: #{net_forward.9} parent=11 // pred_check
        %p121 = pneg %p77
      $region18: #{net_forward.9} parent=11 // pred_check_branch
        %123 = sbr.rel (%p121) target = $region20
      $region19: #{net_forward.9} parent=11 // pred_region
        _
      $region20: #{net_forward.9} parent=11 // pred_fallthru
        _
    $region12: #{net_forward.9} parent=5 // pred_fallthru
      _
    %p124 = scmp.lt.s32.totalorder %s9, 3
    // Predicated region
    $region21: #{net_forward.9} parent=5 // pred_check
      %p125 = pneg %p124
    $region22: #{net_forward.9} parent=5 // pred_check_branch
      %127 = sbr.rel (%p125) target = $region24
    $region23: #{net_forward.9} parent=5 // pred_region
      // Predicated region
      $region25: #{net_forward.9} parent=23 // pred_check
        %p128 = pneg %p29
      $region26: #{net_forward.9} parent=23 // pred_check_branch
        %130 = sbr.rel (%p128) target = $region28
      $region27: #{net_forward.9} parent=23 // pred_region
        %s131 = smul.u32 48, %s9
        %p132 = scmp.lt.s32.totalorder %s131, 143
        %s133 = scalar_select %p132, %s131, 143
        %s134 = smul.addr %s133, 4
        %s135 = scalar_lea.vmem %s0, %s134
        %s136 = smul.u32 48, %s9
      $region28: #{net_forward.9} parent=23 // pred_fallthru
        _
    $region24: #{net_forward.9} parent=5 // pred_fallthru
      _
    %p137 = scmp.le.s32.totalorder 1, %s9
    %p138 = scmp.lt.s32.totalorder %s9, 4
    %p139 = pnand %p137, %p138
    %p140 = pneg %p139
    // Predicated region
    $region29: #{net_forward.9} parent=5 // pred_check
      _
    $region30: #{net_forward.9} parent=5 // pred_check_branch
      %142 = sbr.rel (%p139) target = $region32
    $region31: #{net_forward.9} parent=5 // pred_region
      %s143 = ssub.s32 %s9, 1
      %s144 = smul.u32 48, %s14
      %p145 = scmp.lt.s32.totalorder %s144, 143
      %s146 = scalar_select %p145, %s144, 143
      %s147 = smul.addr %s146, 4
      %s148 = scalar_lea.vmem %s0, %s147
      %p149 = pneg %p35
      %p150 = pneg %p32
      %p151 = pneg %p56
      %p152 = pneg %p53
      %p153 = pneg %p77
      %p154 = pneg %p74
      %p155 = pneg %p103
      %p156 = pneg %p100
      %s157 = smul.u32 48, %s14
      %p158 = scmp.lt.s32.totalorder %s157, 143
      %s159 = scalar_select %p158, %s157, 143
      %s160 = smul.addr %s159, 8
      %s161 = scalar_lea.vmem %s3, %s160
      %s162 = smul.u32 48, %s14
      %p163 = scmp.lt.s32.totalorder %s162, 143
      %s164 = scalar_select %p163, %s162, 143
      %s165 = smul.addr %s164, 4
      %s166 = scalar_lea.vmem %s0, %s165
      %s167 = smul.u32 48, %s14
      %s168 = smul.u32 48, %s14
      %p169 = scmp.lt.s32.totalorder %s168, 143
      %s170 = scalar_select %p169, %s168, 143
      %s171 = smul.addr %s170, 8
      %s172 = scalar_lea.vmem %s3, %s171
      %s173 = smul.u32 48, %s14
      %v175 = vld [vmem:[%s166] sm:$0xf]
      %v176 = vld [vmem:[%s166 + $0x4] sm:$0xf]
      %v177 = vld [vmem:[%s166 + $0x8] sm:$0xf]
      %v178 = vld [vmem:[%s166 + $0xc] sm:$0xf]
      %v179 = vld [vmem:[%s166 + $0x10] sm:$0xf]
      %v180 = vld [vmem:[%s166 + $0x14] sm:$0xf]
      %v181 = vld [vmem:[%s166 + $0x18] sm:$0xf]
      %v182 = vld [vmem:[%s166 + $0x1c] sm:$0xf]
      %v183 = vld [vmem:[%s166 + $0x20] sm:$0xf]
      %v184 = vld [vmem:[%s166 + $0x24] sm:$0xf]
      %v185 = vld [vmem:[%s166 + $0x28] sm:$0xf]
      %v186 = vld [vmem:[%s166 + $0x2c] sm:$0xf]
      %v187 = vld [vmem:[%s166 + $0x30] sm:$0xf]
      %v188 = vld [vmem:[%s166 + $0x34] sm:$0xf]
      %v189 = vld [vmem:[%s166 + $0x38] sm:$0xf]
      %v190 = vld [vmem:[%s166 + $0x3c] sm:$0xf]
      %v191 = vld [vmem:[%s166 + $0x40] sm:$0xf]
      %v192 = vld [vmem:[%s166 + $0x44] sm:$0xf]
      %v193 = vld [vmem:[%s166 + $0x48] sm:$0xf]
      %v194 = vld [vmem:[%s166 + $0x4c] sm:$0xf]
      %v195 = vld [vmem:[%s166 + $0x50] sm:$0xf]
      %v196 = vld [vmem:[%s166 + $0x54] sm:$0xf]
      %v197 = vld [vmem:[%s166 + $0x58] sm:$0xf]
      %v198 = vld [vmem:[%s166 + $0x5c] sm:$0xf]
      %v199 = vld [vmem:[%s166 + $0x60] sm:$0xf]
      %v200 = vld [vmem:[%s166 + $0x64] sm:$0xf]
      %v201 = vld [vmem:[%s166 + $0x68] sm:$0xf]
      %v202 = vld [vmem:[%s166 + $0x6c] sm:$0xf]
      %v203 = vld [vmem:[%s166 + $0x70] sm:$0xf]
      %v204 = vld [vmem:[%s166 + $0x74] sm:$0xf]
      %v205 = vld [vmem:[%s166 + $0x78] sm:$0xf]
      %v206 = vld [vmem:[%s166 + $0x7c] sm:$0xf]
      %v207 = vld [vmem:[%s166 + $0x80] sm:$0xf]
      %v208 = vld [vmem:[%s166 + $0x84] sm:$0xf]
      %v209 = vld [vmem:[%s166 + $0x88] sm:$0xf]
      %v210 = vld [vmem:[%s166 + $0x8c] sm:$0xf]
      %v211 = vld [vmem:[%s166 + $0x90] sm:$0xf]
      %v212 = vld [vmem:[%s166 + $0x94] sm:$0xf]
      %v213 = vld [vmem:[%s166 + $0x98] sm:$0xf]
      %v214 = vld [vmem:[%s166 + $0x9c] sm:$0xf]
      %v215 = vld [vmem:[%s166 + $0xa0] sm:$0xf]
      %v216 = vld [vmem:[%s166 + $0xa4] sm:$0xf]
      %v217 = vld [vmem:[%s166 + $0xa8] sm:$0xf]
      %v218 = vld [vmem:[%s166 + $0xac] sm:$0xf]
      %v219 = vld [vmem:[%s166 + $0xb0] sm:$0xf]
      %v220 = vld [vmem:[%s166 + $0xb4] sm:$0xf]
      %v221 = vld [vmem:[%s166 + $0xb8] sm:$0xf]
      %v222 = vld [vmem:[%s166 + $0xbc] sm:$0xf]
      %v223 = vld [vmem:[%s1] sm:$0xf]
      %v224 = vld [vmem:[%s1 + $0x4] sm:$0xf]
      %v225 = vld [vmem:[%s1 + $0x8] sm:$0xf]
      %v226 = vld [vmem:[%s1 + $0xc] sm:$0x1]
      %v227 = vld [vmem:[%s2] sm:$0x1]
      %v229 = vlaneseq
      %v230 = vshrl.u32 %v229, 7
      %v231 = vsub.s32 0, %v230
      %v232 = vrot.slane %v227, %v231
      %v282 = vunpack.c.l.b16 %v175
      %v283 = vunpack.c.l.b16 %v176
      %v284 = vunpack.c.l.b16 %v177
      %v285 = vunpack.c.l.b16 %v178
      %v286 = vunpack.c.l.b16 %v179
      %v287 = vunpack.c.l.b16 %v180
      %v288 = vunpack.c.l.b16 %v181
      %v289 = vunpack.c.l.b16 %v182
      %v290 = vunpack.c.l.b16 %v183
      %v291 = vunpack.c.l.b16 %v184
      %v292 = vunpack.c.l.b16 %v185
      %v293 = vunpack.c.l.b16 %v186
      %v294 = vunpack.c.l.b16 %v187
      %v295 = vunpack.c.l.b16 %v188
      %v296 = vunpack.c.l.b16 %v189
      %v297 = vunpack.c.l.b16 %v190
      %v298 = vunpack.c.l.b16 %v191
      %v299 = vunpack.c.l.b16 %v192
      %v300 = vunpack.c.l.b16 %v193
      %v301 = vunpack.c.l.b16 %v194
      %v302 = vunpack.c.l.b16 %v195
      %v303 = vunpack.c.l.b16 %v196
      %v304 = vunpack.c.l.b16 %v197
      %v305 = vunpack.c.l.b16 %v198
      %v306 = vunpack.c.l.b16 %v199
      %v307 = vunpack.c.l.b16 %v200
      %v308 = vunpack.c.l.b16 %v201
      %v309 = vunpack.c.l.b16 %v202
      %v310 = vunpack.c.l.b16 %v203
      %v311 = vunpack.c.l.b16 %v204
      %v312 = vunpack.c.l.b16 %v205
      %v313 = vunpack.c.l.b16 %v206
      %v314 = vunpack.c.l.b16 %v207
      %v315 = vunpack.c.l.b16 %v208
      %v316 = vunpack.c.l.b16 %v209
      %v317 = vunpack.c.l.b16 %v210
      %v318 = vunpack.c.l.b16 %v211
      %v319 = vunpack.c.l.b16 %v212
      %v320 = vunpack.c.l.b16 %v213
      %v321 = vunpack.c.l.b16 %v214
      %v322 = vunpack.c.l.b16 %v215
      %v323 = vunpack.c.l.b16 %v216
      %v324 = vunpack.c.l.b16 %v217
      %v325 = vunpack.c.l.b16 %v218
      %v326 = vunpack.c.l.b16 %v219
      %v327 = vunpack.c.l.b16 %v220
      %v328 = vunpack.c.l.b16 %v221
      %v329 = vunpack.c.l.b16 %v222
      %v330 = vpack.c.b16 %v283, %v282
      %v331 = vpack.c.b16 %v285, %v284
      %v332 = vpack.c.b16 %v287, %v286
      %v333 = vpack.c.b16 %v289, %v288
      %v334 = vpack.c.b16 %v291, %v290
      %v335 = vpack.c.b16 %v293, %v292
      %v336 = vpack.c.b16 %v295, %v294
      %v337 = vpack.c.b16 %v297, %v296
      %v338 = vpack.c.b16 %v299, %v298
      %v339 = vpack.c.b16 %v301, %v300
      %v340 = vpack.c.b16 %v303, %v302
      %v341 = vpack.c.b16 %v305, %v304
      %v342 = vpack.c.b16 %v307, %v306
      %v343 = vpack.c.b16 %v309, %v308
      %v344 = vpack.c.b16 %v311, %v310
      %v345 = vpack.c.b16 %v313, %v312
      %v346 = vpack.c.b16 %v315, %v314
      %v347 = vpack.c.b16 %v317, %v316
      %v348 = vpack.c.b16 %v319, %v318
      %v349 = vpack.c.b16 %v321, %v320
      %v350 = vpack.c.b16 %v323, %v322
      %v351 = vpack.c.b16 %v325, %v324
      %v352 = vpack.c.b16 %v327, %v326
      %v353 = vpack.c.b16 %v329, %v328
      %v358 = vunpack.c.l.b16 %v223
      %v359 = vunpack.c.l.b16 %v224
      %v360 = vunpack.c.l.b16 %v225
      %v361 = vunpack.c.l.b16 %v226
      %v362 = vpack.c.b16 %v359, %v358
      %v363 = vpack.c.b16 %v361, %v360
      %vm365 = vcmask 203776
      %v367 = vsel %vm365, %v330, 0
      %v370 = vsel %vm365, %v331, 0
      %v373 = vsel %vm365, %v332, 0
      %v376 = vsel %vm365, %v333, 0
      %v379 = vsel %vm365, %v334, 0
      %v382 = vsel %vm365, %v335, 0
      %v385 = vsel %vm365, %v336, 0
      %v388 = vsel %vm365, %v337, 0
      %v391 = vsel %vm365, %v338, 0
      %v394 = vsel %vm365, %v339, 0
      %v397 = vsel %vm365, %v340, 0
      %v400 = vsel %vm365, %v341, 0
      %v403 = vsel %vm365, %v342, 0
      %v406 = vsel %vm365, %v343, 0
      %v409 = vsel %vm365, %v344, 0
      %v412 = vsel %vm365, %v345, 0
      %v415 = vsel %vm365, %v346, 0
      %v418 = vsel %vm365, %v347, 0
      %v421 = vsel %vm365, %v348, 0
      %v424 = vsel %vm365, %v349, 0
      %v427 = vsel %vm365, %v350, 0
      %v430 = vsel %vm365, %v351, 0
      %v433 = vsel %vm365, %v352, 0
      %v436 = vsel %vm365, %v353, 0
      %vm438 = vcmask 1043456
      %vm439 = vcmask 1044480
      %v440 = vsel %vm438, 4294967295, 65535
      %v441 = vsel %vm439, %v440, 0
      %v443 = vand.u32 %v363, %v441
      %445 = vmatprep.subr.bf16.mxu0 0
      %446 = vmatpush1.bf16.msra.mxu0 0
      %447 = vmatprep.subr.bf16.mxu0 0
      %448 = vmatpush1.bf16.msra.mxu0 0
      %449 = vmatprep.subr.bf16.mxu0 0
      %450 = vmatpush1.bf16.msra.mxu0 0
      %451 = vmatprep.subr.bf16.mxu0 0
      %452 = vmatpush1.bf16.msra.mxu0 0
      %453 = vmatprep.subr.bf16.mxu0 0
      %454 = vmatpush1.bf16.msra.mxu0 0
      %455 = vmatprep.subr.bf16.mxu0 0
      %456 = vmatpush1.bf16.msra.mxu0 0
      %457 = vmatprep.subr.bf16.mxu0 0
      %458 = vmatpush1.bf16.msra.mxu0 %v443
      %459 = vmatprep.subr.bf16.mxu0 0
      %460 = vmatpush1.bf16.msra.mxu0 %v362
      %461 = vmatprep.subr.bf16.mxu0 0
      %462 = vmatpush2.bf16.msra.mxu0 0
      %463 = vmatprep.subr.bf16.mxu0 0
      %464 = vmatpush2.bf16.msra.mxu0 0
      %465 = vmatprep.subr.bf16.mxu0 0
      %466 = vmatpush2.bf16.msra.mxu0 0
      %467 = vmatprep.subr.bf16.mxu0 0
      %468 = vmatpush2.bf16.msra.mxu0 0
      %469 = vmatprep.subr.bf16.mxu0 0
      %470 = vmatpush2.bf16.msra.mxu0 0
      %471 = vmatprep.subr.bf16.mxu0 0
      %472 = vmatpush2.bf16.msra.mxu0 0
      %473 = vmatprep.subr.bf16.mxu0 0
      %474 = vmatpush2.bf16.msra.mxu0 0
      %475 = vmatprep.subr.bf16.mxu0 0
      %476 = vmatpush2.bf16.msra.mxu0 0
      %477 = vmatprep.mubr.bf16.mxu0 0
      %478 = vmatmul.mubr.bf16.gmra.mxu0 %v367
      %v479 = vpop.f32.mrf.mxu0
      %v480 = vadd.f32 %v232, %v479
      %v481 = vpop.f32.mrf.mxu0
      %v482 = vpop.f32.mrf.mxu0
      %v483 = vadd.f32 %v232, %v482
      %v484 = vpop.f32.mrf.mxu0
      %485 = vmatprep.mubr.bf16.mxu0 0
      %486 = vmatmul.mubr.bf16.gmra.mxu0 %v370
      %v487 = vpop.f32.mrf.mxu0
      %v488 = vadd.f32 %v232, %v487
      %v489 = vpop.f32.mrf.mxu0
      %v490 = vpop.f32.mrf.mxu0
      %v491 = vadd.f32 %v232, %v490
      %v492 = vpop.f32.mrf.mxu0
      %493 = vmatprep.mubr.bf16.mxu0 0
      %494 = vmatmul.mubr.bf16.gmra.mxu0 %v373
      %v495 = vpop.f32.mrf.mxu0
      %v496 = vadd.f32 %v232, %v495
      %v497 = vpop.f32.mrf.mxu0
      %v498 = vpop.f32.mrf.mxu0
      %v499 = vadd.f32 %v232, %v498
      %v500 = vpop.f32.mrf.mxu0
      %501 = vmatprep.mubr.bf16.mxu0 0
      %502 = vmatmul.mubr.bf16.gmra.mxu0 %v376
      %v503 = vpop.f32.mrf.mxu0
      %v504 = vadd.f32 %v232, %v503
      %v505 = vpop.f32.mrf.mxu0
      %v506 = vpop.f32.mrf.mxu0
      %v507 = vadd.f32 %v232, %v506
      %v508 = vpop.f32.mrf.mxu0
      %509 = vmatprep.mubr.bf16.mxu0 0
      %510 = vmatmul.mubr.bf16.gmra.mxu0 %v379
      %v511 = vpop.f32.mrf.mxu0
      %v512 = vadd.f32 %v232, %v511
      %v513 = vpop.f32.mrf.mxu0
      %v514 = vpop.f32.mrf.mxu0
      %v515 = vadd.f32 %v232, %v514
      %v516 = vpop.f32.mrf.mxu0
      %517 = vmatprep.mubr.bf16.mxu0 0
      %518 = vmatmul.mubr.bf16.gmra.mxu0 %v382
      %v519 = vpop.f32.mrf.mxu0
      %v520 = vadd.f32 %v232, %v519
      %v521 = vpop.f32.mrf.mxu0
      %v522 = vpop.f32.mrf.mxu0
      %v523 = vadd.f32 %v232, %v522
      %v524 = vpop.f32.mrf.mxu0
      %525 = vmatprep.mubr.bf16.mxu0 0
      %526 = vmatmul.mubr.bf16.gmra.mxu0 %v385
      %v527 = vpop.f32.mrf.mxu0
      %v528 = vadd.f32 %v232, %v527
      %v529 = vpop.f32.mrf.mxu0
      %v530 = vpop.f32.mrf.mxu0
      %v531 = vadd.f32 %v232, %v530
      %v532 = vpop.f32.mrf.mxu0
      %533 = vmatprep.mubr.bf16.mxu0 0
      %534 = vmatmul.mubr.bf16.gmra.mxu0 %v388
      %v535 = vpop.f32.mrf.mxu0
      %v536 = vadd.f32 %v232, %v535
      %v537 = vpop.f32.mrf.mxu0
      %v538 = vpop.f32.mrf.mxu0
      %v539 = vadd.f32 %v232, %v538
      %v540 = vpop.f32.mrf.mxu0
      %541 = vmatprep.mubr.bf16.mxu0 0
      %542 = vmatmul.mubr.bf16.gmra.mxu0 %v391
      %v543 = vpop.f32.mrf.mxu0
      %v544 = vadd.f32 %v232, %v543
      %v545 = vpop.f32.mrf.mxu0
      %v546 = vpop.f32.mrf.mxu0
      %v547 = vadd.f32 %v232, %v546
      %v548 = vpop.f32.mrf.mxu0
      %549 = vmatprep.mubr.bf16.mxu0 0
      %550 = vmatmul.mubr.bf16.gmra.mxu0 %v394
      %v551 = vpop.f32.mrf.mxu0
      %v552 = vadd.f32 %v232, %v551
      %v553 = vpop.f32.mrf.mxu0
      %v554 = vpop.f32.mrf.mxu0
      %v555 = vadd.f32 %v232, %v554
      %v556 = vpop.f32.mrf.mxu0
      %557 = vmatprep.mubr.bf16.mxu0 0
      %558 = vmatmul.mubr.bf16.gmra.mxu0 %v397
      %v559 = vpop.f32.mrf.mxu0
      %v560 = vadd.f32 %v232, %v559
      %v561 = vpop.f32.mrf.mxu0
      %v562 = vpop.f32.mrf.mxu0
      %v563 = vadd.f32 %v232, %v562
      %v564 = vpop.f32.mrf.mxu0
      %565 = vmatprep.mubr.bf16.mxu0 0
      %566 = vmatmul.mubr.bf16.gmra.mxu0 %v400
      %v567 = vpop.f32.mrf.mxu0
      %v568 = vadd.f32 %v232, %v567
      %v569 = vpop.f32.mrf.mxu0
      %v570 = vpop.f32.mrf.mxu0
      %v571 = vadd.f32 %v232, %v570
      %v572 = vpop.f32.mrf.mxu0
      %573 = vmatprep.mubr.bf16.mxu0 0
      %574 = vmatmul.mubr.bf16.gmra.mxu0 %v403
      %v575 = vpop.f32.mrf.mxu0
      %v576 = vadd.f32 %v232, %v575
      %v577 = vpop.f32.mrf.mxu0
      %v578 = vpop.f32.mrf.mxu0
      %v579 = vadd.f32 %v232, %v578
      %v580 = vpop.f32.mrf.mxu0
      %581 = vmatprep.mubr.bf16.mxu0 0
      %582 = vmatmul.mubr.bf16.gmra.mxu0 %v406
      %v583 = vpop.f32.mrf.mxu0
      %v584 = vadd.f32 %v232, %v583
      %v585 = vpop.f32.mrf.mxu0
      %v586 = vpop.f32.mrf.mxu0
      %v587 = vadd.f32 %v232, %v586
      %v588 = vpop.f32.mrf.mxu0
      %589 = vmatprep.mubr.bf16.mxu0 0
      %590 = vmatmul.mubr.bf16.gmra.mxu0 %v409
      %v591 = vpop.f32.mrf.mxu0
      %v592 = vadd.f32 %v232, %v591
      %v593 = vpop.f32.mrf.mxu0
      %v594 = vpop.f32.mrf.mxu0
      %v595 = vadd.f32 %v232, %v594
      %v596 = vpop.f32.mrf.mxu0
      %597 = vmatprep.mubr.bf16.mxu0 0
      %598 = vmatmul.mubr.bf16.gmra.mxu0 %v412
      %v599 = vpop.f32.mrf.mxu0
      %v600 = vadd.f32 %v232, %v599
      %v601 = vpop.f32.mrf.mxu0
      %v602 = vpop.f32.mrf.mxu0
      %v603 = vadd.f32 %v232, %v602
      %v604 = vpop.f32.mrf.mxu0
      %605 = vmatprep.mubr.bf16.mxu0 0
      %606 = vmatmul.mubr.bf16.gmra.mxu0 %v415
      %v607 = vpop.f32.mrf.mxu0
      %v608 = vadd.f32 %v232, %v607
      %v609 = vpop.f32.mrf.mxu0
      %v610 = vpop.f32.mrf.mxu0
      %v611 = vadd.f32 %v232, %v610
      %v612 = vpop.f32.mrf.mxu0
      %613 = vmatprep.mubr.bf16.mxu0 0
      %614 = vmatmul.mubr.bf16.gmra.mxu0 %v418
      %v615 = vpop.f32.mrf.mxu0
      %v616 = vadd.f32 %v232, %v615
      %v617 = vpop.f32.mrf.mxu0
      %v618 = vpop.f32.mrf.mxu0
      %v619 = vadd.f32 %v232, %v618
      %v620 = vpop.f32.mrf.mxu0
      %621 = vmatprep.mubr.bf16.mxu0 0
      %622 = vmatmul.mubr.bf16.gmra.mxu0 %v421
      %v623 = vpop.f32.mrf.mxu0
      %v624 = vadd.f32 %v232, %v623
      %v625 = vpop.f32.mrf.mxu0
      %v626 = vpop.f32.mrf.mxu0
      %v627 = vadd.f32 %v232, %v626
      %v628 = vpop.f32.mrf.mxu0
      %629 = vmatprep.mubr.bf16.mxu0 0
      %630 = vmatmul.mubr.bf16.gmra.mxu0 %v424
      %v631 = vpop.f32.mrf.mxu0
      %v632 = vadd.f32 %v232, %v631
      %v633 = vpop.f32.mrf.mxu0
      %v634 = vpop.f32.mrf.mxu0
      %v635 = vadd.f32 %v232, %v634
      %v636 = vpop.f32.mrf.mxu0
      %637 = vmatprep.mubr.bf16.mxu0 0
      %638 = vmatmul.mubr.bf16.gmra.mxu0 %v427
      %v639 = vpop.f32.mrf.mxu0
      %v640 = vadd.f32 %v232, %v639
      %v641 = vpop.f32.mrf.mxu0
      %v642 = vpop.f32.mrf.mxu0
      %v643 = vadd.f32 %v232, %v642
      %v644 = vpop.f32.mrf.mxu0
      %645 = vmatprep.mubr.bf16.mxu0 0
      %646 = vmatmul.mubr.bf16.gmra.mxu0 %v430
      %v647 = vpop.f32.mrf.mxu0
      %v648 = vadd.f32 %v232, %v647
      %v649 = vpop.f32.mrf.mxu0
      %v650 = vpop.f32.mrf.mxu0
      %v651 = vadd.f32 %v232, %v650
      %v652 = vpop.f32.mrf.mxu0
      %653 = vmatprep.mubr.bf16.mxu0 0
      %654 = vmatmul.mubr.bf16.gmra.mxu0 %v433
      %v655 = vpop.f32.mrf.mxu0
      %v656 = vadd.f32 %v232, %v655
      %v657 = vpop.f32.mrf.mxu0
      %v658 = vpop.f32.mrf.mxu0
      %v659 = vadd.f32 %v232, %v658
      %v660 = vpop.f32.mrf.mxu0
      %661 = vmatprep.mubr.bf16.mxu0 0
      %662 = vmatmul.mubr.bf16.gmra.mxu0 %v436
      %v663 = vpop.f32.mrf.mxu0
      %v664 = vadd.f32 %v232, %v663
      %v665 = vpop.f32.mrf.mxu0
      %v666 = vpop.f32.mrf.mxu0
      %v667 = vadd.f32 %v232, %v666
      %v668 = vpop.f32.mrf.mxu0
      %669 = vdwg.mxu0
      %v670 = vmax.f32 %v480, 0.0
      %v671 = vmax.f32 %v483, 0.0
      %v672 = vmax.f32 %v488, 0.0
      %v673 = vmax.f32 %v491, 0.0
      %v674 = vmax.f32 %v496, 0.0
      %v675 = vmax.f32 %v499, 0.0
      %v676 = vmax.f32 %v504, 0.0
      %v677 = vmax.f32 %v507, 0.0
      %v678 = vmax.f32 %v512, 0.0
      %v679 = vmax.f32 %v515, 0.0
      %v680 = vmax.f32 %v520, 0.0
      %v681 = vmax.f32 %v523, 0.0
      %v682 = vmax.f32 %v528, 0.0
      %v683 = vmax.f32 %v531, 0.0
      %v684 = vmax.f32 %v536, 0.0
      %v685 = vmax.f32 %v539, 0.0
      %v686 = vmax.f32 %v544, 0.0
      %v687 = vmax.f32 %v547, 0.0
      %v688 = vmax.f32 %v552, 0.0
      %v689 = vmax.f32 %v555, 0.0
      %v690 = vmax.f32 %v560, 0.0
      %v691 = vmax.f32 %v563, 0.0
      %v692 = vmax.f32 %v568, 0.0
      %v693 = vmax.f32 %v571, 0.0
      %v694 = vmax.f32 %v576, 0.0
      %v695 = vmax.f32 %v579, 0.0
      %v696 = vmax.f32 %v584, 0.0
      %v697 = vmax.f32 %v587, 0.0
      %v698 = vmax.f32 %v592, 0.0
      %v699 = vmax.f32 %v595, 0.0
      %v700 = vmax.f32 %v600, 0.0
      %v701 = vmax.f32 %v603, 0.0
      %v702 = vmax.f32 %v608, 0.0
      %v703 = vmax.f32 %v611, 0.0
      %v704 = vmax.f32 %v616, 0.0
      %v705 = vmax.f32 %v619, 0.0
      %v706 = vmax.f32 %v624, 0.0
      %v707 = vmax.f32 %v627, 0.0
      %v708 = vmax.f32 %v632, 0.0
      %v709 = vmax.f32 %v635, 0.0
      %v710 = vmax.f32 %v640, 0.0
      %v711 = vmax.f32 %v643, 0.0
      %v712 = vmax.f32 %v648, 0.0
      %v713 = vmax.f32 %v651, 0.0
      %v714 = vmax.f32 %v656, 0.0
      %v715 = vmax.f32 %v659, 0.0
      %v716 = vmax.f32 %v664, 0.0
      %v717 = vmax.f32 %v667, 0.0
      %718 = vst [vmem:[%s172] sm:$0xff] %v670
      %719 = vst [vmem:[%s172 + $0x8] sm:$0xff] %v671
      %720 = vst [vmem:[%s172 + $0x10] sm:$0xff] %v672
      %721 = vst [vmem:[%s172 + $0x18] sm:$0xff] %v673
      %722 = vst [vmem:[%s172 + $0x20] sm:$0xff] %v674
      %723 = vst [vmem:[%s172 + $0x28] sm:$0xff] %v675
      %724 = vst [vmem:[%s172 + $0x30] sm:$0xff] %v676
      %725 = vst [vmem:[%s172 + $0x38] sm:$0xff] %v677
      %726 = vst [vmem:[%s172 + $0x40] sm:$0xff] %v678
      %727 = vst [vmem:[%s172 + $0x48] sm:$0xff] %v679
      %728 = vst [vmem:[%s172 + $0x50] sm:$0xff] %v680
      %729 = vst [vmem:[%s172 + $0x58] sm:$0xff] %v681
      %730 = vst [vmem:[%s172 + $0x60] sm:$0xff] %v682
      %731 = vst [vmem:[%s172 + $0x68] sm:$0xff] %v683
      %732 = vst [vmem:[%s172 + $0x70] sm:$0xff] %v684
      %733 = vst [vmem:[%s172 + $0x78] sm:$0xff] %v685
      %734 = vst [vmem:[%s172 + $0x80] sm:$0xff] %v686
      %735 = vst [vmem:[%s172 + $0x88] sm:$0xff] %v687
      %736 = vst [vmem:[%s172 + $0x90] sm:$0xff] %v688
      %737 = vst [vmem:[%s172 + $0x98] sm:$0xff] %v689
      %738 = vst [vmem:[%s172 + $0xa0] sm:$0xff] %v690
      %739 = vst [vmem:[%s172 + $0xa8] sm:$0xff] %v691
      %740 = vst [vmem:[%s172 + $0xb0] sm:$0xff] %v692
      %741 = vst [vmem:[%s172 + $0xb8] sm:$0xff] %v693
      %742 = vst [vmem:[%s172 + $0xc0] sm:$0xff] %v694
      %743 = vst [vmem:[%s172 + $0xc8] sm:$0xff] %v695
      %744 = vst [vmem:[%s172 + $0xd0] sm:$0xff] %v696
      %745 = vst [vmem:[%s172 + $0xd8] sm:$0xff] %v697
      %746 = vst [vmem:[%s172 + $0xe0] sm:$0xff] %v698
      %747 = vst [vmem:[%s172 + $0xe8] sm:$0xff] %v699
      %748 = vst [vmem:[%s172 + $0xf0] sm:$0xff] %v700
      %749 = vst [vmem:[%s172 + $0xf8] sm:$0xff] %v701
      %750 = vst [vmem:[%s172 + $0x100] sm:$0xff] %v702
      %751 = vst [vmem:[%s172 + $0x108] sm:$0xff] %v703
      %752 = vst [vmem:[%s172 + $0x110] sm:$0xff] %v704
      %753 = vst [vmem:[%s172 + $0x118] sm:$0xff] %v705
      %754 = vst [vmem:[%s172 + $0x120] sm:$0xff] %v706
      %755 = vst [vmem:[%s172 + $0x128] sm:$0xff] %v707
      %756 = vst [vmem:[%s172 + $0x130] sm:$0xff] %v708
      %757 = vst [vmem:[%s172 + $0x138] sm:$0xff] %v709
      %758 = vst [vmem:[%s172 + $0x140] sm:$0xff] %v710
      %759 = vst [vmem:[%s172 + $0x148] sm:$0xff] %v711
      %760 = vst [vmem:[%s172 + $0x150] sm:$0xff] %v712
      %761 = vst [vmem:[%s172 + $0x158] sm:$0xff] %v713
      %762 = vst [vmem:[%s172 + $0x160] sm:$0xff] %v714
      %763 = vst [vmem:[%s172 + $0x168] sm:$0xff] %v715
      %764 = vst [vmem:[%s172 + $0x170] sm:$0xff] %v716
      %765 = vst [vmem:[%s172 + $0x178] sm:$0xff] %v717
      %s766 = smul.u32 48, %s14
      %p767 = scmp.lt.s32.totalorder %s766, 143
      %s768 = scalar_select %p767, %s766, 143
      %s769 = smul.addr %s768, 8
      %s770 = scalar_lea.vmem %s3, %s769
      // Predicated region
      $region33: #{net_forward.9} parent=31 // pred_check
        %p771 = pneg %p100
      $region34: #{net_forward.9} parent=31 // pred_check_branch
        %773 = sbr.rel (%p771) target = $region36
      $region35: #{net_forward.9} parent=31 // pred_region
        %s774 = smul.u32 48, %s14
      $region36: #{net_forward.9} parent=31 // pred_fallthru
        _
    $region32: #{net_forward.9} parent=5 // pred_fallthru
      _
    %p775 = scmp.le.s32.totalorder 2, %s9
    // Predicated region
    $region37: #{net_forward.9} parent=5 // pred_check
      %p776 = pneg %p775
    $region38: #{net_forward.9} parent=5 // pred_check_branch
      %778 = sbr.rel (%p776) target = $region40
    $region39: #{net_forward.9} parent=5 // pred_region
      %s779 = ssub.s32 %s9, 2
      // Predicated region
      $region41: #{net_forward.9} parent=39 // pred_check
        %p780 = pneg %p106
      $region42: #{net_forward.9} parent=39 // pred_check_branch
        %782 = sbr.rel (%p780) target = $region44
      $region43: #{net_forward.9} parent=39 // pred_region
        %s783 = smul.u32 48, %s15
        %p784 = scmp.lt.s32.totalorder %s783, 143
        %s785 = scalar_select %p784, %s783, 143
        %s786 = smul.addr %s785, 8
        %s787 = scalar_lea.vmem %s3, %s786
      $region44: #{net_forward.9} parent=39 // pred_fallthru
        _
    $region40: #{net_forward.9} parent=5 // pred_fallthru
      _
  $region6: #{net_forward.9} parent=0 // loop_footer
    %s13 = sadd.s32 1, %s9
  $region7: #{net_forward.9} parent=0 // loop_footer_branch
    %8 = sbr.rel target = $region3
  $region8: #{net_forward.9} parent=0 // loop_exit
    _

// kernel: net_forward.11
$region0: #{net_forward.11}
  #allocation0 [shape = 'u32[]', space=smem, size = 0x4, offset = 0x4, fixed_abs, tag = 'smem constant byte address 0x4 - core index']
  #allocation1 [shape = 'u32[144,128]{1,0:T(1,128)}', space=vmem, size = 0x12000, scoped, tag = 'internal scratch']
  %s0 = inlined_call_operand.vmem [shape: bf16[288,144], index: 0, kind: input, shape index: {}]
  %s1 = inlined_call_operand.vmem [shape: bf16[144,128], index: 1, kind: input, shape index: {}]
  %s2 = inlined_call_operand.vmem [shape: f32[1,128], index: 2, kind: input, shape index: {}]
  %s3 = inlined_call_operand.vmem [shape: f32[288,128], index: 3, kind: output, shape index: {}]
  %s4 = sld [smem:[#allocation0]]
  $region22: #{net_forward.11} parent=0
    _
  %s6 = ssub.s32 1, %s4
  %s7 = scalar_select 0, %s6, %s4
  // Predicated region
  $region2: #{net_forward.11} parent=0 // pred_check
    _
  $region3: #{net_forward.11} parent=0 // pred_check_branch
    %9 = sbr.rel (0) target = $region5
  $region4: #{net_forward.11} parent=0 // pred_region
    _
  $region5: #{net_forward.11} parent=0 // pred_fallthru
    _
  // Predicated region
  $region6: #{net_forward.11} parent=0 // pred_check
    _
  $region7: #{net_forward.11} parent=0 // pred_check_branch
    %11 = sbr.rel (0) target = $region9
  $region8: #{net_forward.11} parent=0 // pred_region
    _
  $region9: #{net_forward.11} parent=0 // pred_fallthru
    _
  // Predicated region
  $region10: #{net_forward.11} parent=0 // pred_check
    _
  $region11: #{net_forward.11} parent=0 // pred_check_branch
    %13 = sbr.rel (0) target = $region13
  $region12: #{net_forward.11} parent=0 // pred_region
    _
  $region13: #{net_forward.11} parent=0 // pred_fallthru
    _
  %v15 = vld [vmem:[%s0] sm:$0xff]
  %v16 = vld [vmem:[%s0 + $0x8] sm:$0xff]
  %v17 = vld [vmem:[%s0 + $0x10] sm:$0xff]
  %v18 = vld [vmem:[%s0 + $0x18] sm:$0xff]
  %v19 = vld [vmem:[%s0 + $0x20] sm:$0xff]
  %v20 = vld [vmem:[%s0 + $0x28] sm:$0xff]
  %v21 = vld [vmem:[%s0 + $0x30] sm:$0xff]
  %v22 = vld [vmem:[%s0 + $0x38] sm:$0xff]
  %v23 = vld [vmem:[%s0 + $0x40] sm:$0xff]
  %v24 = vld [vmem:[%s0 + $0x48] sm:$0xff]
  %v25 = vld [vmem:[%s0 + $0x50] sm:$0xff]
  %v26 = vld [vmem:[%s0 + $0x58] sm:$0xff]
  %v27 = vld [vmem:[%s0 + $0x60] sm:$0xff]
  %v28 = vld [vmem:[%s0 + $0x68] sm:$0xff]
  %v29 = vld [vmem:[%s0 + $0x70] sm:$0xff]
  %v30 = vld [vmem:[%s0 + $0x78] sm:$0xff]
  %v31 = vld [vmem:[%s0 + $0x80] sm:$0xff]
  %v32 = vld [vmem:[%s0 + $0x88] sm:$0xff]
  %v33 = vld [vmem:[%s0 + $0x90] sm:$0xff]
  %v34 = vld [vmem:[%s0 + $0x98] sm:$0xff]
  %v35 = vld [vmem:[%s0 + $0xa0] sm:$0xff]
  %v36 = vld [vmem:[%s0 + $0xa8] sm:$0xff]
  %v37 = vld [vmem:[%s0 + $0xb0] sm:$0xff]
  %v38 = vld [vmem:[%s0 + $0xb8] sm:$0xff]
  %v39 = vld [vmem:[%s0 + $0xc0] sm:$0xff]
  %v40 = vld [vmem:[%s0 + $0xc8] sm:$0xff]
  %v41 = vld [vmem:[%s0 + $0xd0] sm:$0xff]
  %v42 = vld [vmem:[%s0 + $0xd8] sm:$0xff]
  %v43 = vld [vmem:[%s0 + $0xe0] sm:$0xff]
  %v44 = vld [vmem:[%s0 + $0xe8] sm:$0xff]
  %v45 = vld [vmem:[%s0 + $0xf0] sm:$0xff]
  %v46 = vld [vmem:[%s0 + $0xf8] sm:$0xff]
  %v47 = vld [vmem:[%s0 + $0x100] sm:$0xff]
  %v48 = vld [vmem:[%s0 + $0x108] sm:$0xff]
  %v49 = vld [vmem:[%s0 + $0x110] sm:$0xff]
  %v50 = vld [vmem:[%s0 + $0x118] sm:$0xff]
  %v51 = vld [vmem:[%s1] sm:$0xf]
  %v52 = vld [vmem:[%s1 + $0x4] sm:$0xf]
  %v53 = vld [vmem:[%s1 + $0x8] sm:$0xf]
  %v54 = vld [vmem:[%s1 + $0xc] sm:$0xf]
  %v55 = vld [vmem:[%s1 + $0x10] sm:$0xf]
  %v56 = vld [vmem:[%s1 + $0x14] sm:$0xf]
  %v57 = vld [vmem:[%s1 + $0x18] sm:$0xf]
  %v58 = vld [vmem:[%s1 + $0x1c] sm:$0xf]
  %v59 = vld [vmem:[%s1 + $0x20] sm:$0xf]
  %v60 = vld [vmem:[%s1 + $0x24] sm:$0xf]
  %v61 = vld [vmem:[%s1 + $0x28] sm:$0xf]
  %v62 = vld [vmem:[%s1 + $0x2c] sm:$0xf]
  %v63 = vld [vmem:[%s1 + $0x30] sm:$0xf]
  %v64 = vld [vmem:[%s1 + $0x34] sm:$0xf]
  %v65 = vld [vmem:[%s1 + $0x38] sm:$0xf]
  %v66 = vld [vmem:[%s1 + $0x3c] sm:$0xf]
  %v67 = vld [vmem:[%s1 + $0x40] sm:$0xf]
  %v68 = vld [vmem:[%s1 + $0x44] sm:$0xf]
  %v69 = vld [vmem:[%s2] sm:$0x1]
  %v71 = vlaneseq
  %v72 = vshrl.u32 %v71, 7
  %v73 = vsub.s32 0, %v72
  %v74 = vrot.slane %v69, %v73
  %v112 = vunpack.c.l.b16 %v15
  %v113 = vunpack.c.h.b16 %v15
  %v114 = vunpack.c.l.b16 %v16
  %v115 = vunpack.c.h.b16 %v16
  %v116 = vunpack.c.l.b16 %v17
  %v117 = vunpack.c.h.b16 %v17
  %v118 = vunpack.c.l.b16 %v18
  %v119 = vunpack.c.h.b16 %v18
  %v120 = vunpack.c.l.b16 %v19
  %v121 = vunpack.c.h.b16 %v19
  %v122 = vunpack.c.l.b16 %v20
  %v123 = vunpack.c.h.b16 %v20
  %v124 = vunpack.c.l.b16 %v21
  %v125 = vunpack.c.h.b16 %v21
  %v126 = vunpack.c.l.b16 %v22
  %v127 = vunpack.c.h.b16 %v22
  %v128 = vunpack.c.l.b16 %v23
  %v129 = vunpack.c.h.b16 %v23
  %v130 = vunpack.c.l.b16 %v24
  %v131 = vunpack.c.h.b16 %v24
  %v132 = vunpack.c.l.b16 %v25
  %v133 = vunpack.c.h.b16 %v25
  %v134 = vunpack.c.l.b16 %v26
  %v135 = vunpack.c.h.b16 %v26
  %v136 = vunpack.c.l.b16 %v27
  %v137 = vunpack.c.h.b16 %v27
  %v138 = vunpack.c.l.b16 %v28
  %v139 = vunpack.c.h.b16 %v28
  %v140 = vunpack.c.l.b16 %v29
  %v141 = vunpack.c.h.b16 %v29
  %v142 = vunpack.c.l.b16 %v30
  %v143 = vunpack.c.h.b16 %v30
  %v144 = vunpack.c.l.b16 %v31
  %v145 = vunpack.c.h.b16 %v31
  %v146 = vunpack.c.l.b16 %v32
  %v147 = vunpack.c.h.b16 %v32
  %v148 = vunpack.c.l.b16 %v33
  %v149 = vunpack.c.h.b16 %v33
  %v150 = vunpack.c.l.b16 %v34
  %v151 = vunpack.c.h.b16 %v34
  %v152 = vunpack.c.l.b16 %v35
  %v153 = vunpack.c.h.b16 %v35
  %v154 = vunpack.c.l.b16 %v36
  %v155 = vunpack.c.h.b16 %v36
  %v156 = vunpack.c.l.b16 %v37
  %v157 = vunpack.c.h.b16 %v37
  %v158 = vunpack.c.l.b16 %v38
  %v159 = vunpack.c.h.b16 %v38
  %v160 = vunpack.c.l.b16 %v39
  %v161 = vunpack.c.h.b16 %v39
  %v162 = vunpack.c.l.b16 %v40
  %v163 = vunpack.c.h.b16 %v40
  %v164 = vunpack.c.l.b16 %v41
  %v165 = vunpack.c.h.b16 %v41
  %v166 = vunpack.c.l.b16 %v42
  %v167 = vunpack.c.h.b16 %v42
  %v168 = vunpack.c.l.b16 %v43
  %v169 = vunpack.c.h.b16 %v43
  %v170 = vunpack.c.l.b16 %v44
  %v171 = vunpack.c.h.b16 %v44
  %v172 = vunpack.c.l.b16 %v45
  %v173 = vunpack.c.h.b16 %v45
  %v174 = vunpack.c.l.b16 %v46
  %v175 = vunpack.c.h.b16 %v46
  %v176 = vunpack.c.l.b16 %v47
  %v177 = vunpack.c.h.b16 %v47
  %v178 = vunpack.c.l.b16 %v48
  %v179 = vunpack.c.h.b16 %v48
  %v180 = vunpack.c.l.b16 %v49
  %v181 = vunpack.c.h.b16 %v49
  %v182 = vunpack.c.l.b16 %v50
  %v183 = vunpack.c.h.b16 %v50
  %v184 = vpack.c.b16 %v114, %v112
  %v185 = vpack.c.b16 %v115, %v113
  %v186 = vpack.c.b16 %v118, %v116
  %v187 = vpack.c.b16 %v119, %v117
  %v188 = vpack.c.b16 %v122, %v120
  %v189 = vpack.c.b16 %v123, %v121
  %v190 = vpack.c.b16 %v126, %v124
  %v191 = vpack.c.b16 %v127, %v125
  %v192 = vpack.c.b16 %v130, %v128
  %v193 = vpack.c.b16 %v131, %v129
  %v194 = vpack.c.b16 %v134, %v132
  %v195 = vpack.c.b16 %v135, %v133
  %v196 = vpack.c.b16 %v138, %v136
  %v197 = vpack.c.b16 %v139, %v137
  %v198 = vpack.c.b16 %v142, %v140
  %v199 = vpack.c.b16 %v143, %v141
  %v200 = vpack.c.b16 %v146, %v144
  %v201 = vpack.c.b16 %v147, %v145
  %v202 = vpack.c.b16 %v150, %v148
  %v203 = vpack.c.b16 %v151, %v149
  %v204 = vpack.c.b16 %v154, %v152
  %v205 = vpack.c.b16 %v155, %v153
  %v206 = vpack.c.b16 %v158, %v156
  %v207 = vpack.c.b16 %v159, %v157
  %v208 = vpack.c.b16 %v162, %v160
  %v209 = vpack.c.b16 %v163, %v161
  %v210 = vpack.c.b16 %v166, %v164
  %v211 = vpack.c.b16 %v167, %v165
  %v212 = vpack.c.b16 %v170, %v168
  %v213 = vpack.c.b16 %v171, %v169
  %v214 = vpack.c.b16 %v174, %v172
  %v215 = vpack.c.b16 %v175, %v173
  %v216 = vpack.c.b16 %v178, %v176
  %v217 = vpack.c.b16 %v179, %v177
  %v218 = vpack.c.b16 %v182, %v180
  %v219 = vpack.c.b16 %v183, %v181
  %v256 = vunpack.c.l.b16 %v51
  %v257 = vunpack.c.l.b16 %v52
  %v258 = vunpack.c.l.b16 %v53
  %v259 = vunpack.c.l.b16 %v54
  %v260 = vunpack.c.l.b16 %v55
  %v261 = vunpack.c.l.b16 %v56
  %v262 = vunpack.c.l.b16 %v57
  %v263 = vunpack.c.l.b16 %v58
  %v264 = vunpack.c.l.b16 %v59
  %v265 = vunpack.c.l.b16 %v60
  %v266 = vunpack.c.l.b16 %v61
  %v267 = vunpack.c.l.b16 %v62
  %v268 = vunpack.c.l.b16 %v63
  %v269 = vunpack.c.l.b16 %v64
  %v270 = vunpack.c.l.b16 %v65
  %v271 = vunpack.c.l.b16 %v66
  %v272 = vunpack.c.l.b16 %v67
  %v273 = vunpack.c.l.b16 %v68
  %v274 = vpack.c.b16 %v257, %v256
  %v275 = vpack.c.b16 %v259, %v258
  %v276 = vpack.c.b16 %v261, %v260
  %v277 = vpack.c.b16 %v263, %v262
  %v278 = vpack.c.b16 %v265, %v264
  %v279 = vpack.c.b16 %v267, %v266
  %v280 = vpack.c.b16 %v269, %v268
  %v281 = vpack.c.b16 %v271, %v270
  %v282 = vpack.c.b16 %v273, %v272
  %vm292 = vcmask 130048
  %v294 = vsel %vm292, %v185, 0
  %v297 = vsel %vm292, %v187, 0
  %v300 = vsel %vm292, %v189, 0
  %v303 = vsel %vm292, %v191, 0
  %v306 = vsel %vm292, %v193, 0
  %v309 = vsel %vm292, %v195, 0
  %v312 = vsel %vm292, %v197, 0
  %v315 = vsel %vm292, %v199, 0
  %v318 = vsel %vm292, %v201, 0
  %v321 = vsel %vm292, %v203, 0
  %v324 = vsel %vm292, %v205, 0
  %v327 = vsel %vm292, %v207, 0
  %v330 = vsel %vm292, %v209, 0
  %v333 = vsel %vm292, %v211, 0
  %v336 = vsel %vm292, %v213, 0
  %v339 = vsel %vm292, %v215, 0
  %v342 = vsel %vm292, %v217, 0
  %v345 = vsel %vm292, %v219, 0
  %347 = vmatprep.subr.bf16.mxu0 0
  %348 = vmatpush1.bf16.msra.mxu0 %v281
  %349 = vmatprep.subr.bf16.mxu0 0
  %350 = vmatpush1.bf16.msra.mxu0 %v280
  %351 = vmatprep.subr.bf16.mxu0 0
  %352 = vmatpush1.bf16.msra.mxu0 %v279
  %353 = vmatprep.subr.bf16.mxu0 0
  %354 = vmatpush1.bf16.msra.mxu0 %v278
  %355 = vmatprep.subr.bf16.mxu0 0
  %356 = vmatpush1.bf16.msra.mxu0 %v277
  %357 = vmatprep.subr.bf16.mxu0 0
  %358 = vmatpush1.bf16.msra.mxu0 %v276
  %359 = vmatprep.subr.bf16.mxu0 0
  %360 = vmatpush1.bf16.msra.mxu0 %v275
  %361 = vmatprep.subr.bf16.mxu0 0
  %362 = vmatpush1.bf16.msra.mxu0 %v274
  %363 = vmatprep.subr.bf16.mxu0 0
  %364 = vmatpush2.bf16.msra.mxu0 0
  %365 = vmatprep.subr.bf16.mxu0 0
  %366 = vmatpush2.bf16.msra.mxu0 0
  %367 = vmatprep.subr.bf16.mxu0 0
  %368 = vmatpush2.bf16.msra.mxu0 0
  %369 = vmatprep.subr.bf16.mxu0 0
  %370 = vmatpush2.bf16.msra.mxu0 0
  %371 = vmatprep.subr.bf16.mxu0 0
  %372 = vmatpush2.bf16.msra.mxu0 0
  %373 = vmatprep.subr.bf16.mxu0 0
  %374 = vmatpush2.bf16.msra.mxu0 0
  %375 = vmatprep.subr.bf16.mxu0 0
  %376 = vmatpush2.bf16.msra.mxu0 0
  %377 = vmatprep.subr.bf16.mxu0 0
  %378 = vmatpush2.bf16.msra.mxu0 %v282
  %379 = vmatprep.mubr.bf16.mxu0 %v294
  %380 = vmatmul.mubr.bf16.gmra.mxu0 %v184
  %v381 = vpop.f32.mrf.mxu0
  %v382 = vadd.f32 %v74, %v381
  %v383 = vpop.f32.mrf.mxu0
  %v384 = vpop.f32.mrf.mxu0
  %v385 = vadd.f32 %v74, %v384
  %v386 = vpop.f32.mrf.mxu0
  %387 = vmatprep.mubr.bf16.mxu0 %v297
  %388 = vmatmul.mubr.bf16.gmra.mxu0 %v186
  %v389 = vpop.f32.mrf.mxu0
  %v390 = vadd.f32 %v74, %v389
  %v391 = vpop.f32.mrf.mxu0
  %v392 = vpop.f32.mrf.mxu0
  %v393 = vadd.f32 %v74, %v392
  %v394 = vpop.f32.mrf.mxu0
  %395 = vmatprep.mubr.bf16.mxu0 %v300
  %396 = vmatmul.mubr.bf16.gmra.mxu0 %v188
  %v397 = vpop.f32.mrf.mxu0
  %v398 = vadd.f32 %v74, %v397
  %v399 = vpop.f32.mrf.mxu0
  %v400 = vpop.f32.mrf.mxu0
  %v401 = vadd.f32 %v74, %v400
  %v402 = vpop.f32.mrf.mxu0
  %403 = vmatprep.mubr.bf16.mxu0 %v303
  %404 = vmatmul.mubr.bf16.gmra.mxu0 %v190
  %v405 = vpop.f32.mrf.mxu0
  %v406 = vadd.f32 %v74, %v405
  %v407 = vpop.f32.mrf.mxu0
  %v408 = vpop.f32.mrf.mxu0
  %v409 = vadd.f32 %v74, %v408
  %v410 = vpop.f32.mrf.mxu0
  %411 = vmatprep.mubr.bf16.mxu0 %v306
  %412 = vmatmul.mubr.bf16.gmra.mxu0 %v192
  %v413 = vpop.f32.mrf.mxu0
  %v414 = vadd.f32 %v74, %v413
  %v415 = vpop.f32.mrf.mxu0
  %v416 = vpop.f32.mrf.mxu0
  %v417 = vadd.f32 %v74, %v416
  %v418 = vpop.f32.mrf.mxu0
  %419 = vmatprep.mubr.bf16.mxu0 %v309
  %420 = vmatmul.mubr.bf16.gmra.mxu0 %v194
  %v421 = vpop.f32.mrf.mxu0
  %v422 = vadd.f32 %v74, %v421
  %v423 = vpop.f32.mrf.mxu0
  %v424 = vpop.f32.mrf.mxu0
  %v425 = vadd.f32 %v74, %v424
  %v426 = vpop.f32.mrf.mxu0
  %427 = vmatprep.mubr.bf16.mxu0 %v312
  %428 = vmatmul.mubr.bf16.gmra.mxu0 %v196
  %v429 = vpop.f32.mrf.mxu0
  %v430 = vadd.f32 %v74, %v429
  %v431 = vpop.f32.mrf.mxu0
  %v432 = vpop.f32.mrf.mxu0
  %v433 = vadd.f32 %v74, %v432
  %v434 = vpop.f32.mrf.mxu0
  %435 = vmatprep.mubr.bf16.mxu0 %v315
  %436 = vmatmul.mubr.bf16.gmra.mxu0 %v198
  %v437 = vpop.f32.mrf.mxu0
  %v438 = vadd.f32 %v74, %v437
  %v439 = vpop.f32.mrf.mxu0
  %v440 = vpop.f32.mrf.mxu0
  %v441 = vadd.f32 %v74, %v440
  %v442 = vpop.f32.mrf.mxu0
  %443 = vmatprep.mubr.bf16.mxu0 %v318
  %444 = vmatmul.mubr.bf16.gmra.mxu0 %v200
  %v445 = vpop.f32.mrf.mxu0
  %v446 = vadd.f32 %v74, %v445
  %v447 = vpop.f32.mrf.mxu0
  %v448 = vpop.f32.mrf.mxu0
  %v449 = vadd.f32 %v74, %v448
  %v450 = vpop.f32.mrf.mxu0
  %451 = vmatprep.mubr.bf16.mxu0 %v321
  %452 = vmatmul.mubr.bf16.gmra.mxu0 %v202
  %v453 = vpop.f32.mrf.mxu0
  %v454 = vadd.f32 %v74, %v453
  %v455 = vpop.f32.mrf.mxu0
  %v456 = vpop.f32.mrf.mxu0
  %v457 = vadd.f32 %v74, %v456
  %v458 = vpop.f32.mrf.mxu0
  %459 = vmatprep.mubr.bf16.mxu0 %v324
  %460 = vmatmul.mubr.bf16.gmra.mxu0 %v204
  %v461 = vpop.f32.mrf.mxu0
  %v462 = vadd.f32 %v74, %v461
  %v463 = vpop.f32.mrf.mxu0
  %v464 = vpop.f32.mrf.mxu0
  %v465 = vadd.f32 %v74, %v464
  %v466 = vpop.f32.mrf.mxu0
  %467 = vmatprep.mubr.bf16.mxu0 %v327
  %468 = vmatmul.mubr.bf16.gmra.mxu0 %v206
  %v469 = vpop.f32.mrf.mxu0
  %v470 = vadd.f32 %v74, %v469
  %v471 = vpop.f32.mrf.mxu0
  %v472 = vpop.f32.mrf.mxu0
  %v473 = vadd.f32 %v74, %v472
  %v474 = vpop.f32.mrf.mxu0
  %475 = vmatprep.mubr.bf16.mxu0 %v330
  %476 = vmatmul.mubr.bf16.gmra.mxu0 %v208
  %v477 = vpop.f32.mrf.mxu0
  %v478 = vadd.f32 %v74, %v477
  %v479 = vpop.f32.mrf.mxu0
  %v480 = vpop.f32.mrf.mxu0
  %v481 = vadd.f32 %v74, %v480
  %v482 = vpop.f32.mrf.mxu0
  %483 = vmatprep.mubr.bf16.mxu0 %v333
  %484 = vmatmul.mubr.bf16.gmra.mxu0 %v210
  %v485 = vpop.f32.mrf.mxu0
  %v486 = vadd.f32 %v74, %v485
  %v487 = vpop.f32.mrf.mxu0
  %v488 = vpop.f32.mrf.mxu0
  %v489 = vadd.f32 %v74, %v488
  %v490 = vpop.f32.mrf.mxu0
  %491 = vmatprep.mubr.bf16.mxu0 %v336
  %492 = vmatmul.mubr.bf16.gmra.mxu0 %v212
  %v493 = vpop.f32.mrf.mxu0
  %v494 = vadd.f32 %v74, %v493
  %v495 = vpop.f32.mrf.mxu0
  %v496 = vpop.f32.mrf.mxu0
  %v497 = vadd.f32 %v74, %v496
  %v498 = vpop.f32.mrf.mxu0
  %499 = vmatprep.mubr.bf16.mxu0 %v339
  %500 = vmatmul.mubr.bf16.gmra.mxu0 %v214
  %v501 = vpop.f32.mrf.mxu0
  %v502 = vadd.f32 %v74, %v501
  %v503 = vpop.f32.mrf.mxu0
  %v504 = vpop.f32.mrf.mxu0
  %v505 = vadd.f32 %v74, %v504
  %v506 = vpop.f32.mrf.mxu0
  %507 = vmatprep.mubr.bf16.mxu0 %v342
  %508 = vmatmul.mubr.bf16.gmra.mxu0 %v216
  %v509 = vpop.f32.mrf.mxu0
  %v510 = vadd.f32 %v74, %v509
  %v511 = vpop.f32.mrf.mxu0
  %v512 = vpop.f32.mrf.mxu0
  %v513 = vadd.f32 %v74, %v512
  %v514 = vpop.f32.mrf.mxu0
  %515 = vmatprep.mubr.bf16.mxu0 %v345
  %516 = vmatmul.mubr.bf16.gmra.mxu0 %v218
  %v517 = vpop.f32.mrf.mxu0
  %v518 = vadd.f32 %v74, %v517
  %v519 = vpop.f32.mrf.mxu0
  %v520 = vpop.f32.mrf.mxu0
  %v521 = vadd.f32 %v74, %v520
  %v522 = vpop.f32.mrf.mxu0
  %523 = vdwg.mxu0
  %v524 = vmax.f32 %v382, 0.0
  %v525 = vmax.f32 %v385, 0.0
  %v526 = vmax.f32 %v390, 0.0
  %v527 = vmax.f32 %v393, 0.0
  %v528 = vmax.f32 %v398, 0.0
  %v529 = vmax.f32 %v401, 0.0
  %v530 = vmax.f32 %v406, 0.0
  %v531 = vmax.f32 %v409, 0.0
  %v532 = vmax.f32 %v414, 0.0
  %v533 = vmax.f32 %v417, 0.0
  %v534 = vmax.f32 %v422, 0.0
  %v535 = vmax.f32 %v425, 0.0
  %v536 = vmax.f32 %v430, 0.0
  %v537 = vmax.f32 %v433, 0.0
  %v538 = vmax.f32 %v438, 0.0
  %v539 = vmax.f32 %v441, 0.0
  %v540 = vmax.f32 %v446, 0.0
  %v541 = vmax.f32 %v449, 0.0
  %v542 = vmax.f32 %v454, 0.0
  %v543 = vmax.f32 %v457, 0.0
  %v544 = vmax.f32 %v462, 0.0
  %v545 = vmax.f32 %v465, 0.0
  %v546 = vmax.f32 %v470, 0.0
  %v547 = vmax.f32 %v473, 0.0
  %v548 = vmax.f32 %v478, 0.0
  %v549 = vmax.f32 %v481, 0.0
  %v550 = vmax.f32 %v486, 0.0
  %v551 = vmax.f32 %v489, 0.0
  %v552 = vmax.f32 %v494, 0.0
  %v553 = vmax.f32 %v497, 0.0
  %v554 = vmax.f32 %v502, 0.0
  %v555 = vmax.f32 %v505, 0.0
  %v556 = vmax.f32 %v510, 0.0
  %v557 = vmax.f32 %v513, 0.0
  %v558 = vmax.f32 %v518, 0.0
  %v559 = vmax.f32 %v521, 0.0
  %560 = vst [vmem:[%s3] sm:$0xff] %v524
  %561 = vst [vmem:[%s3 + $0x8] sm:$0xff] %v525
  %562 = vst [vmem:[%s3 + $0x10] sm:$0xff] %v526
  %563 = vst [vmem:[%s3 + $0x18] sm:$0xff] %v527
  %564 = vst [vmem:[%s3 + $0x20] sm:$0xff] %v528
  %565 = vst [vmem:[%s3 + $0x28] sm:$0xff] %v529
  %566 = vst [vmem:[%s3 + $0x30] sm:$0xff] %v530
  %567 = vst [vmem:[%s3 + $0x38] sm:$0xff] %v531
  %568 = vst [vmem:[%s3 + $0x40] sm:$0xff] %v532
  %569 = vst [vmem:[%s3 + $0x48] sm:$0xff] %v533
  %570 = vst [vmem:[%s3 + $0x50] sm:$0xff] %v534
  %571 = vst [vmem:[%s3 + $0x58] sm:$0xff] %v535
  %572 = vst [vmem:[%s3 + $0x60] sm:$0xff] %v536
  %573 = vst [vmem:[%s3 + $0x68] sm:$0xff] %v537
  %574 = vst [vmem:[%s3 + $0x70] sm:$0xff] %v538
  %575 = vst [vmem:[%s3 + $0x78] sm:$0xff] %v539
  %576 = vst [vmem:[%s3 + $0x80] sm:$0xff] %v540
  %577 = vst [vmem:[%s3 + $0x88] sm:$0xff] %v541
  %578 = vst [vmem:[%s3 + $0x90] sm:$0xff] %v542
  %579 = vst [vmem:[%s3 + $0x98] sm:$0xff] %v543
  %580 = vst [vmem:[%s3 + $0xa0] sm:$0xff] %v544
  %581 = vst [vmem:[%s3 + $0xa8] sm:$0xff] %v545
  %582 = vst [vmem:[%s3 + $0xb0] sm:$0xff] %v546
  %583 = vst [vmem:[%s3 + $0xb8] sm:$0xff] %v547
  %584 = vst [vmem:[%s3 + $0xc0] sm:$0xff] %v548
  %585 = vst [vmem:[%s3 + $0xc8] sm:$0xff] %v549
  %586 = vst [vmem:[%s3 + $0xd0] sm:$0xff] %v550
  %587 = vst [vmem:[%s3 + $0xd8] sm:$0xff] %v551
  %588 = vst [vmem:[%s3 + $0xe0] sm:$0xff] %v552
  %589 = vst [vmem:[%s3 + $0xe8] sm:$0xff] %v553
  %590 = vst [vmem:[%s3 + $0xf0] sm:$0xff] %v554
  %591 = vst [vmem:[%s3 + $0xf8] sm:$0xff] %v555
  %592 = vst [vmem:[%s3 + $0x100] sm:$0xff] %v556
  %593 = vst [vmem:[%s3 + $0x108] sm:$0xff] %v557
  %594 = vst [vmem:[%s3 + $0x110] sm:$0xff] %v558
  %595 = vst [vmem:[%s3 + $0x118] sm:$0xff] %v559
  // Predicated region
  $region14: #{net_forward.11} parent=0 // pred_check
    _
  $region15: #{net_forward.11} parent=0 // pred_check_branch
    %597 = sbr.rel (0) target = $region17
  $region16: #{net_forward.11} parent=0 // pred_region
    _
  $region17: #{net_forward.11} parent=0 // pred_fallthru
    _
  // Predicated region
  $region18: #{net_forward.11} parent=0 // pred_check
    _
  $region19: #{net_forward.11} parent=0 // pred_check_branch
    %599 = sbr.rel (0) target = $region21
  $region20: #{net_forward.11} parent=0 // pred_region
    _
  $region21: #{net_forward.11} parent=0 // pred_fallthru
    _

// kernel: net_forward.12
$region0: #{net_forward.12}
  #allocation0 [shape = 'u32[]', space=smem, size = 0x4, offset = 0x4, fixed_abs, tag = 'smem constant byte address 0x4 - core index']
  #allocation1 [shape = 'u32[144,128]{1,0:T(1,128)}', space=vmem, size = 0x12000, scoped, tag = 'internal scratch']
  %s0 = inlined_call_operand.vmem [shape: bf16[288,144], index: 0, kind: input, shape index: {}]
  %s1 = inlined_call_operand.vmem [shape: bf16[144,128], index: 1, kind: input, shape index: {}]
  %s2 = inlined_call_operand.vmem [shape: f32[1,128], index: 2, kind: input, shape index: {}]
  %s3 = inlined_call_operand.vmem [shape: f32[288,128], index: 3, kind: input, shape index: {}]
  %s4 = inlined_call_operand.vmem [shape: f32[288,128], index: 4, kind: output, shape index: {}]
  %s5 = sld [smem:[#allocation0]]
  $region26: #{net_forward.12} parent=0
    _
  %s7 = ssub.s32 1, %s5
  %s8 = scalar_select 0, %s7, %s5
  // Predicated region
  $region2: #{net_forward.12} parent=0 // pred_check
    _
  $region3: #{net_forward.12} parent=0 // pred_check_branch
    %10 = sbr.rel (0) target = $region5
  $region4: #{net_forward.12} parent=0 // pred_region
    _
  $region5: #{net_forward.12} parent=0 // pred_fallthru
    _
  // Predicated region
  $region6: #{net_forward.12} parent=0 // pred_check
    _
  $region7: #{net_forward.12} parent=0 // pred_check_branch
    %12 = sbr.rel (0) target = $region9
  $region8: #{net_forward.12} parent=0 // pred_region
    _
  $region9: #{net_forward.12} parent=0 // pred_fallthru
    _
  // Predicated region
  $region10: #{net_forward.12} parent=0 // pred_check
    _
  $region11: #{net_forward.12} parent=0 // pred_check_branch
    %14 = sbr.rel (0) target = $region13
  $region12: #{net_forward.12} parent=0 // pred_region
    _
  $region13: #{net_forward.12} parent=0 // pred_fallthru
    _
  // Predicated region
  $region14: #{net_forward.12} parent=0 // pred_check
    _
  $region15: #{net_forward.12} parent=0 // pred_check_branch
    %16 = sbr.rel (0) target = $region17
  $region16: #{net_forward.12} parent=0 // pred_region
    _
  $region17: #{net_forward.12} parent=0 // pred_fallthru
    _
  %v18 = vld [vmem:[%s0] sm:$0xff]
  %v19 = vld [vmem:[%s0 + $0x8] sm:$0xff]
  %v20 = vld [vmem:[%s0 + $0x10] sm:$0xff]
  %v21 = vld [vmem:[%s0 + $0x18] sm:$0xff]
  %v22 = vld [vmem:[%s0 + $0x20] sm:$0xff]
  %v23 = vld [vmem:[%s0 + $0x28] sm:$0xff]
  %v24 = vld [vmem:[%s0 + $0x30] sm:$0xff]
  %v25 = vld [vmem:[%s0 + $0x38] sm:$0xff]
  %v26 = vld [vmem:[%s0 + $0x40] sm:$0xff]
  %v27 = vld [vmem:[%s0 + $0x48] sm:$0xff]
  %v28 = vld [vmem:[%s0 + $0x50] sm:$0xff]
  %v29 = vld [vmem:[%s0 + $0x58] sm:$0xff]
  %v30 = vld [vmem:[%s0 + $0x60] sm:$0xff]
  %v31 = vld [vmem:[%s0 + $0x68] sm:$0xff]
  %v32 = vld [vmem:[%s0 + $0x70] sm:$0xff]
  %v33 = vld [vmem:[%s0 + $0x78] sm:$0xff]
  %v34 = vld [vmem:[%s0 + $0x80] sm:$0xff]
  %v35 = vld [vmem:[%s0 + $0x88] sm:$0xff]
  %v36 = vld [vmem:[%s0 + $0x90] sm:$0xff]
  %v37 = vld [vmem:[%s0 + $0x98] sm:$0xff]
  %v38 = vld [vmem:[%s0 + $0xa0] sm:$0xff]
  %v39 = vld [vmem:[%s0 + $0xa8] sm:$0xff]
  %v40 = vld [vmem:[%s0 + $0xb0] sm:$0xff]
  %v41 = vld [vmem:[%s0 + $0xb8] sm:$0xff]
  %v42 = vld [vmem:[%s0 + $0xc0] sm:$0xff]
  %v43 = vld [vmem:[%s0 + $0xc8] sm:$0xff]
  %v44 = vld [vmem:[%s0 + $0xd0] sm:$0xff]
  %v45 = vld [vmem:[%s0 + $0xd8] sm:$0xff]
  %v46 = vld [vmem:[%s0 + $0xe0] sm:$0xff]
  %v47 = vld [vmem:[%s0 + $0xe8] sm:$0xff]
  %v48 = vld [vmem:[%s0 + $0xf0] sm:$0xff]
  %v49 = vld [vmem:[%s0 + $0xf8] sm:$0xff]
  %v50 = vld [vmem:[%s0 + $0x100] sm:$0xff]
  %v51 = vld [vmem:[%s0 + $0x108] sm:$0xff]
  %v52 = vld [vmem:[%s0 + $0x110] sm:$0xff]
  %v53 = vld [vmem:[%s0 + $0x118] sm:$0xff]
  %v54 = vld [vmem:[%s1] sm:$0xf]
  %v55 = vld [vmem:[%s1 + $0x4] sm:$0xf]
  %v56 = vld [vmem:[%s1 + $0x8] sm:$0xf]
  %v57 = vld [vmem:[%s1 + $0xc] sm:$0xf]
  %v58 = vld [vmem:[%s1 + $0x10] sm:$0xf]
  %v59 = vld [vmem:[%s1 + $0x14] sm:$0xf]
  %v60 = vld [vmem:[%s1 + $0x18] sm:$0xf]
  %v61 = vld [vmem:[%s1 + $0x1c] sm:$0xf]
  %v62 = vld [vmem:[%s1 + $0x20] sm:$0xf]
  %v63 = vld [vmem:[%s1 + $0x24] sm:$0xf]
  %v64 = vld [vmem:[%s1 + $0x28] sm:$0xf]
  %v65 = vld [vmem:[%s1 + $0x2c] sm:$0xf]
  %v66 = vld [vmem:[%s1 + $0x30] sm:$0xf]
  %v67 = vld [vmem:[%s1 + $0x34] sm:$0xf]
  %v68 = vld [vmem:[%s1 + $0x38] sm:$0xf]
  %v69 = vld [vmem:[%s1 + $0x3c] sm:$0xf]
  %v70 = vld [vmem:[%s1 + $0x40] sm:$0xf]
  %v71 = vld [vmem:[%s1 + $0x44] sm:$0xf]
  %v72 = vld [vmem:[%s2] sm:$0x1]
  %v74 = vlaneseq
  %v75 = vshrl.u32 %v74, 7
  %v76 = vsub.s32 0, %v75
  %v77 = vrot.slane %v72, %v76
  %v115 = vunpack.c.l.b16 %v18
  %v116 = vunpack.c.h.b16 %v18
  %v117 = vunpack.c.l.b16 %v19
  %v118 = vunpack.c.h.b16 %v19
  %v119 = vunpack.c.l.b16 %v20
  %v120 = vunpack.c.h.b16 %v20
  %v121 = vunpack.c.l.b16 %v21
  %v122 = vunpack.c.h.b16 %v21
  %v123 = vunpack.c.l.b16 %v22
  %v124 = vunpack.c.h.b16 %v22
  %v125 = vunpack.c.l.b16 %v23
  %v126 = vunpack.c.h.b16 %v23
  %v127 = vunpack.c.l.b16 %v24
  %v128 = vunpack.c.h.b16 %v24
  %v129 = vunpack.c.l.b16 %v25
  %v130 = vunpack.c.h.b16 %v25
  %v131 = vunpack.c.l.b16 %v26
  %v132 = vunpack.c.h.b16 %v26
  %v133 = vunpack.c.l.b16 %v27
  %v134 = vunpack.c.h.b16 %v27
  %v135 = vunpack.c.l.b16 %v28
  %v136 = vunpack.c.h.b16 %v28
  %v137 = vunpack.c.l.b16 %v29
  %v138 = vunpack.c.h.b16 %v29
  %v139 = vunpack.c.l.b16 %v30
  %v140 = vunpack.c.h.b16 %v30
  %v141 = vunpack.c.l.b16 %v31
  %v142 = vunpack.c.h.b16 %v31
  %v143 = vunpack.c.l.b16 %v32
  %v144 = vunpack.c.h.b16 %v32
  %v145 = vunpack.c.l.b16 %v33
  %v146 = vunpack.c.h.b16 %v33
  %v147 = vunpack.c.l.b16 %v34
  %v148 = vunpack.c.h.b16 %v34
  %v149 = vunpack.c.l.b16 %v35
  %v150 = vunpack.c.h.b16 %v35
  %v151 = vunpack.c.l.b16 %v36
  %v152 = vunpack.c.h.b16 %v36
  %v153 = vunpack.c.l.b16 %v37
  %v154 = vunpack.c.h.b16 %v37
  %v155 = vunpack.c.l.b16 %v38
  %v156 = vunpack.c.h.b16 %v38
  %v157 = vunpack.c.l.b16 %v39
  %v158 = vunpack.c.h.b16 %v39
  %v159 = vunpack.c.l.b16 %v40
  %v160 = vunpack.c.h.b16 %v40
  %v161 = vunpack.c.l.b16 %v41
  %v162 = vunpack.c.h.b16 %v41
  %v163 = vunpack.c.l.b16 %v42
  %v164 = vunpack.c.h.b16 %v42
  %v165 = vunpack.c.l.b16 %v43
  %v166 = vunpack.c.h.b16 %v43
  %v167 = vunpack.c.l.b16 %v44
  %v168 = vunpack.c.h.b16 %v44
  %v169 = vunpack.c.l.b16 %v45
  %v170 = vunpack.c.h.b16 %v45
  %v171 = vunpack.c.l.b16 %v46
  %v172 = vunpack.c.h.b16 %v46
  %v173 = vunpack.c.l.b16 %v47
  %v174 = vunpack.c.h.b16 %v47
  %v175 = vunpack.c.l.b16 %v48
  %v176 = vunpack.c.h.b16 %v48
  %v177 = vunpack.c.l.b16 %v49
  %v178 = vunpack.c.h.b16 %v49
  %v179 = vunpack.c.l.b16 %v50
  %v180 = vunpack.c.h.b16 %v50
  %v181 = vunpack.c.l.b16 %v51
  %v182 = vunpack.c.h.b16 %v51
  %v183 = vunpack.c.l.b16 %v52
  %v184 = vunpack.c.h.b16 %v52
  %v185 = vunpack.c.l.b16 %v53
  %v186 = vunpack.c.h.b16 %v53
  %v187 = vpack.c.b16 %v117, %v115
  %v188 = vpack.c.b16 %v118, %v116
  %v189 = vpack.c.b16 %v121, %v119
  %v190 = vpack.c.b16 %v122, %v120
  %v191 = vpack.c.b16 %v125, %v123
  %v192 = vpack.c.b16 %v126, %v124
  %v193 = vpack.c.b16 %v129, %v127
  %v194 = vpack.c.b16 %v130, %v128
  %v195 = vpack.c.b16 %v133, %v131
  %v196 = vpack.c.b16 %v134, %v132
  %v197 = vpack.c.b16 %v137, %v135
  %v198 = vpack.c.b16 %v138, %v136
  %v199 = vpack.c.b16 %v141, %v139
  %v200 = vpack.c.b16 %v142, %v140
  %v201 = vpack.c.b16 %v145, %v143
  %v202 = vpack.c.b16 %v146, %v144
  %v203 = vpack.c.b16 %v149, %v147
  %v204 = vpack.c.b16 %v150, %v148
  %v205 = vpack.c.b16 %v153, %v151
  %v206 = vpack.c.b16 %v154, %v152
  %v207 = vpack.c.b16 %v157, %v155
  %v208 = vpack.c.b16 %v158, %v156
  %v209 = vpack.c.b16 %v161, %v159
  %v210 = vpack.c.b16 %v162, %v160
  %v211 = vpack.c.b16 %v165, %v163
  %v212 = vpack.c.b16 %v166, %v164
  %v213 = vpack.c.b16 %v169, %v167
  %v214 = vpack.c.b16 %v170, %v168
  %v215 = vpack.c.b16 %v173, %v171
  %v216 = vpack.c.b16 %v174, %v172
  %v217 = vpack.c.b16 %v177, %v175
  %v218 = vpack.c.b16 %v178, %v176
  %v219 = vpack.c.b16 %v181, %v179
  %v220 = vpack.c.b16 %v182, %v180
  %v221 = vpack.c.b16 %v185, %v183
  %v222 = vpack.c.b16 %v186, %v184
  %v259 = vunpack.c.l.b16 %v54
  %v260 = vunpack.c.l.b16 %v55
  %v261 = vunpack.c.l.b16 %v56
  %v262 = vunpack.c.l.b16 %v57
  %v263 = vunpack.c.l.b16 %v58
  %v264 = vunpack.c.l.b16 %v59
  %v265 = vunpack.c.l.b16 %v60
  %v266 = vunpack.c.l.b16 %v61
  %v267 = vunpack.c.l.b16 %v62
  %v268 = vunpack.c.l.b16 %v63
  %v269 = vunpack.c.l.b16 %v64
  %v270 = vunpack.c.l.b16 %v65
  %v271 = vunpack.c.l.b16 %v66
  %v272 = vunpack.c.l.b16 %v67
  %v273 = vunpack.c.l.b16 %v68
  %v274 = vunpack.c.l.b16 %v69
  %v275 = vunpack.c.l.b16 %v70
  %v276 = vunpack.c.l.b16 %v71
  %v277 = vpack.c.b16 %v260, %v259
  %v278 = vpack.c.b16 %v262, %v261
  %v279 = vpack.c.b16 %v264, %v263
  %v280 = vpack.c.b16 %v266, %v265
  %v281 = vpack.c.b16 %v268, %v267
  %v282 = vpack.c.b16 %v270, %v269
  %v283 = vpack.c.b16 %v272, %v271
  %v284 = vpack.c.b16 %v274, %v273
  %v285 = vpack.c.b16 %v276, %v275
  %vm295 = vcmask 130048
  %v297 = vsel %vm295, %v188, 0
  %v300 = vsel %vm295, %v190, 0
  %v303 = vsel %vm295, %v192, 0
  %v306 = vsel %vm295, %v194, 0
  %v309 = vsel %vm295, %v196, 0
  %v312 = vsel %vm295, %v198, 0
  %v315 = vsel %vm295, %v200, 0
  %v318 = vsel %vm295, %v202, 0
  %v321 = vsel %vm295, %v204, 0
  %v324 = vsel %vm295, %v206, 0
  %v327 = vsel %vm295, %v208, 0
  %v330 = vsel %vm295, %v210, 0
  %v333 = vsel %vm295, %v212, 0
  %v336 = vsel %vm295, %v214, 0
  %v339 = vsel %vm295, %v216, 0
  %v342 = vsel %vm295, %v218, 0
  %v345 = vsel %vm295, %v220, 0
  %v348 = vsel %vm295, %v222, 0
  %350 = vmatprep.subr.bf16.mxu0 0
  %351 = vmatpush1.bf16.msra.mxu0 %v284
  %352 = vmatprep.subr.bf16.mxu0 0
  %353 = vmatpush1.bf16.msra.mxu0 %v283
  %354 = vmatprep.subr.bf16.mxu0 0
  %355 = vmatpush1.bf16.msra.mxu0 %v282
  %356 = vmatprep.subr.bf16.mxu0 0
  %357 = vmatpush1.bf16.msra.mxu0 %v281
  %358 = vmatprep.subr.bf16.mxu0 0
  %359 = vmatpush1.bf16.msra.mxu0 %v280
  %360 = vmatprep.subr.bf16.mxu0 0
  %361 = vmatpush1.bf16.msra.mxu0 %v279
  %362 = vmatprep.subr.bf16.mxu0 0
  %363 = vmatpush1.bf16.msra.mxu0 %v278
  %364 = vmatprep.subr.bf16.mxu0 0
  %365 = vmatpush1.bf16.msra.mxu0 %v277
  %366 = vmatprep.subr.bf16.mxu0 0
  %367 = vmatpush2.bf16.msra.mxu0 0
  %368 = vmatprep.subr.bf16.mxu0 0
  %369 = vmatpush2.bf16.msra.mxu0 0
  %370 = vmatprep.subr.bf16.mxu0 0
  %371 = vmatpush2.bf16.msra.mxu0 0
  %372 = vmatprep.subr.bf16.mxu0 0
  %373 = vmatpush2.bf16.msra.mxu0 0
  %374 = vmatprep.subr.bf16.mxu0 0
  %375 = vmatpush2.bf16.msra.mxu0 0
  %376 = vmatprep.subr.bf16.mxu0 0
  %377 = vmatpush2.bf16.msra.mxu0 0
  %378 = vmatprep.subr.bf16.mxu0 0
  %379 = vmatpush2.bf16.msra.mxu0 0
  %380 = vmatprep.subr.bf16.mxu0 0
  %381 = vmatpush2.bf16.msra.mxu0 %v285
  %382 = vmatprep.mubr.bf16.mxu0 %v297
  %383 = vmatmul.mubr.bf16.gmra.mxu0 %v187
  %v384 = vpop.f32.mrf.mxu0
  %v385 = vadd.f32 %v77, %v384
  %v386 = vpop.f32.mrf.mxu0
  %v387 = vpop.f32.mrf.mxu0
  %v388 = vadd.f32 %v77, %v387
  %v389 = vpop.f32.mrf.mxu0
  %390 = vmatprep.mubr.bf16.mxu0 %v300
  %391 = vmatmul.mubr.bf16.gmra.mxu0 %v189
  %v392 = vpop.f32.mrf.mxu0
  %v393 = vadd.f32 %v77, %v392
  %v394 = vpop.f32.mrf.mxu0
  %v395 = vpop.f32.mrf.mxu0
  %v396 = vadd.f32 %v77, %v395
  %v397 = vpop.f32.mrf.mxu0
  %398 = vmatprep.mubr.bf16.mxu0 %v303
  %399 = vmatmul.mubr.bf16.gmra.mxu0 %v191
  %v400 = vpop.f32.mrf.mxu0
  %v401 = vadd.f32 %v77, %v400
  %v402 = vpop.f32.mrf.mxu0
  %v403 = vpop.f32.mrf.mxu0
  %v404 = vadd.f32 %v77, %v403
  %v405 = vpop.f32.mrf.mxu0
  %406 = vmatprep.mubr.bf16.mxu0 %v306
  %407 = vmatmul.mubr.bf16.gmra.mxu0 %v193
  %v408 = vpop.f32.mrf.mxu0
  %v409 = vadd.f32 %v77, %v408
  %v410 = vpop.f32.mrf.mxu0
  %v411 = vpop.f32.mrf.mxu0
  %v412 = vadd.f32 %v77, %v411
  %v413 = vpop.f32.mrf.mxu0
  %414 = vmatprep.mubr.bf16.mxu0 %v309
  %415 = vmatmul.mubr.bf16.gmra.mxu0 %v195
  %v416 = vpop.f32.mrf.mxu0
  %v417 = vadd.f32 %v77, %v416
  %v418 = vpop.f32.mrf.mxu0
  %v419 = vpop.f32.mrf.mxu0
  %v420 = vadd.f32 %v77, %v419
  %v421 = vpop.f32.mrf.mxu0
  %422 = vmatprep.mubr.bf16.mxu0 %v312
  %423 = vmatmul.mubr.bf16.gmra.mxu0 %v197
  %v424 = vpop.f32.mrf.mxu0
  %v425 = vadd.f32 %v77, %v424
  %v426 = vpop.f32.mrf.mxu0
  %v427 = vpop.f32.mrf.mxu0
  %v428 = vadd.f32 %v77, %v427
  %v429 = vpop.f32.mrf.mxu0
  %430 = vmatprep.mubr.bf16.mxu0 %v315
  %431 = vmatmul.mubr.bf16.gmra.mxu0 %v199
  %v432 = vpop.f32.mrf.mxu0
  %v433 = vadd.f32 %v77, %v432
  %v434 = vpop.f32.mrf.mxu0
  %v435 = vpop.f32.mrf.mxu0
  %v436 = vadd.f32 %v77, %v435
  %v437 = vpop.f32.mrf.mxu0
  %438 = vmatprep.mubr.bf16.mxu0 %v318
  %439 = vmatmul.mubr.bf16.gmra.mxu0 %v201
  %v440 = vpop.f32.mrf.mxu0
  %v441 = vadd.f32 %v77, %v440
  %v442 = vpop.f32.mrf.mxu0
  %v443 = vpop.f32.mrf.mxu0
  %v444 = vadd.f32 %v77, %v443
  %v445 = vpop.f32.mrf.mxu0
  %446 = vmatprep.mubr.bf16.mxu0 %v321
  %447 = vmatmul.mubr.bf16.gmra.mxu0 %v203
  %v448 = vpop.f32.mrf.mxu0
  %v449 = vadd.f32 %v77, %v448
  %v450 = vpop.f32.mrf.mxu0
  %v451 = vpop.f32.mrf.mxu0
  %v452 = vadd.f32 %v77, %v451
  %v453 = vpop.f32.mrf.mxu0
  %454 = vmatprep.mubr.bf16.mxu0 %v324
  %455 = vmatmul.mubr.bf16.gmra.mxu0 %v205
  %v456 = vpop.f32.mrf.mxu0
  %v457 = vadd.f32 %v77, %v456
  %v458 = vpop.f32.mrf.mxu0
  %v459 = vpop.f32.mrf.mxu0
  %v460 = vadd.f32 %v77, %v459
  %v461 = vpop.f32.mrf.mxu0
  %462 = vmatprep.mubr.bf16.mxu0 %v327
  %463 = vmatmul.mubr.bf16.gmra.mxu0 %v207
  %v464 = vpop.f32.mrf.mxu0
  %v465 = vadd.f32 %v77, %v464
  %v466 = vpop.f32.mrf.mxu0
  %v467 = vpop.f32.mrf.mxu0
  %v468 = vadd.f32 %v77, %v467
  %v469 = vpop.f32.mrf.mxu0
  %470 = vmatprep.mubr.bf16.mxu0 %v330
  %471 = vmatmul.mubr.bf16.gmra.mxu0 %v209
  %v472 = vpop.f32.mrf.mxu0
  %v473 = vadd.f32 %v77, %v472
  %v474 = vpop.f32.mrf.mxu0
  %v475 = vpop.f32.mrf.mxu0
  %v476 = vadd.f32 %v77, %v475
  %v477 = vpop.f32.mrf.mxu0
  %478 = vmatprep.mubr.bf16.mxu0 %v333
  %479 = vmatmul.mubr.bf16.gmra.mxu0 %v211
  %v480 = vpop.f32.mrf.mxu0
  %v481 = vadd.f32 %v77, %v480
  %v482 = vpop.f32.mrf.mxu0
  %v483 = vpop.f32.mrf.mxu0
  %v484 = vadd.f32 %v77, %v483
  %v485 = vpop.f32.mrf.mxu0
  %486 = vmatprep.mubr.bf16.mxu0 %v336
  %487 = vmatmul.mubr.bf16.gmra.mxu0 %v213
  %v488 = vpop.f32.mrf.mxu0
  %v489 = vadd.f32 %v77, %v488
  %v490 = vpop.f32.mrf.mxu0
  %v491 = vpop.f32.mrf.mxu0
  %v492 = vadd.f32 %v77, %v491
  %v493 = vpop.f32.mrf.mxu0
  %494 = vmatprep.mubr.bf16.mxu0 %v339
  %495 = vmatmul.mubr.bf16.gmra.mxu0 %v215
  %v496 = vpop.f32.mrf.mxu0
  %v497 = vadd.f32 %v77, %v496
  %v498 = vpop.f32.mrf.mxu0
  %v499 = vpop.f32.mrf.mxu0
  %v500 = vadd.f32 %v77, %v499
  %v501 = vpop.f32.mrf.mxu0
  %502 = vmatprep.mubr.bf16.mxu0 %v342
  %503 = vmatmul.mubr.bf16.gmra.mxu0 %v217
  %v504 = vpop.f32.mrf.mxu0
  %v505 = vadd.f32 %v77, %v504
  %v506 = vpop.f32.mrf.mxu0
  %v507 = vpop.f32.mrf.mxu0
  %v508 = vadd.f32 %v77, %v507
  %v509 = vpop.f32.mrf.mxu0
  %510 = vmatprep.mubr.bf16.mxu0 %v345
  %511 = vmatmul.mubr.bf16.gmra.mxu0 %v219
  %v512 = vpop.f32.mrf.mxu0
  %v513 = vadd.f32 %v77, %v512
  %v514 = vpop.f32.mrf.mxu0
  %v515 = vpop.f32.mrf.mxu0
  %v516 = vadd.f32 %v77, %v515
  %v517 = vpop.f32.mrf.mxu0
  %518 = vmatprep.mubr.bf16.mxu0 %v348
  %519 = vmatmul.mubr.bf16.gmra.mxu0 %v221
  %v520 = vpop.f32.mrf.mxu0
  %v521 = vadd.f32 %v77, %v520
  %v522 = vpop.f32.mrf.mxu0
  %v523 = vpop.f32.mrf.mxu0
  %v524 = vadd.f32 %v77, %v523
  %v525 = vpop.f32.mrf.mxu0
  %526 = vdwg.mxu0
  %v527 = vld [vmem:[%s3] sm:$0xff]
  %v528 = vld [vmem:[%s3 + $0x8] sm:$0xff]
  %v529 = vld [vmem:[%s3 + $0x10] sm:$0xff]
  %v530 = vld [vmem:[%s3 + $0x18] sm:$0xff]
  %v531 = vld [vmem:[%s3 + $0x20] sm:$0xff]
  %v532 = vld [vmem:[%s3 + $0x28] sm:$0xff]
  %v533 = vld [vmem:[%s3 + $0x30] sm:$0xff]
  %v534 = vld [vmem:[%s3 + $0x38] sm:$0xff]
  %v535 = vld [vmem:[%s3 + $0x40] sm:$0xff]
  %v536 = vld [vmem:[%s3 + $0x48] sm:$0xff]
  %v537 = vld [vmem:[%s3 + $0x50] sm:$0xff]
  %v538 = vld [vmem:[%s3 + $0x58] sm:$0xff]
  %v539 = vld [vmem:[%s3 + $0x60] sm:$0xff]
  %v540 = vld [vmem:[%s3 + $0x68] sm:$0xff]
  %v541 = vld [vmem:[%s3 + $0x70] sm:$0xff]
  %v542 = vld [vmem:[%s3 + $0x78] sm:$0xff]
  %v543 = vld [vmem:[%s3 + $0x80] sm:$0xff]
  %v544 = vld [vmem:[%s3 + $0x88] sm:$0xff]
  %v545 = vld [vmem:[%s3 + $0x90] sm:$0xff]
  %v546 = vld [vmem:[%s3 + $0x98] sm:$0xff]
  %v547 = vld [vmem:[%s3 + $0xa0] sm:$0xff]
  %v548 = vld [vmem:[%s3 + $0xa8] sm:$0xff]
  %v549 = vld [vmem:[%s3 + $0xb0] sm:$0xff]
  %v550 = vld [vmem:[%s3 + $0xb8] sm:$0xff]
  %v551 = vld [vmem:[%s3 + $0xc0] sm:$0xff]
  %v552 = vld [vmem:[%s3 + $0xc8] sm:$0xff]
  %v553 = vld [vmem:[%s3 + $0xd0] sm:$0xff]
  %v554 = vld [vmem:[%s3 + $0xd8] sm:$0xff]
  %v555 = vld [vmem:[%s3 + $0xe0] sm:$0xff]
  %v556 = vld [vmem:[%s3 + $0xe8] sm:$0xff]
  %v557 = vld [vmem:[%s3 + $0xf0] sm:$0xff]
  %v558 = vld [vmem:[%s3 + $0xf8] sm:$0xff]
  %v559 = vld [vmem:[%s3 + $0x100] sm:$0xff]
  %v560 = vld [vmem:[%s3 + $0x108] sm:$0xff]
  %v561 = vld [vmem:[%s3 + $0x110] sm:$0xff]
  %v562 = vld [vmem:[%s3 + $0x118] sm:$0xff]
  %v563 = vadd.f32 %v385, %v527
  %v564 = vadd.f32 %v388, %v528
  %v565 = vadd.f32 %v393, %v529
  %v566 = vadd.f32 %v396, %v530
  %v567 = vadd.f32 %v401, %v531
  %v568 = vadd.f32 %v404, %v532
  %v569 = vadd.f32 %v409, %v533
  %v570 = vadd.f32 %v412, %v534
  %v571 = vadd.f32 %v417, %v535
  %v572 = vadd.f32 %v420, %v536
  %v573 = vadd.f32 %v425, %v537
  %v574 = vadd.f32 %v428, %v538
  %v575 = vadd.f32 %v433, %v539
  %v576 = vadd.f32 %v436, %v540
  %v577 = vadd.f32 %v441, %v541
  %v578 = vadd.f32 %v444, %v542
  %v579 = vadd.f32 %v449, %v543
  %v580 = vadd.f32 %v452, %v544
  %v581 = vadd.f32 %v457, %v545
  %v582 = vadd.f32 %v460, %v546
  %v583 = vadd.f32 %v465, %v547
  %v584 = vadd.f32 %v468, %v548
  %v585 = vadd.f32 %v473, %v549
  %v586 = vadd.f32 %v476, %v550
  %v587 = vadd.f32 %v481, %v551
  %v588 = vadd.f32 %v484, %v552
  %v589 = vadd.f32 %v489, %v553
  %v590 = vadd.f32 %v492, %v554
  %v591 = vadd.f32 %v497, %v555
  %v592 = vadd.f32 %v500, %v556
  %v593 = vadd.f32 %v505, %v557
  %v594 = vadd.f32 %v508, %v558
  %v595 = vadd.f32 %v513, %v559
  %v596 = vadd.f32 %v516, %v560
  %v597 = vadd.f32 %v521, %v561
  %v598 = vadd.f32 %v524, %v562
  %v599 = vmax.f32 %v563, 0.0
  %v600 = vmax.f32 %v564, 0.0
  %v601 = vmax.f32 %v565, 0.0
  %v602 = vmax.f32 %v566, 0.0
  %v603 = vmax.f32 %v567, 0.0
  %v604 = vmax.f32 %v568, 0.0
  %v605 = vmax.f32 %v569, 0.0
  %v606 = vmax.f32 %v570, 0.0
  %v607 = vmax.f32 %v571, 0.0
  %v608 = vmax.f32 %v572, 0.0
  %v609 = vmax.f32 %v573, 0.0
  %v610 = vmax.f32 %v574, 0.0
  %v611 = vmax.f32 %v575, 0.0
  %v612 = vmax.f32 %v576, 0.0
  %v613 = vmax.f32 %v577, 0.0
  %v614 = vmax.f32 %v578, 0.0
  %v615 = vmax.f32 %v579, 0.0
  %v616 = vmax.f32 %v580, 0.0
  %v617 = vmax.f32 %v581, 0.0
  %v618 = vmax.f32 %v582, 0.0
  %v619 = vmax.f32 %v583, 0.0
  %v620 = vmax.f32 %v584, 0.0
  %v621 = vmax.f32 %v585, 0.0
  %v622 = vmax.f32 %v586, 0.0
  %v623 = vmax.f32 %v587, 0.0
  %v624 = vmax.f32 %v588, 0.0
  %v625 = vmax.f32 %v589, 0.0
  %v626 = vmax.f32 %v590, 0.0
  %v627 = vmax.f32 %v591, 0.0
  %v628 = vmax.f32 %v592, 0.0
  %v629 = vmax.f32 %v593, 0.0
  %v630 = vmax.f32 %v594, 0.0
  %v631 = vmax.f32 %v595, 0.0
  %v632 = vmax.f32 %v596, 0.0
  %v633 = vmax.f32 %v597, 0.0
  %v634 = vmax.f32 %v598, 0.0
  %635 = vst [vmem:[%s4] sm:$0xff] %v599
  %636 = vst [vmem:[%s4 + $0x8] sm:$0xff] %v600
  %637 = vst [vmem:[%s4 + $0x10] sm:$0xff] %v601
  %638 = vst [vmem:[%s4 + $0x18] sm:$0xff] %v602
  %639 = vst [vmem:[%s4 + $0x20] sm:$0xff] %v603
  %640 = vst [vmem:[%s4 + $0x28] sm:$0xff] %v604
  %641 = vst [vmem:[%s4 + $0x30] sm:$0xff] %v605
  %642 = vst [vmem:[%s4 + $0x38] sm:$0xff] %v606
  %643 = vst [vmem:[%s4 + $0x40] sm:$0xff] %v607
  %644 = vst [vmem:[%s4 + $0x48] sm:$0xff] %v608
  %645 = vst [vmem:[%s4 + $0x50] sm:$0xff] %v609
  %646 = vst [vmem:[%s4 + $0x58] sm:$0xff] %v610
  %647 = vst [vmem:[%s4 + $0x60] sm:$0xff] %v611
  %648 = vst [vmem:[%s4 + $0x68] sm:$0xff] %v612
  %649 = vst [vmem:[%s4 + $0x70] sm:$0xff] %v613
  %650 = vst [vmem:[%s4 + $0x78] sm:$0xff] %v614
  %651 = vst [vmem:[%s4 + $0x80] sm:$0xff] %v615
  %652 = vst [vmem:[%s4 + $0x88] sm:$0xff] %v616
  %653 = vst [vmem:[%s4 + $0x90] sm:$0xff] %v617
  %654 = vst [vmem:[%s4 + $0x98] sm:$0xff] %v618
  %655 = vst [vmem:[%s4 + $0xa0] sm:$0xff] %v619
  %656 = vst [vmem:[%s4 + $0xa8] sm:$0xff] %v620
  %657 = vst [vmem:[%s4 + $0xb0] sm:$0xff] %v621
  %658 = vst [vmem:[%s4 + $0xb8] sm:$0xff] %v622
  %659 = vst [vmem:[%s4 + $0xc0] sm:$0xff] %v623
  %660 = vst [vmem:[%s4 + $0xc8] sm:$0xff] %v624
  %661 = vst [vmem:[%s4 + $0xd0] sm:$0xff] %v625
  %662 = vst [vmem:[%s4 + $0xd8] sm:$0xff] %v626
  %663 = vst [vmem:[%s4 + $0xe0] sm:$0xff] %v627
  %664 = vst [vmem:[%s4 + $0xe8] sm:$0xff] %v628
  %665 = vst [vmem:[%s4 + $0xf0] sm:$0xff] %v629
  %666 = vst [vmem:[%s4 + $0xf8] sm:$0xff] %v630
  %667 = vst [vmem:[%s4 + $0x100] sm:$0xff] %v631
  %668 = vst [vmem:[%s4 + $0x108] sm:$0xff] %v632
  %669 = vst [vmem:[%s4 + $0x110] sm:$0xff] %v633
  %670 = vst [vmem:[%s4 + $0x118] sm:$0xff] %v634
  // Predicated region
  $region18: #{net_forward.12} parent=0 // pred_check
    _
  $region19: #{net_forward.12} parent=0 // pred_check_branch
    %672 = sbr.rel (0) target = $region21
  $region20: #{net_forward.12} parent=0 // pred_region
    _
  $region21: #{net_forward.12} parent=0 // pred_fallthru
    _
  // Predicated region
  $region22: #{net_forward.12} parent=0 // pred_check
    _
  $region23: #{net_forward.12} parent=0 // pred_check_branch
    %674 = sbr.rel (0) target = $region25
  $region24: #{net_forward.12} parent=0 // pred_region
    _
  $region25: #{net_forward.12} parent=0 // pred_fallthru
    _

// kernel: net_forward.14
$region0: #{net_forward.14}
  #allocation0 [shape = 'u32[]', space=smem, size = 0x4, offset = 0x4, fixed_abs, tag = 'smem constant byte address 0x4 - core index']
  #allocation1 [shape = 'u32[144,128]{1,0:T(1,128)}', space=vmem, size = 0x12000, scoped, tag = 'internal scratch']
  %s0 = inlined_call_operand.vmem [shape: f32[32,512], index: 0, kind: input, shape index: {}]
  %s1 = inlined_call_operand.vmem [shape: f32[32,128], index: 1, kind: output, shape index: {}]
  %s2 = sld [smem:[#allocation0]]
  $region14: #{net_forward.14} parent=0
    _
  %s4 = ssub.s32 1, %s2
  %s5 = scalar_select 0, %s4, %s2
  // Predicated region
  $region2: #{net_forward.14} parent=0 // pred_check
    _
  $region3: #{net_forward.14} parent=0 // pred_check_branch
    %7 = sbr.rel (0) target = $region5
  $region4: #{net_forward.14} parent=0 // pred_region
    _
  $region5: #{net_forward.14} parent=0 // pred_fallthru
    _
  %v8 = vld [vmem:[%s0] sm:$0xff]
  %v9 = vld [vmem:[%s0 + $0x8] sm:$0xff]
  %v10 = vld [vmem:[%s0 + $0x10] sm:$0xff]
  %v11 = vld [vmem:[%s0 + $0x18] sm:$0xff]
  %v12 = vld [vmem:[%s0 + $0x20] sm:$0xff]
  %v13 = vld [vmem:[%s0 + $0x28] sm:$0xff]
  %v14 = vld [vmem:[%s0 + $0x30] sm:$0xff]
  %v15 = vld [vmem:[%s0 + $0x38] sm:$0xff]
  %v16 = vld [vmem:[%s0 + $0x40] sm:$0xff]
  %v17 = vld [vmem:[%s0 + $0x48] sm:$0xff]
  %v18 = vld [vmem:[%s0 + $0x50] sm:$0xff]
  %v19 = vld [vmem:[%s0 + $0x58] sm:$0xff]
  %v20 = vld [vmem:[%s0 + $0x60] sm:$0xff]
  %v21 = vld [vmem:[%s0 + $0x68] sm:$0xff]
  %v22 = vld [vmem:[%s0 + $0x70] sm:$0xff]
  %v23 = vld [vmem:[%s0 + $0x78] sm:$0xff]
  %v24 = vmax.f32 %v8, %v9
  %v25 = vmax.f32 %v12, %v13
  %v26 = vmax.f32 %v16, %v17
  %v27 = vmax.f32 %v20, %v21
  %v28 = vmax.f32 %v10, %v11
  %v29 = vmax.f32 %v14, %v15
  %v30 = vmax.f32 %v18, %v19
  %v31 = vmax.f32 %v22, %v23
  %v32 = vmax.f32 %v24, %v28
  %v33 = vmax.f32 %v25, %v29
  %v34 = vmax.f32 %v26, %v30
  %v35 = vmax.f32 %v27, %v31
  %36 = vst [vmem:[%s1] sm:$0xff] %v32
  %37 = vst [vmem:[%s1 + $0x8] sm:$0xff] %v33
  %38 = vst [vmem:[%s1 + $0x10] sm:$0xff] %v34
  %39 = vst [vmem:[%s1 + $0x18] sm:$0xff] %v35
  // Predicated region
  $region6: #{net_forward.14} parent=0 // pred_check
    _
  $region7: #{net_forward.14} parent=0 // pred_check_branch
    %41 = sbr.rel (0) target = $region9
  $region8: #{net_forward.14} parent=0 // pred_region
    _
  $region9: #{net_forward.14} parent=0 // pred_fallthru
    _
  // Predicated region
  $region10: #{net_forward.14} parent=0 // pred_check
    _
  $region11: #{net_forward.14} parent=0 // pred_check_branch
    %43 = sbr.rel (0) target = $region13
  $region12: #{net_forward.14} parent=0 // pred_region
    _
  $region13: #{net_forward.14} parent=0 // pred_fallthru
    _

// kernel: net_forward.13
$region0: #{net_forward.13}
  #allocation0 [shape = 'u32[]', space=smem, size = 0x4, offset = 0x4, fixed_abs, tag = 'smem constant byte address 0x4 - core index']
  #allocation1 [shape = 'u32[144,128]{1,0:T(1,128)}', space=vmem, size = 0x12000, scoped, tag = 'internal scratch']
  %s0 = inlined_call_operand.vmem [shape: bf16[128,400], index: 0, kind: input, shape index: {}]
  %s1 = inlined_call_operand.vmem [shape: bf16[400,128], index: 1, kind: input, shape index: {}]
  %s2 = inlined_call_operand.vmem [shape: f32[1,128], index: 2, kind: input, shape index: {}]
  %s3 = inlined_call_operand.vmem [shape: f32[128,128], index: 3, kind: output, shape index: {}]
  %s4 = sld [smem:[#allocation0]]
  $region22: #{net_forward.13} parent=0
    _
  %s6 = ssub.s32 1, %s4
  %s7 = scalar_select 0, %s6, %s4
  // Predicated region
  $region2: #{net_forward.13} parent=0 // pred_check
    _
  $region3: #{net_forward.13} parent=0 // pred_check_branch
    %9 = sbr.rel (0) target = $region5
  $region4: #{net_forward.13} parent=0 // pred_region
    _
  $region5: #{net_forward.13} parent=0 // pred_fallthru
    _
  // Predicated region
  $region6: #{net_forward.13} parent=0 // pred_check
    _
  $region7: #{net_forward.13} parent=0 // pred_check_branch
    %11 = sbr.rel (0) target = $region9
  $region8: #{net_forward.13} parent=0 // pred_region
    _
  $region9: #{net_forward.13} parent=0 // pred_fallthru
    _
  // Predicated region
  $region10: #{net_forward.13} parent=0 // pred_check
    _
  $region11: #{net_forward.13} parent=0 // pred_check_branch
    %13 = sbr.rel (0) target = $region13
  $region12: #{net_forward.13} parent=0 // pred_region
    _
  $region13: #{net_forward.13} parent=0 // pred_fallthru
    _
  %v15 = vld [vmem:[%s0] sm:$0xff]
  %v16 = vld [vmem:[%s0 + $0x8] sm:$0xff]
  %v17 = vld [vmem:[%s0 + $0x10] sm:$0xff]
  %v18 = vld [vmem:[%s0 + $0x18] sm:$0xff]
  %v19 = vld [vmem:[%s0 + $0x20] sm:$0xff]
  %v20 = vld [vmem:[%s0 + $0x28] sm:$0xff]
  %v21 = vld [vmem:[%s0 + $0x30] sm:$0xff]
  %v22 = vld [vmem:[%s0 + $0x38] sm:$0xff]
  %v23 = vld [vmem:[%s0 + $0x40] sm:$0xff]
  %v24 = vld [vmem:[%s0 + $0x48] sm:$0xff]
  %v25 = vld [vmem:[%s0 + $0x50] sm:$0xff]
  %v26 = vld [vmem:[%s0 + $0x58] sm:$0xff]
  %v27 = vld [vmem:[%s0 + $0x60] sm:$0xff]
  %v28 = vld [vmem:[%s0 + $0x68] sm:$0xff]
  %v29 = vld [vmem:[%s0 + $0x70] sm:$0xff]
  %v30 = vld [vmem:[%s0 + $0x78] sm:$0xff]
  %v31 = vld [vmem:[%s0 + $0x80] sm:$0xff]
  %v32 = vld [vmem:[%s0 + $0x88] sm:$0xff]
  %v33 = vld [vmem:[%s0 + $0x90] sm:$0xff]
  %v34 = vld [vmem:[%s0 + $0x98] sm:$0xff]
  %v35 = vld [vmem:[%s0 + $0xa0] sm:$0xff]
  %v36 = vld [vmem:[%s0 + $0xa8] sm:$0xff]
  %v37 = vld [vmem:[%s0 + $0xb0] sm:$0xff]
  %v38 = vld [vmem:[%s0 + $0xb8] sm:$0xff]
  %v39 = vld [vmem:[%s0 + $0xc0] sm:$0xff]
  %v40 = vld [vmem:[%s0 + $0xc8] sm:$0xff]
  %v41 = vld [vmem:[%s0 + $0xd0] sm:$0xff]
  %v42 = vld [vmem:[%s0 + $0xd8] sm:$0xff]
  %v43 = vld [vmem:[%s0 + $0xe0] sm:$0xff]
  %v44 = vld [vmem:[%s0 + $0xe8] sm:$0xff]
  %v45 = vld [vmem:[%s0 + $0xf0] sm:$0xff]
  %v46 = vld [vmem:[%s0 + $0xf8] sm:$0xff]
  %v47 = vld [vmem:[%s1] sm:$0xf]
  %v48 = vld [vmem:[%s1 + $0x4] sm:$0xf]
  %v49 = vld [vmem:[%s1 + $0x8] sm:$0xf]
  %v50 = vld [vmem:[%s1 + $0xc] sm:$0xf]
  %v51 = vld [vmem:[%s1 + $0x10] sm:$0xf]
  %v52 = vld [vmem:[%s1 + $0x14] sm:$0xf]
  %v53 = vld [vmem:[%s1 + $0x18] sm:$0xf]
  %v54 = vld [vmem:[%s1 + $0x1c] sm:$0xf]
  %v55 = vld [vmem:[%s1 + $0x20] sm:$0xf]
  %v56 = vld [vmem:[%s1 + $0x24] sm:$0xf]
  %v57 = vld [vmem:[%s1 + $0x28] sm:$0xf]
  %v58 = vld [vmem:[%s1 + $0x2c] sm:$0xf]
  %v59 = vld [vmem:[%s1 + $0x30] sm:$0xf]
  %v60 = vld [vmem:[%s1 + $0x34] sm:$0xf]
  %v61 = vld [vmem:[%s1 + $0x38] sm:$0xf]
  %v62 = vld [vmem:[%s1 + $0x3c] sm:$0xf]
  %v63 = vld [vmem:[%s1 + $0x40] sm:$0xf]
  %v64 = vld [vmem:[%s1 + $0x44] sm:$0xf]
  %v65 = vld [vmem:[%s1 + $0x48] sm:$0xf]
  %v66 = vld [vmem:[%s1 + $0x4c] sm:$0xf]
  %v67 = vld [vmem:[%s1 + $0x50] sm:$0xf]
  %v68 = vld [vmem:[%s1 + $0x54] sm:$0xf]
  %v69 = vld [vmem:[%s1 + $0x58] sm:$0xf]
  %v70 = vld [vmem:[%s1 + $0x5c] sm:$0xf]
  %v71 = vld [vmem:[%s1 + $0x60] sm:$0xf]
  %v72 = vld [vmem:[%s1 + $0x64] sm:$0xf]
  %v73 = vld [vmem:[%s1 + $0x68] sm:$0xf]
  %v74 = vld [vmem:[%s1 + $0x6c] sm:$0xf]
  %v75 = vld [vmem:[%s1 + $0x70] sm:$0xf]
  %v76 = vld [vmem:[%s1 + $0x74] sm:$0xf]
  %v77 = vld [vmem:[%s1 + $0x78] sm:$0xf]
  %v78 = vld [vmem:[%s1 + $0x7c] sm:$0xf]
  %v79 = vld [vmem:[%s1 + $0x80] sm:$0xf]
  %v80 = vld [vmem:[%s1 + $0x84] sm:$0xf]
  %v81 = vld [vmem:[%s1 + $0x88] sm:$0xf]
  %v82 = vld [vmem:[%s1 + $0x8c] sm:$0xf]
  %v83 = vld [vmem:[%s1 + $0x90] sm:$0xf]
  %v84 = vld [vmem:[%s1 + $0x94] sm:$0xf]
  %v85 = vld [vmem:[%s1 + $0x98] sm:$0xf]
  %v86 = vld [vmem:[%s1 + $0x9c] sm:$0xf]
  %v87 = vld [vmem:[%s1 + $0xa0] sm:$0xf]
  %v88 = vld [vmem:[%s1 + $0xa4] sm:$0xf]
  %v89 = vld [vmem:[%s1 + $0xa8] sm:$0xf]
  %v90 = vld [vmem:[%s1 + $0xac] sm:$0xf]
  %v91 = vld [vmem:[%s1 + $0xb0] sm:$0xf]
  %v92 = vld [vmem:[%s1 + $0xb4] sm:$0xf]
  %v93 = vld [vmem:[%s1 + $0xb8] sm:$0xf]
  %v94 = vld [vmem:[%s1 + $0xbc] sm:$0xf]
  %v95 = vld [vmem:[%s1 + $0xc0] sm:$0xf]
  %v96 = vld [vmem:[%s1 + $0xc4] sm:$0xf]
  %v97 = vld [vmem:[%s2] sm:$0x1]
  %v99 = vlaneseq
  %v100 = vshrl.u32 %v99, 7
  %v101 = vsub.s32 0, %v100
  %v102 = vrot.slane %v97, %v101
  %v136 = vunpack.c.l.b16 %v15
  %v137 = vunpack.c.h.b16 %v15
  %v138 = vunpack.c.l.b16 %v16
  %v139 = vunpack.c.h.b16 %v16
  %v140 = vunpack.c.l.b16 %v17
  %v141 = vunpack.c.h.b16 %v17
  %v142 = vunpack.c.l.b16 %v18
  %v143 = vunpack.c.h.b16 %v18
  %v144 = vunpack.c.l.b16 %v19
  %v145 = vunpack.c.h.b16 %v19
  %v146 = vunpack.c.l.b16 %v20
  %v147 = vunpack.c.h.b16 %v20
  %v148 = vunpack.c.l.b16 %v21
  %v149 = vunpack.c.h.b16 %v21
  %v150 = vunpack.c.l.b16 %v22
  %v151 = vunpack.c.h.b16 %v22
  %v152 = vunpack.c.l.b16 %v23
  %v153 = vunpack.c.h.b16 %v23
  %v154 = vunpack.c.l.b16 %v24
  %v155 = vunpack.c.h.b16 %v24
  %v156 = vunpack.c.l.b16 %v25
  %v157 = vunpack.c.h.b16 %v25
  %v158 = vunpack.c.l.b16 %v26
  %v159 = vunpack.c.h.b16 %v26
  %v160 = vunpack.c.l.b16 %v27
  %v161 = vunpack.c.h.b16 %v27
  %v162 = vunpack.c.l.b16 %v28
  %v163 = vunpack.c.h.b16 %v28
  %v164 = vunpack.c.l.b16 %v29
  %v165 = vunpack.c.h.b16 %v29
  %v166 = vunpack.c.l.b16 %v30
  %v167 = vunpack.c.h.b16 %v30
  %v168 = vunpack.c.l.b16 %v31
  %v169 = vunpack.c.h.b16 %v31
  %v170 = vunpack.c.l.b16 %v32
  %v171 = vunpack.c.h.b16 %v32
  %v172 = vunpack.c.l.b16 %v33
  %v173 = vunpack.c.h.b16 %v33
  %v174 = vunpack.c.l.b16 %v34
  %v175 = vunpack.c.h.b16 %v34
  %v176 = vunpack.c.l.b16 %v35
  %v177 = vunpack.c.h.b16 %v35
  %v178 = vunpack.c.l.b16 %v36
  %v179 = vunpack.c.h.b16 %v36
  %v180 = vunpack.c.l.b16 %v37
  %v181 = vunpack.c.h.b16 %v37
  %v182 = vunpack.c.l.b16 %v38
  %v183 = vunpack.c.h.b16 %v38
  %v184 = vunpack.c.l.b16 %v39
  %v185 = vunpack.c.h.b16 %v39
  %v186 = vunpack.c.l.b16 %v40
  %v187 = vunpack.c.h.b16 %v40
  %v188 = vunpack.c.l.b16 %v41
  %v189 = vunpack.c.h.b16 %v41
  %v190 = vunpack.c.l.b16 %v42
  %v191 = vunpack.c.h.b16 %v42
  %v192 = vunpack.c.l.b16 %v43
  %v193 = vunpack.c.h.b16 %v43
  %v194 = vunpack.c.l.b16 %v44
  %v195 = vunpack.c.h.b16 %v44
  %v196 = vunpack.c.l.b16 %v45
  %v197 = vunpack.c.h.b16 %v45
  %v198 = vunpack.c.l.b16 %v46
  %v199 = vunpack.c.h.b16 %v46
  %v200 = vpack.c.b16 %v140, %v136
  %v201 = vpack.c.b16 %v141, %v137
  %v202 = vpack.c.b16 %v142, %v138
  %v203 = vpack.c.b16 %v143, %v139
  %v204 = vpack.c.b16 %v148, %v144
  %v205 = vpack.c.b16 %v149, %v145
  %v206 = vpack.c.b16 %v150, %v146
  %v207 = vpack.c.b16 %v151, %v147
  %v208 = vpack.c.b16 %v156, %v152
  %v209 = vpack.c.b16 %v157, %v153
  %v210 = vpack.c.b16 %v158, %v154
  %v211 = vpack.c.b16 %v159, %v155
  %v212 = vpack.c.b16 %v164, %v160
  %v213 = vpack.c.b16 %v165, %v161
  %v214 = vpack.c.b16 %v166, %v162
  %v215 = vpack.c.b16 %v167, %v163
  %v216 = vpack.c.b16 %v172, %v168
  %v217 = vpack.c.b16 %v173, %v169
  %v218 = vpack.c.b16 %v174, %v170
  %v219 = vpack.c.b16 %v175, %v171
  %v220 = vpack.c.b16 %v180, %v176
  %v221 = vpack.c.b16 %v181, %v177
  %v222 = vpack.c.b16 %v182, %v178
  %v223 = vpack.c.b16 %v183, %v179
  %v224 = vpack.c.b16 %v188, %v184
  %v225 = vpack.c.b16 %v189, %v185
  %v226 = vpack.c.b16 %v190, %v186
  %v227 = vpack.c.b16 %v191, %v187
  %v228 = vpack.c.b16 %v196, %v192
  %v229 = vpack.c.b16 %v197, %v193
  %v230 = vpack.c.b16 %v198, %v194
  %v231 = vpack.c.b16 %v199, %v195
  %v306 = vunpack.c.l.b16 %v47
  %v307 = vunpack.c.l.b16 %v48
  %v308 = vunpack.c.l.b16 %v49
  %v309 = vunpack.c.l.b16 %v50
  %v310 = vunpack.c.l.b16 %v51
  %v311 = vunpack.c.l.b16 %v52
  %v312 = vunpack.c.l.b16 %v53
  %v313 = vunpack.c.l.b16 %v54
  %v314 = vunpack.c.l.b16 %v55
  %v315 = vunpack.c.l.b16 %v56
  %v316 = vunpack.c.l.b16 %v57
  %v317 = vunpack.c.l.b16 %v58
  %v318 = vunpack.c.l.b16 %v59
  %v319 = vunpack.c.l.b16 %v60
  %v320 = vunpack.c.l.b16 %v61
  %v321 = vunpack.c.l.b16 %v62
  %v322 = vunpack.c.l.b16 %v63
  %v323 = vunpack.c.l.b16 %v64
  %v324 = vunpack.c.l.b16 %v65
  %v325 = vunpack.c.l.b16 %v66
  %v326 = vunpack.c.l.b16 %v67
  %v327 = vunpack.c.l.b16 %v68
  %v328 = vunpack.c.l.b16 %v69
  %v329 = vunpack.c.l.b16 %v70
  %v330 = vunpack.c.l.b16 %v71
  %v331 = vunpack.c.l.b16 %v72
  %v332 = vunpack.c.l.b16 %v73
  %v333 = vunpack.c.l.b16 %v74
  %v334 = vunpack.c.l.b16 %v75
  %v335 = vunpack.c.l.b16 %v76
  %v336 = vunpack.c.l.b16 %v77
  %v337 = vunpack.c.l.b16 %v78
  %v338 = vunpack.c.l.b16 %v79
  %v339 = vunpack.c.l.b16 %v80
  %v340 = vunpack.c.l.b16 %v81
  %v341 = vunpack.c.l.b16 %v82
  %v342 = vunpack.c.l.b16 %v83
  %v343 = vunpack.c.l.b16 %v84
  %v344 = vunpack.c.l.b16 %v85
  %v345 = vunpack.c.l.b16 %v86
  %v346 = vunpack.c.l.b16 %v87
  %v347 = vunpack.c.l.b16 %v88
  %v348 = vunpack.c.l.b16 %v89
  %v349 = vunpack.c.l.b16 %v90
  %v350 = vunpack.c.l.b16 %v91
  %v351 = vunpack.c.l.b16 %v92
  %v352 = vunpack.c.l.b16 %v93
  %v353 = vunpack.c.l.b16 %v94
  %v354 = vunpack.c.l.b16 %v95
  %v355 = vunpack.c.l.b16 %v96
  %v356 = vpack.c.b16 %v307, %v306
  %v357 = vpack.c.b16 %v309, %v308
  %v358 = vpack.c.b16 %v311, %v310
  %v359 = vpack.c.b16 %v313, %v312
  %v360 = vpack.c.b16 %v315, %v314
  %v361 = vpack.c.b16 %v317, %v316
  %v362 = vpack.c.b16 %v319, %v318
  %v363 = vpack.c.b16 %v321, %v320
  %v364 = vpack.c.b16 %v323, %v322
  %v365 = vpack.c.b16 %v325, %v324
  %v366 = vpack.c.b16 %v327, %v326
  %v367 = vpack.c.b16 %v329, %v328
  %v368 = vpack.c.b16 %v331, %v330
  %v369 = vpack.c.b16 %v333, %v332
  %v370 = vpack.c.b16 %v335, %v334
  %v371 = vpack.c.b16 %v337, %v336
  %v372 = vpack.c.b16 %v339, %v338
  %v373 = vpack.c.b16 %v341, %v340
  %v374 = vpack.c.b16 %v343, %v342
  %v375 = vpack.c.b16 %v345, %v344
  %v376 = vpack.c.b16 %v347, %v346
  %v377 = vpack.c.b16 %v349, %v348
  %v378 = vpack.c.b16 %v351, %v350
  %v379 = vpack.c.b16 %v353, %v352
  %v380 = vpack.c.b16 %v355, %v354
  %vm406 = vcmask 130048
  %v408 = vsel %vm406, %v203, 0
  %v411 = vsel %vm406, %v207, 0
  %v414 = vsel %vm406, %v211, 0
  %v417 = vsel %vm406, %v215, 0
  %v420 = vsel %vm406, %v219, 0
  %v423 = vsel %vm406, %v223, 0
  %v426 = vsel %vm406, %v227, 0
  %v429 = vsel %vm406, %v231, 0
  %431 = vmatprep.subr.bf16.mxu0 0
  %432 = vmatpush1.bf16.msra.mxu0 %v363
  %433 = vmatprep.subr.bf16.mxu0 0
  %434 = vmatpush1.bf16.msra.mxu0 %v362
  %435 = vmatprep.subr.bf16.mxu0 0
  %436 = vmatpush1.bf16.msra.mxu0 %v361
  %437 = vmatprep.subr.bf16.mxu0 0
  %438 = vmatpush1.bf16.msra.mxu0 %v360
  %439 = vmatprep.subr.bf16.mxu0 0
  %440 = vmatpush1.bf16.msra.mxu0 %v359
  %441 = vmatprep.subr.bf16.mxu0 0
  %442 = vmatpush1.bf16.msra.mxu0 %v358
  %443 = vmatprep.subr.bf16.mxu0 0
  %444 = vmatpush1.bf16.msra.mxu0 %v357
  %445 = vmatprep.subr.bf16.mxu0 0
  %446 = vmatpush1.bf16.msra.mxu0 %v356
  %447 = vmatprep.subr.bf16.mxu0 0
  %448 = vmatpush2.bf16.msra.mxu0 %v371
  %449 = vmatprep.subr.bf16.mxu0 0
  %450 = vmatpush2.bf16.msra.mxu0 %v370
  %451 = vmatprep.subr.bf16.mxu0 0
  %452 = vmatpush2.bf16.msra.mxu0 %v369
  %453 = vmatprep.subr.bf16.mxu0 0
  %454 = vmatpush2.bf16.msra.mxu0 %v368
  %455 = vmatprep.subr.bf16.mxu0 0
  %456 = vmatpush2.bf16.msra.mxu0 %v367
  %457 = vmatprep.subr.bf16.mxu0 0
  %458 = vmatpush2.bf16.msra.mxu0 %v366
  %459 = vmatprep.subr.bf16.mxu0 0
  %460 = vmatpush2.bf16.msra.mxu0 %v365
  %461 = vmatprep.subr.bf16.mxu0 0
  %462 = vmatpush2.bf16.msra.mxu0 %v364
  %463 = vmatprep.mubr.bf16.mxu0 %v201
  %464 = vmatmul.mubr.bf16.gmra.mxu0 %v200
  %v465 = vpop.f32.mrf.mxu0
  %v466 = vadd.f32 %v102, %v465
  %v467 = vpop.f32.mrf.mxu0
  %v468 = vpop.f32.mrf.mxu0
  %v469 = vadd.f32 %v102, %v468
  %v470 = vpop.f32.mrf.mxu0
  %471 = vmatprep.mubr.bf16.mxu0 %v205
  %472 = vmatmul.mubr.bf16.gmra.mxu0 %v204
  %v473 = vpop.f32.mrf.mxu0
  %v474 = vadd.f32 %v102, %v473
  %v475 = vpop.f32.mrf.mxu0
  %v476 = vpop.f32.mrf.mxu0
  %v477 = vadd.f32 %v102, %v476
  %v478 = vpop.f32.mrf.mxu0
  %479 = vmatprep.mubr.bf16.mxu0 %v209
  %480 = vmatmul.mubr.bf16.gmra.mxu0 %v208
  %v481 = vpop.f32.mrf.mxu0
  %v482 = vadd.f32 %v102, %v481
  %v483 = vpop.f32.mrf.mxu0
  %v484 = vpop.f32.mrf.mxu0
  %v485 = vadd.f32 %v102, %v484
  %v486 = vpop.f32.mrf.mxu0
  %487 = vmatprep.mubr.bf16.mxu0 %v213
  %488 = vmatmul.mubr.bf16.gmra.mxu0 %v212
  %v489 = vpop.f32.mrf.mxu0
  %v490 = vadd.f32 %v102, %v489
  %v491 = vpop.f32.mrf.mxu0
  %v492 = vpop.f32.mrf.mxu0
  %v493 = vadd.f32 %v102, %v492
  %v494 = vpop.f32.mrf.mxu0
  %495 = vmatprep.mubr.bf16.mxu0 %v217
  %496 = vmatmul.mubr.bf16.gmra.mxu0 %v216
  %v497 = vpop.f32.mrf.mxu0
  %v498 = vadd.f32 %v102, %v497
  %v499 = vpop.f32.mrf.mxu0
  %v500 = vpop.f32.mrf.mxu0
  %v501 = vadd.f32 %v102, %v500
  %v502 = vpop.f32.mrf.mxu0
  %503 = vmatprep.mubr.bf16.mxu0 %v221
  %504 = vmatmul.mubr.bf16.gmra.mxu0 %v220
  %v505 = vpop.f32.mrf.mxu0
  %v506 = vadd.f32 %v102, %v505
  %v507 = vpop.f32.mrf.mxu0
  %v508 = vpop.f32.mrf.mxu0
  %v509 = vadd.f32 %v102, %v508
  %v510 = vpop.f32.mrf.mxu0
  %511 = vmatprep.mubr.bf16.mxu0 %v225
  %512 = vmatmul.mubr.bf16.gmra.mxu0 %v224
  %v513 = vpop.f32.mrf.mxu0
  %v514 = vadd.f32 %v102, %v513
  %v515 = vpop.f32.mrf.mxu0
  %v516 = vpop.f32.mrf.mxu0
  %v517 = vadd.f32 %v102, %v516
  %v518 = vpop.f32.mrf.mxu0
  %519 = vmatprep.mubr.bf16.mxu0 %v229
  %520 = vmatmul.mubr.bf16.gmra.mxu0 %v228
  %v521 = vpop.f32.mrf.mxu0
  %v522 = vadd.f32 %v102, %v521
  %v523 = vpop.f32.mrf.mxu0
  %v524 = vpop.f32.mrf.mxu0
  %v525 = vadd.f32 %v102, %v524
  %v526 = vpop.f32.mrf.mxu0
  %527 = vdwg.mxu0
  %528 = vmatprep.subr.bf16.mxu0 0
  %529 = vmatpush1.bf16.msra.mxu0 %v379
  %530 = vmatprep.subr.bf16.mxu0 0
  %531 = vmatpush1.bf16.msra.mxu0 %v378
  %532 = vmatprep.subr.bf16.mxu0 0
  %533 = vmatpush1.bf16.msra.mxu0 %v377
  %534 = vmatprep.subr.bf16.mxu0 0
  %535 = vmatpush1.bf16.msra.mxu0 %v376
  %536 = vmatprep.subr.bf16.mxu0 0
  %537 = vmatpush1.bf16.msra.mxu0 %v375
  %538 = vmatprep.subr.bf16.mxu0 0
  %539 = vmatpush1.bf16.msra.mxu0 %v374
  %540 = vmatprep.subr.bf16.mxu0 0
  %541 = vmatpush1.bf16.msra.mxu0 %v373
  %542 = vmatprep.subr.bf16.mxu0 0
  %543 = vmatpush1.bf16.msra.mxu0 %v372
  %544 = vmatprep.subr.bf16.mxu0 0
  %545 = vmatpush2.bf16.msra.mxu0 0
  %546 = vmatprep.subr.bf16.mxu0 0
  %547 = vmatpush2.bf16.msra.mxu0 0
  %548 = vmatprep.subr.bf16.mxu0 0
  %549 = vmatpush2.bf16.msra.mxu0 0
  %550 = vmatprep.subr.bf16.mxu0 0
  %551 = vmatpush2.bf16.msra.mxu0 0
  %552 = vmatprep.subr.bf16.mxu0 0
  %553 = vmatpush2.bf16.msra.mxu0 0
  %554 = vmatprep.subr.bf16.mxu0 0
  %555 = vmatpush2.bf16.msra.mxu0 0
  %556 = vmatprep.subr.bf16.mxu0 0
  %557 = vmatpush2.bf16.msra.mxu0 0
  %558 = vmatprep.subr.bf16.mxu0 0
  %559 = vmatpush2.bf16.msra.mxu0 %v380
  %560 = vmatprep.mubr.bf16.mxu0 %v408
  %561 = vmatmul.mubr.bf16.gmra.mxu0 %v202
  %v562 = vpop.f32.mrf.mxu0
  %v563 = vadd.f32 %v466, %v562
  %v564 = vpop.f32.mrf.mxu0
  %v565 = vpop.f32.mrf.mxu0
  %v566 = vadd.f32 %v469, %v565
  %v567 = vpop.f32.mrf.mxu0
  %568 = vmatprep.mubr.bf16.mxu0 %v411
  %569 = vmatmul.mubr.bf16.gmra.mxu0 %v206
  %v570 = vpop.f32.mrf.mxu0
  %v571 = vadd.f32 %v474, %v570
  %v572 = vpop.f32.mrf.mxu0
  %v573 = vpop.f32.mrf.mxu0
  %v574 = vadd.f32 %v477, %v573
  %v575 = vpop.f32.mrf.mxu0
  %576 = vmatprep.mubr.bf16.mxu0 %v414
  %577 = vmatmul.mubr.bf16.gmra.mxu0 %v210
  %v578 = vpop.f32.mrf.mxu0
  %v579 = vadd.f32 %v482, %v578
  %v580 = vpop.f32.mrf.mxu0
  %v581 = vpop.f32.mrf.mxu0
  %v582 = vadd.f32 %v485, %v581
  %v583 = vpop.f32.mrf.mxu0
  %584 = vmatprep.mubr.bf16.mxu0 %v417
  %585 = vmatmul.mubr.bf16.gmra.mxu0 %v214
  %v586 = vpop.f32.mrf.mxu0
  %v587 = vadd.f32 %v490, %v586
  %v588 = vpop.f32.mrf.mxu0
  %v589 = vpop.f32.mrf.mxu0
  %v590 = vadd.f32 %v493, %v589
  %v591 = vpop.f32.mrf.mxu0
  %592 = vmatprep.mubr.bf16.mxu0 %v420
  %593 = vmatmul.mubr.bf16.gmra.mxu0 %v218
  %v594 = vpop.f32.mrf.mxu0
  %v595 = vadd.f32 %v498, %v594
  %v596 = vpop.f32.mrf.mxu0
  %v597 = vpop.f32.mrf.mxu0
  %v598 = vadd.f32 %v501, %v597
  %v599 = vpop.f32.mrf.mxu0
  %600 = vmatprep.mubr.bf16.mxu0 %v423
  %601 = vmatmul.mubr.bf16.gmra.mxu0 %v222
  %v602 = vpop.f32.mrf.mxu0
  %v603 = vadd.f32 %v506, %v602
  %v604 = vpop.f32.mrf.mxu0
  %v605 = vpop.f32.mrf.mxu0
  %v606 = vadd.f32 %v509, %v605
  %v607 = vpop.f32.mrf.mxu0
  %608 = vmatprep.mubr.bf16.mxu0 %v426
  %609 = vmatmul.mubr.bf16.gmra.mxu0 %v226
  %v610 = vpop.f32.mrf.mxu0
  %v611 = vadd.f32 %v514, %v610
  %v612 = vpop.f32.mrf.mxu0
  %v613 = vpop.f32.mrf.mxu0
  %v614 = vadd.f32 %v517, %v613
  %v615 = vpop.f32.mrf.mxu0
  %616 = vmatprep.mubr.bf16.mxu0 %v429
  %617 = vmatmul.mubr.bf16.gmra.mxu0 %v230
  %v618 = vpop.f32.mrf.mxu0
  %v619 = vadd.f32 %v522, %v618
  %v620 = vpop.f32.mrf.mxu0
  %v621 = vpop.f32.mrf.mxu0
  %v622 = vadd.f32 %v525, %v621
  %v623 = vpop.f32.mrf.mxu0
  %624 = vdwg.mxu0
  %v625 = vmax.f32 %v563, 0.0
  %v626 = vmax.f32 %v566, 0.0
  %v627 = vmax.f32 %v571, 0.0
  %v628 = vmax.f32 %v574, 0.0
  %v629 = vmax.f32 %v579, 0.0
  %v630 = vmax.f32 %v582, 0.0
  %v631 = vmax.f32 %v587, 0.0
  %v632 = vmax.f32 %v590, 0.0
  %v633 = vmax.f32 %v595, 0.0
  %v634 = vmax.f32 %v598, 0.0
  %v635 = vmax.f32 %v603, 0.0
  %v636 = vmax.f32 %v606, 0.0
  %v637 = vmax.f32 %v611, 0.0
  %v638 = vmax.f32 %v614, 0.0
  %v639 = vmax.f32 %v619, 0.0
  %v640 = vmax.f32 %v622, 0.0
  %641 = vst [vmem:[%s3] sm:$0xff] %v625
  %642 = vst [vmem:[%s3 + $0x8] sm:$0xff] %v626
  %643 = vst [vmem:[%s3 + $0x10] sm:$0xff] %v627
  %644 = vst [vmem:[%s3 + $0x18] sm:$0xff] %v628
  %645 = vst [vmem:[%s3 + $0x20] sm:$0xff] %v629
  %646 = vst [vmem:[%s3 + $0x28] sm:$0xff] %v630
  %647 = vst [vmem:[%s3 + $0x30] sm:$0xff] %v631
  %648 = vst [vmem:[%s3 + $0x38] sm:$0xff] %v632
  %649 = vst [vmem:[%s3 + $0x40] sm:$0xff] %v633
  %650 = vst [vmem:[%s3 + $0x48] sm:$0xff] %v634
  %651 = vst [vmem:[%s3 + $0x50] sm:$0xff] %v635
  %652 = vst [vmem:[%s3 + $0x58] sm:$0xff] %v636
  %653 = vst [vmem:[%s3 + $0x60] sm:$0xff] %v637
  %654 = vst [vmem:[%s3 + $0x68] sm:$0xff] %v638
  %655 = vst [vmem:[%s3 + $0x70] sm:$0xff] %v639
  %656 = vst [vmem:[%s3 + $0x78] sm:$0xff] %v640
  // Predicated region
  $region14: #{net_forward.13} parent=0 // pred_check
    _
  $region15: #{net_forward.13} parent=0 // pred_check_branch
    %658 = sbr.rel (0) target = $region17
  $region16: #{net_forward.13} parent=0 // pred_region
    _
  $region17: #{net_forward.13} parent=0 // pred_fallthru
    _
  // Predicated region
  $region18: #{net_forward.13} parent=0 // pred_check
    _
  $region19: #{net_forward.13} parent=0 // pred_check_branch
    %660 = sbr.rel (0) target = $region21
  $region20: #{net_forward.13} parent=0 // pred_region
    _
  $region21: #{net_forward.13} parent=0 // pred_fallthru
    _

// kernel: net_forward.15
$region0: #{net_forward.15}
  #allocation0 [shape = 'u32[]', space=smem, size = 0x4, offset = 0x4, fixed_abs, tag = 'smem constant byte address 0x4 - core index']
  #allocation1 [shape = 'u32[144,128]{1,0:T(1,128)}', space=vmem, size = 0x12000, scoped, tag = 'internal scratch']
  %s0 = inlined_call_operand.vmem [shape: bf16[32,288], index: 0, kind: input, shape index: {}]
  %s1 = inlined_call_operand.vmem [shape: bf16[288,128], index: 1, kind: input, shape index: {}]
  %s2 = inlined_call_operand.vmem [shape: f32[1,128], index: 2, kind: input, shape index: {}]
  %s3 = inlined_call_operand.vmem [shape: f32[32,128], index: 3, kind: output, shape index: {}]
  %s4 = sld [smem:[#allocation0]]
  $region22: #{net_forward.15} parent=0
    _
  %s6 = ssub.s32 1, %s4
  %s7 = scalar_select 0, %s6, %s4
  // Predicated region
  $region2: #{net_forward.15} parent=0 // pred_check
    _
  $region3: #{net_forward.15} parent=0 // pred_check_branch
    %9 = sbr.rel (0) target = $region5
  $region4: #{net_forward.15} parent=0 // pred_region
    _
  $region5: #{net_forward.15} parent=0 // pred_fallthru
    _
  // Predicated region
  $region6: #{net_forward.15} parent=0 // pred_check
    _
  $region7: #{net_forward.15} parent=0 // pred_check_branch
    %11 = sbr.rel (0) target = $region9
  $region8: #{net_forward.15} parent=0 // pred_region
    _
  $region9: #{net_forward.15} parent=0 // pred_fallthru
    _
  // Predicated region
  $region10: #{net_forward.15} parent=0 // pred_check
    _
  $region11: #{net_forward.15} parent=0 // pred_check_branch
    %13 = sbr.rel (0) target = $region13
  $region12: #{net_forward.15} parent=0 // pred_region
    _
  $region13: #{net_forward.15} parent=0 // pred_fallthru
    _
  %v15 = vld [vmem:[%s0] sm:$0xff]
  %v16 = vld [vmem:[%s0 + $0x8] sm:$0xf]
  %v17 = vld [vmem:[%s0 + $0xc] sm:$0xff]
  %v18 = vld [vmem:[%s0 + $0x14] sm:$0xf]
  %v19 = vld [vmem:[%s0 + $0x18] sm:$0xff]
  %v20 = vld [vmem:[%s0 + $0x20] sm:$0xf]
  %v21 = vld [vmem:[%s0 + $0x24] sm:$0xff]
  %v22 = vld [vmem:[%s0 + $0x2c] sm:$0xf]
  %v23 = vld [vmem:[%s1] sm:$0xf]
  %v24 = vld [vmem:[%s1 + $0x4] sm:$0xf]
  %v25 = vld [vmem:[%s1 + $0x8] sm:$0xf]
  %v26 = vld [vmem:[%s1 + $0xc] sm:$0xf]
  %v27 = vld [vmem:[%s1 + $0x10] sm:$0xf]
  %v28 = vld [vmem:[%s1 + $0x14] sm:$0xf]
  %v29 = vld [vmem:[%s1 + $0x18] sm:$0xf]
  %v30 = vld [vmem:[%s1 + $0x1c] sm:$0xf]
  %v31 = vld [vmem:[%s1 + $0x20] sm:$0xf]
  %v32 = vld [vmem:[%s1 + $0x24] sm:$0xf]
  %v33 = vld [vmem:[%s1 + $0x28] sm:$0xf]
  %v34 = vld [vmem:[%s1 + $0x2c] sm:$0xf]
  %v35 = vld [vmem:[%s1 + $0x30] sm:$0xf]
  %v36 = vld [vmem:[%s1 + $0x34] sm:$0xf]
  %v37 = vld [vmem:[%s1 + $0x38] sm:$0xf]
  %v38 = vld [vmem:[%s1 + $0x3c] sm:$0xf]
  %v39 = vld [vmem:[%s1 + $0x40] sm:$0xf]
  %v40 = vld [vmem:[%s1 + $0x44] sm:$0xf]
  %v41 = vld [vmem:[%s1 + $0x48] sm:$0xf]
  %v42 = vld [vmem:[%s1 + $0x4c] sm:$0xf]
  %v43 = vld [vmem:[%s1 + $0x50] sm:$0xf]
  %v44 = vld [vmem:[%s1 + $0x54] sm:$0xf]
  %v45 = vld [vmem:[%s1 + $0x58] sm:$0xf]
  %v46 = vld [vmem:[%s1 + $0x5c] sm:$0xf]
  %v47 = vld [vmem:[%s1 + $0x60] sm:$0xf]
  %v48 = vld [vmem:[%s1 + $0x64] sm:$0xf]
  %v49 = vld [vmem:[%s1 + $0x68] sm:$0xf]
  %v50 = vld [vmem:[%s1 + $0x6c] sm:$0xf]
  %v51 = vld [vmem:[%s1 + $0x70] sm:$0xf]
  %v52 = vld [vmem:[%s1 + $0x74] sm:$0xf]
  %v53 = vld [vmem:[%s1 + $0x78] sm:$0xf]
  %v54 = vld [vmem:[%s1 + $0x7c] sm:$0xf]
  %v55 = vld [vmem:[%s1 + $0x80] sm:$0xf]
  %v56 = vld [vmem:[%s1 + $0x84] sm:$0xf]
  %v57 = vld [vmem:[%s1 + $0x88] sm:$0xf]
  %v58 = vld [vmem:[%s1 + $0x8c] sm:$0xf]
  %v59 = vld [vmem:[%s2] sm:$0x1]
  %v61 = vlaneseq
  %v62 = vshrl.u32 %v61, 7
  %v63 = vsub.s32 0, %v62
  %v64 = vrot.slane %v59, %v63
  %v74 = vunpack.c.l.b16 %v15
  %v75 = vunpack.c.h.b16 %v15
  %v76 = vunpack.c.l.b16 %v16
  %v77 = vunpack.c.l.b16 %v17
  %v78 = vunpack.c.h.b16 %v17
  %v79 = vunpack.c.l.b16 %v18
  %v80 = vunpack.c.l.b16 %v19
  %v81 = vunpack.c.h.b16 %v19
  %v82 = vunpack.c.l.b16 %v20
  %v83 = vunpack.c.l.b16 %v21
  %v84 = vunpack.c.h.b16 %v21
  %v85 = vunpack.c.l.b16 %v22
  %v86 = vpack.c.b16 %v77, %v74
  %v87 = vpack.c.b16 %v78, %v75
  %v88 = vpack.c.b16 %v79, %v76
  %v89 = vpack.c.b16 %v83, %v80
  %v90 = vpack.c.b16 %v84, %v81
  %v91 = vpack.c.b16 %v85, %v82
  %v132 = vunpack.c.l.b16 %v23
  %v133 = vunpack.c.l.b16 %v24
  %v134 = vunpack.c.l.b16 %v25
  %v135 = vunpack.c.l.b16 %v26
  %v136 = vunpack.c.l.b16 %v27
  %v137 = vunpack.c.l.b16 %v28
  %v138 = vunpack.c.l.b16 %v29
  %v139 = vunpack.c.l.b16 %v30
  %v140 = vunpack.c.l.b16 %v31
  %v141 = vunpack.c.l.b16 %v32
  %v142 = vunpack.c.l.b16 %v33
  %v143 = vunpack.c.l.b16 %v34
  %v144 = vunpack.c.l.b16 %v35
  %v145 = vunpack.c.l.b16 %v36
  %v146 = vunpack.c.l.b16 %v37
  %v147 = vunpack.c.l.b16 %v38
  %v148 = vunpack.c.l.b16 %v39
  %v149 = vunpack.c.l.b16 %v40
  %v150 = vunpack.c.l.b16 %v41
  %v151 = vunpack.c.l.b16 %v42
  %v152 = vunpack.c.l.b16 %v43
  %v153 = vunpack.c.l.b16 %v44
  %v154 = vunpack.c.l.b16 %v45
  %v155 = vunpack.c.l.b16 %v46
  %v156 = vunpack.c.l.b16 %v47
  %v157 = vunpack.c.l.b16 %v48
  %v158 = vunpack.c.l.b16 %v49
  %v159 = vunpack.c.l.b16 %v50
  %v160 = vunpack.c.l.b16 %v51
  %v161 = vunpack.c.l.b16 %v52
  %v162 = vunpack.c.l.b16 %v53
  %v163 = vunpack.c.l.b16 %v54
  %v164 = vunpack.c.l.b16 %v55
  %v165 = vunpack.c.l.b16 %v56
  %v166 = vunpack.c.l.b16 %v57
  %v167 = vunpack.c.l.b16 %v58
  %v168 = vpack.c.b16 %v133, %v132
  %v169 = vpack.c.b16 %v135, %v134
  %v170 = vpack.c.b16 %v137, %v136
  %v171 = vpack.c.b16 %v139, %v138
  %v172 = vpack.c.b16 %v141, %v140
  %v173 = vpack.c.b16 %v143, %v142
  %v174 = vpack.c.b16 %v145, %v144
  %v175 = vpack.c.b16 %v147, %v146
  %v176 = vpack.c.b16 %v149, %v148
  %v177 = vpack.c.b16 %v151, %v150
  %v178 = vpack.c.b16 %v153, %v152
  %v179 = vpack.c.b16 %v155, %v154
  %v180 = vpack.c.b16 %v157, %v156
  %v181 = vpack.c.b16 %v159, %v158
  %v182 = vpack.c.b16 %v161, %v160
  %v183 = vpack.c.b16 %v163, %v162
  %v184 = vpack.c.b16 %v165, %v164
  %v185 = vpack.c.b16 %v167, %v166
  %vm204 = vcmask 261120
  %v206 = vsel %vm204, %v88, 0
  %v209 = vsel %vm204, %v91, 0
  %211 = vmatprep.subr.bf16.mxu0 0
  %212 = vmatpush1.bf16.msra.mxu0 %v175
  %213 = vmatprep.subr.bf16.mxu0 0
  %214 = vmatpush1.bf16.msra.mxu0 %v174
  %215 = vmatprep.subr.bf16.mxu0 0
  %216 = vmatpush1.bf16.msra.mxu0 %v173
  %217 = vmatprep.subr.bf16.mxu0 0
  %218 = vmatpush1.bf16.msra.mxu0 %v172
  %219 = vmatprep.subr.bf16.mxu0 0
  %220 = vmatpush1.bf16.msra.mxu0 %v171
  %221 = vmatprep.subr.bf16.mxu0 0
  %222 = vmatpush1.bf16.msra.mxu0 %v170
  %223 = vmatprep.subr.bf16.mxu0 0
  %224 = vmatpush1.bf16.msra.mxu0 %v169
  %225 = vmatprep.subr.bf16.mxu0 0
  %226 = vmatpush1.bf16.msra.mxu0 %v168
  %227 = vmatprep.subr.bf16.mxu0 0
  %228 = vmatpush2.bf16.msra.mxu0 %v183
  %229 = vmatprep.subr.bf16.mxu0 0
  %230 = vmatpush2.bf16.msra.mxu0 %v182
  %231 = vmatprep.subr.bf16.mxu0 0
  %232 = vmatpush2.bf16.msra.mxu0 %v181
  %233 = vmatprep.subr.bf16.mxu0 0
  %234 = vmatpush2.bf16.msra.mxu0 %v180
  %235 = vmatprep.subr.bf16.mxu0 0
  %236 = vmatpush2.bf16.msra.mxu0 %v179
  %237 = vmatprep.subr.bf16.mxu0 0
  %238 = vmatpush2.bf16.msra.mxu0 %v178
  %239 = vmatprep.subr.bf16.mxu0 0
  %240 = vmatpush2.bf16.msra.mxu0 %v177
  %241 = vmatprep.subr.bf16.mxu0 0
  %242 = vmatpush2.bf16.msra.mxu0 %v176
  %243 = vmatprep.mubr.bf16.mxu0 %v87
  %244 = vmatmul.mubr.bf16.gmra.mxu0 %v86
  %v245 = vpop.f32.mrf.mxu0
  %v246 = vadd.f32 %v64, %v245
  %v247 = vpop.f32.mrf.mxu0
  %v248 = vpop.f32.mrf.mxu0
  %v249 = vadd.f32 %v64, %v248
  %v250 = vpop.f32.mrf.mxu0
  %251 = vmatprep.mubr.bf16.mxu0 %v90
  %252 = vmatmul.mubr.bf16.gmra.mxu0 %v89
  %v253 = vpop.f32.mrf.mxu0
  %v254 = vadd.f32 %v64, %v253
  %v255 = vpop.f32.mrf.mxu0
  %v256 = vpop.f32.mrf.mxu0
  %v257 = vadd.f32 %v64, %v256
  %v258 = vpop.f32.mrf.mxu0
  %259 = vdwg.mxu0
  %260 = vmatprep.subr.bf16.mxu0 0
  %261 = vmatpush1.bf16.msra.mxu0 0
  %262 = vmatprep.subr.bf16.mxu0 0
  %263 = vmatpush1.bf16.msra.mxu0 0
  %264 = vmatprep.subr.bf16.mxu0 0
  %265 = vmatpush1.bf16.msra.mxu0 0
  %266 = vmatprep.subr.bf16.mxu0 0
  %267 = vmatpush1.bf16.msra.mxu0 0
  %268 = vmatprep.subr.bf16.mxu0 0
  %269 = vmatpush1.bf16.msra.mxu0 0
  %270 = vmatprep.subr.bf16.mxu0 0
  %271 = vmatpush1.bf16.msra.mxu0 0
  %272 = vmatprep.subr.bf16.mxu0 0
  %273 = vmatpush1.bf16.msra.mxu0 %v185
  %274 = vmatprep.subr.bf16.mxu0 0
  %275 = vmatpush1.bf16.msra.mxu0 %v184
  %276 = vmatprep.subr.bf16.mxu0 0
  %277 = vmatpush2.bf16.msra.mxu0 0
  %278 = vmatprep.subr.bf16.mxu0 0
  %279 = vmatpush2.bf16.msra.mxu0 0
  %280 = vmatprep.subr.bf16.mxu0 0
  %281 = vmatpush2.bf16.msra.mxu0 0
  %282 = vmatprep.subr.bf16.mxu0 0
  %283 = vmatpush2.bf16.msra.mxu0 0
  %284 = vmatprep.subr.bf16.mxu0 0
  %285 = vmatpush2.bf16.msra.mxu0 0
  %286 = vmatprep.subr.bf16.mxu0 0
  %287 = vmatpush2.bf16.msra.mxu0 0
  %288 = vmatprep.subr.bf16.mxu0 0
  %289 = vmatpush2.bf16.msra.mxu0 0
  %290 = vmatprep.subr.bf16.mxu0 0
  %291 = vmatpush2.bf16.msra.mxu0 0
  %292 = vmatprep.mubr.bf16.mxu0 0
  %293 = vmatmul.mubr.bf16.gmra.mxu0 %v206
  %v294 = vpop.f32.mrf.mxu0
  %v295 = vadd.f32 %v246, %v294
  %v296 = vpop.f32.mrf.mxu0
  %v297 = vpop.f32.mrf.mxu0
  %v298 = vadd.f32 %v249, %v297
  %v299 = vpop.f32.mrf.mxu0
  %300 = vmatprep.mubr.bf16.mxu0 0
  %301 = vmatmul.mubr.bf16.gmra.mxu0 %v209
  %v302 = vpop.f32.mrf.mxu0
  %v303 = vadd.f32 %v254, %v302
  %v304 = vpop.f32.mrf.mxu0
  %v305 = vpop.f32.mrf.mxu0
  %v306 = vadd.f32 %v257, %v305
  %v307 = vpop.f32.mrf.mxu0
  %308 = vdwg.mxu0
  %v309 = vmax.f32 %v295, 0.0
  %v310 = vmax.f32 %v298, 0.0
  %v311 = vmax.f32 %v303, 0.0
  %v312 = vmax.f32 %v306, 0.0
  %313 = vst [vmem:[%s3] sm:$0xff] %v309
  %314 = vst [vmem:[%s3 + $0x8] sm:$0xff] %v310
  %315 = vst [vmem:[%s3 + $0x10] sm:$0xff] %v311
  %316 = vst [vmem:[%s3 + $0x18] sm:$0xff] %v312
  // Predicated region
  $region14: #{net_forward.15} parent=0 // pred_check
    _
  $region15: #{net_forward.15} parent=0 // pred_check_branch
    %318 = sbr.rel (0) target = $region17
  $region16: #{net_forward.15} parent=0 // pred_region
    _
  $region17: #{net_forward.15} parent=0 // pred_fallthru
    _
  // Predicated region
  $region18: #{net_forward.15} parent=0 // pred_check
    _
  $region19: #{net_forward.15} parent=0 // pred_check_branch
    %320 = sbr.rel (0) target = $region21
  $region20: #{net_forward.15} parent=0 // pred_region
    _
  $region21: #{net_forward.15} parent=0 // pred_fallthru
    _

// kernel: net_forward.16
$region0: #{net_forward.16}
  #allocation0 [shape = 'u32[]', space=smem, size = 0x4, offset = 0x4, fixed_abs, tag = 'smem constant byte address 0x4 - core index']
  #allocation1 [shape = 'u32[144,128]{1,0:T(1,128)}', space=vmem, size = 0x12000, scoped, tag = 'internal scratch']
  %s0 = inlined_call_operand.vmem [shape: bf16[32,288], index: 0, kind: input, shape index: {}]
  %s1 = inlined_call_operand.vmem [shape: bf16[288,128], index: 1, kind: input, shape index: {}]
  %s2 = inlined_call_operand.vmem [shape: f32[1,128], index: 2, kind: input, shape index: {}]
  %s3 = inlined_call_operand.vmem [shape: f32[32,128], index: 3, kind: input, shape index: {}]
  %s4 = inlined_call_operand.vmem [shape: f32[32,128], index: 4, kind: output, shape index: {}]
  %s5 = sld [smem:[#allocation0]]
  $region26: #{net_forward.16} parent=0
    _
  %s7 = ssub.s32 1, %s5
  %s8 = scalar_select 0, %s7, %s5
  // Predicated region
  $region2: #{net_forward.16} parent=0 // pred_check
    _
  $region3: #{net_forward.16} parent=0 // pred_check_branch
    %10 = sbr.rel (0) target = $region5
  $region4: #{net_forward.16} parent=0 // pred_region
    _
  $region5: #{net_forward.16} parent=0 // pred_fallthru
    _
  // Predicated region
  $region6: #{net_forward.16} parent=0 // pred_check
    _
  $region7: #{net_forward.16} parent=0 // pred_check_branch
    %12 = sbr.rel (0) target = $region9
  $region8: #{net_forward.16} parent=0 // pred_region
    _
  $region9: #{net_forward.16} parent=0 // pred_fallthru
    _
  // Predicated region
  $region10: #{net_forward.16} parent=0 // pred_check
    _
  $region11: #{net_forward.16} parent=0 // pred_check_branch
    %14 = sbr.rel (0) target = $region13
  $region12: #{net_forward.16} parent=0 // pred_region
    _
  $region13: #{net_forward.16} parent=0 // pred_fallthru
    _
  // Predicated region
  $region14: #{net_forward.16} parent=0 // pred_check
    _
  $region15: #{net_forward.16} parent=0 // pred_check_branch
    %16 = sbr.rel (0) target = $region17
  $region16: #{net_forward.16} parent=0 // pred_region
    _
  $region17: #{net_forward.16} parent=0 // pred_fallthru
    _
  %v18 = vld [vmem:[%s0] sm:$0xff]
  %v19 = vld [vmem:[%s0 + $0x8] sm:$0xf]
  %v20 = vld [vmem:[%s0 + $0xc] sm:$0xff]
  %v21 = vld [vmem:[%s0 + $0x14] sm:$0xf]
  %v22 = vld [vmem:[%s0 + $0x18] sm:$0xff]
  %v23 = vld [vmem:[%s0 + $0x20] sm:$0xf]
  %v24 = vld [vmem:[%s0 + $0x24] sm:$0xff]
  %v25 = vld [vmem:[%s0 + $0x2c] sm:$0xf]
  %v26 = vld [vmem:[%s1] sm:$0xf]
  %v27 = vld [vmem:[%s1 + $0x4] sm:$0xf]
  %v28 = vld [vmem:[%s1 + $0x8] sm:$0xf]
  %v29 = vld [vmem:[%s1 + $0xc] sm:$0xf]
  %v30 = vld [vmem:[%s1 + $0x10] sm:$0xf]
  %v31 = vld [vmem:[%s1 + $0x14] sm:$0xf]
  %v32 = vld [vmem:[%s1 + $0x18] sm:$0xf]
  %v33 = vld [vmem:[%s1 + $0x1c] sm:$0xf]
  %v34 = vld [vmem:[%s1 + $0x20] sm:$0xf]
  %v35 = vld [vmem:[%s1 + $0x24] sm:$0xf]
  %v36 = vld [vmem:[%s1 + $0x28] sm:$0xf]
  %v37 = vld [vmem:[%s1 + $0x2c] sm:$0xf]
  %v38 = vld [vmem:[%s1 + $0x30] sm:$0xf]
  %v39 = vld [vmem:[%s1 + $0x34] sm:$0xf]
  %v40 = vld [vmem:[%s1 + $0x38] sm:$0xf]
  %v41 = vld [vmem:[%s1 + $0x3c] sm:$0xf]
  %v42 = vld [vmem:[%s1 + $0x40] sm:$0xf]
  %v43 = vld [vmem:[%s1 + $0x44] sm:$0xf]
  %v44 = vld [vmem:[%s1 + $0x48] sm:$0xf]
  %v45 = vld [vmem:[%s1 + $0x4c] sm:$0xf]
  %v46 = vld [vmem:[%s1 + $0x50] sm:$0xf]
  %v47 = vld [vmem:[%s1 + $0x54] sm:$0xf]
  %v48 = vld [vmem:[%s1 + $0x58] sm:$0xf]
  %v49 = vld [vmem:[%s1 + $0x5c] sm:$0xf]
  %v50 = vld [vmem:[%s1 + $0x60] sm:$0xf]
  %v51 = vld [vmem:[%s1 + $0x64] sm:$0xf]
  %v52 = vld [vmem:[%s1 + $0x68] sm:$0xf]
  %v53 = vld [vmem:[%s1 + $0x6c] sm:$0xf]
  %v54 = vld [vmem:[%s1 + $0x70] sm:$0xf]
  %v55 = vld [vmem:[%s1 + $0x74] sm:$0xf]
  %v56 = vld [vmem:[%s1 + $0x78] sm:$0xf]
  %v57 = vld [vmem:[%s1 + $0x7c] sm:$0xf]
  %v58 = vld [vmem:[%s1 + $0x80] sm:$0xf]
  %v59 = vld [vmem:[%s1 + $0x84] sm:$0xf]
  %v60 = vld [vmem:[%s1 + $0x88] sm:$0xf]
  %v61 = vld [vmem:[%s1 + $0x8c] sm:$0xf]
  %v62 = vld [vmem:[%s2] sm:$0x1]
  %v64 = vlaneseq
  %v65 = vshrl.u32 %v64, 7
  %v66 = vsub.s32 0, %v65
  %v67 = vrot.slane %v62, %v66
  %v77 = vunpack.c.l.b16 %v18
  %v78 = vunpack.c.h.b16 %v18
  %v79 = vunpack.c.l.b16 %v19
  %v80 = vunpack.c.l.b16 %v20
  %v81 = vunpack.c.h.b16 %v20
  %v82 = vunpack.c.l.b16 %v21
  %v83 = vunpack.c.l.b16 %v22
  %v84 = vunpack.c.h.b16 %v22
  %v85 = vunpack.c.l.b16 %v23
  %v86 = vunpack.c.l.b16 %v24
  %v87 = vunpack.c.h.b16 %v24
  %v88 = vunpack.c.l.b16 %v25
  %v89 = vpack.c.b16 %v80, %v77
  %v90 = vpack.c.b16 %v81, %v78
  %v91 = vpack.c.b16 %v82, %v79
  %v92 = vpack.c.b16 %v86, %v83
  %v93 = vpack.c.b16 %v87, %v84
  %v94 = vpack.c.b16 %v88, %v85
  %v135 = vunpack.c.l.b16 %v26
  %v136 = vunpack.c.l.b16 %v27
  %v137 = vunpack.c.l.b16 %v28
  %v138 = vunpack.c.l.b16 %v29
  %v139 = vunpack.c.l.b16 %v30
  %v140 = vunpack.c.l.b16 %v31
  %v141 = vunpack.c.l.b16 %v32
  %v142 = vunpack.c.l.b16 %v33
  %v143 = vunpack.c.l.b16 %v34
  %v144 = vunpack.c.l.b16 %v35
  %v145 = vunpack.c.l.b16 %v36
  %v146 = vunpack.c.l.b16 %v37
  %v147 = vunpack.c.l.b16 %v38
  %v148 = vunpack.c.l.b16 %v39
  %v149 = vunpack.c.l.b16 %v40
  %v150 = vunpack.c.l.b16 %v41
  %v151 = vunpack.c.l.b16 %v42
  %v152 = vunpack.c.l.b16 %v43
  %v153 = vunpack.c.l.b16 %v44
  %v154 = vunpack.c.l.b16 %v45
  %v155 = vunpack.c.l.b16 %v46
  %v156 = vunpack.c.l.b16 %v47
  %v157 = vunpack.c.l.b16 %v48
  %v158 = vunpack.c.l.b16 %v49
  %v159 = vunpack.c.l.b16 %v50
  %v160 = vunpack.c.l.b16 %v51
  %v161 = vunpack.c.l.b16 %v52
  %v162 = vunpack.c.l.b16 %v53
  %v163 = vunpack.c.l.b16 %v54
  %v164 = vunpack.c.l.b16 %v55
  %v165 = vunpack.c.l.b16 %v56
  %v166 = vunpack.c.l.b16 %v57
  %v167 = vunpack.c.l.b16 %v58
  %v168 = vunpack.c.l.b16 %v59
  %v169 = vunpack.c.l.b16 %v60
  %v170 = vunpack.c.l.b16 %v61
  %v171 = vpack.c.b16 %v136, %v135
  %v172 = vpack.c.b16 %v138, %v137
  %v173 = vpack.c.b16 %v140, %v139
  %v174 = vpack.c.b16 %v142, %v141
  %v175 = vpack.c.b16 %v144, %v143
  %v176 = vpack.c.b16 %v146, %v145
  %v177 = vpack.c.b16 %v148, %v147
  %v178 = vpack.c.b16 %v150, %v149
  %v179 = vpack.c.b16 %v152, %v151
  %v180 = vpack.c.b16 %v154, %v153
  %v181 = vpack.c.b16 %v156, %v155
  %v182 = vpack.c.b16 %v158, %v157
  %v183 = vpack.c.b16 %v160, %v159
  %v184 = vpack.c.b16 %v162, %v161
  %v185 = vpack.c.b16 %v164, %v163
  %v186 = vpack.c.b16 %v166, %v165
  %v187 = vpack.c.b16 %v168, %v167
  %v188 = vpack.c.b16 %v170, %v169
  %vm207 = vcmask 261120
  %v209 = vsel %vm207, %v91, 0
  %v212 = vsel %vm207, %v94, 0
  %214 = vmatprep.subr.bf16.mxu0 0
  %215 = vmatpush1.bf16.msra.mxu0 %v178
  %216 = vmatprep.subr.bf16.mxu0 0
  %217 = vmatpush1.bf16.msra.mxu0 %v177
  %218 = vmatprep.subr.bf16.mxu0 0
  %219 = vmatpush1.bf16.msra.mxu0 %v176
  %220 = vmatprep.subr.bf16.mxu0 0
  %221 = vmatpush1.bf16.msra.mxu0 %v175
  %222 = vmatprep.subr.bf16.mxu0 0
  %223 = vmatpush1.bf16.msra.mxu0 %v174
  %224 = vmatprep.subr.bf16.mxu0 0
  %225 = vmatpush1.bf16.msra.mxu0 %v173
  %226 = vmatprep.subr.bf16.mxu0 0
  %227 = vmatpush1.bf16.msra.mxu0 %v172
  %228 = vmatprep.subr.bf16.mxu0 0
  %229 = vmatpush1.bf16.msra.mxu0 %v171
  %230 = vmatprep.subr.bf16.mxu0 0
  %231 = vmatpush2.bf16.msra.mxu0 %v186
  %232 = vmatprep.subr.bf16.mxu0 0
  %233 = vmatpush2.bf16.msra.mxu0 %v185
  %234 = vmatprep.subr.bf16.mxu0 0
  %235 = vmatpush2.bf16.msra.mxu0 %v184
  %236 = vmatprep.subr.bf16.mxu0 0
  %237 = vmatpush2.bf16.msra.mxu0 %v183
  %238 = vmatprep.subr.bf16.mxu0 0
  %239 = vmatpush2.bf16.msra.mxu0 %v182
  %240 = vmatprep.subr.bf16.mxu0 0
  %241 = vmatpush2.bf16.msra.mxu0 %v181
  %242 = vmatprep.subr.bf16.mxu0 0
  %243 = vmatpush2.bf16.msra.mxu0 %v180
  %244 = vmatprep.subr.bf16.mxu0 0
  %245 = vmatpush2.bf16.msra.mxu0 %v179
  %246 = vmatprep.mubr.bf16.mxu0 %v90
  %247 = vmatmul.mubr.bf16.gmra.mxu0 %v89
  %v248 = vpop.f32.mrf.mxu0
  %v249 = vadd.f32 %v67, %v248
  %v250 = vpop.f32.mrf.mxu0
  %v251 = vpop.f32.mrf.mxu0
  %v252 = vadd.f32 %v67, %v251
  %v253 = vpop.f32.mrf.mxu0
  %254 = vmatprep.mubr.bf16.mxu0 %v93
  %255 = vmatmul.mubr.bf16.gmra.mxu0 %v92
  %v256 = vpop.f32.mrf.mxu0
  %v257 = vadd.f32 %v67, %v256
  %v258 = vpop.f32.mrf.mxu0
  %v259 = vpop.f32.mrf.mxu0
  %v260 = vadd.f32 %v67, %v259
  %v261 = vpop.f32.mrf.mxu0
  %262 = vdwg.mxu0
  %263 = vmatprep.subr.bf16.mxu0 0
  %264 = vmatpush1.bf16.msra.mxu0 0
  %265 = vmatprep.subr.bf16.mxu0 0
  %266 = vmatpush1.bf16.msra.mxu0 0
  %267 = vmatprep.subr.bf16.mxu0 0
  %268 = vmatpush1.bf16.msra.mxu0 0
  %269 = vmatprep.subr.bf16.mxu0 0
  %270 = vmatpush1.bf16.msra.mxu0 0
  %271 = vmatprep.subr.bf16.mxu0 0
  %272 = vmatpush1.bf16.msra.mxu0 0
  %273 = vmatprep.subr.bf16.mxu0 0
  %274 = vmatpush1.bf16.msra.mxu0 0
  %275 = vmatprep.subr.bf16.mxu0 0
  %276 = vmatpush1.bf16.msra.mxu0 %v188
  %277 = vmatprep.subr.bf16.mxu0 0
  %278 = vmatpush1.bf16.msra.mxu0 %v187
  %279 = vmatprep.subr.bf16.mxu0 0
  %280 = vmatpush2.bf16.msra.mxu0 0
  %281 = vmatprep.subr.bf16.mxu0 0
  %282 = vmatpush2.bf16.msra.mxu0 0
  %283 = vmatprep.subr.bf16.mxu0 0
  %284 = vmatpush2.bf16.msra.mxu0 0
  %285 = vmatprep.subr.bf16.mxu0 0
  %286 = vmatpush2.bf16.msra.mxu0 0
  %287 = vmatprep.subr.bf16.mxu0 0
  %288 = vmatpush2.bf16.msra.mxu0 0
  %289 = vmatprep.subr.bf16.mxu0 0
  %290 = vmatpush2.bf16.msra.mxu0 0
  %291 = vmatprep.subr.bf16.mxu0 0
  %292 = vmatpush2.bf16.msra.mxu0 0
  %293 = vmatprep.subr.bf16.mxu0 0
  %294 = vmatpush2.bf16.msra.mxu0 0
  %295 = vmatprep.mubr.bf16.mxu0 0
  %296 = vmatmul.mubr.bf16.gmra.mxu0 %v209
  %v297 = vpop.f32.mrf.mxu0
  %v298 = vadd.f32 %v249, %v297
  %v299 = vpop.f32.mrf.mxu0
  %v300 = vpop.f32.mrf.mxu0
  %v301 = vadd.f32 %v252, %v300
  %v302 = vpop.f32.mrf.mxu0
  %303 = vmatprep.mubr.bf16.mxu0 0
  %304 = vmatmul.mubr.bf16.gmra.mxu0 %v212
  %v305 = vpop.f32.mrf.mxu0
  %v306 = vadd.f32 %v257, %v305
  %v307 = vpop.f32.mrf.mxu0
  %v308 = vpop.f32.mrf.mxu0
  %v309 = vadd.f32 %v260, %v308
  %v310 = vpop.f32.mrf.mxu0
  %311 = vdwg.mxu0
  %v312 = vld [vmem:[%s3] sm:$0xff]
  %v313 = vld [vmem:[%s3 + $0x8] sm:$0xff]
  %v314 = vld [vmem:[%s3 + $0x10] sm:$0xff]
  %v315 = vld [vmem:[%s3 + $0x18] sm:$0xff]
  %v316 = vadd.f32 %v298, %v312
  %v317 = vadd.f32 %v301, %v313
  %v318 = vadd.f32 %v306, %v314
  %v319 = vadd.f32 %v309, %v315
  %v320 = vmax.f32 %v316, 0.0
  %v321 = vmax.f32 %v317, 0.0
  %v322 = vmax.f32 %v318, 0.0
  %v323 = vmax.f32 %v319, 0.0
  %324 = vst [vmem:[%s4] sm:$0xff] %v320
  %325 = vst [vmem:[%s4 + $0x8] sm:$0xff] %v321
  %326 = vst [vmem:[%s4 + $0x10] sm:$0xff] %v322
  %327 = vst [vmem:[%s4 + $0x18] sm:$0xff] %v323
  // Predicated region
  $region18: #{net_forward.16} parent=0 // pred_check
    _
  $region19: #{net_forward.16} parent=0 // pred_check_branch
    %329 = sbr.rel (0) target = $region21
  $region20: #{net_forward.16} parent=0 // pred_region
    _
  $region21: #{net_forward.16} parent=0 // pred_fallthru
    _
  // Predicated region
  $region22: #{net_forward.16} parent=0 // pred_check
    _
  $region23: #{net_forward.16} parent=0 // pred_check_branch
    %331 = sbr.rel (0) target = $region25
  $region24: #{net_forward.16} parent=0 // pred_region
    _
  $region25: #{net_forward.16} parent=0 // pred_fallthru
    _

// kernel: net_forward.17
$region0: #{net_forward.17}
  #allocation0 [shape = 'u32[]', space=smem, size = 0x4, offset = 0x4, fixed_abs, tag = 'smem constant byte address 0x4 - core index']
  #allocation1 [shape = 'u32[144,128]{1,0:T(1,128)}', space=vmem, size = 0x12000, scoped, tag = 'internal scratch']
  %s0 = inlined_call_operand.vmem [shape: bf16[2,512], index: 0, kind: input, shape index: {}]
  %s1 = inlined_call_operand.vmem [shape: bf16[512,128], index: 1, kind: input, shape index: {}]
  %s2 = inlined_call_operand.vmem [shape: f32[1,128], index: 2, kind: input, shape index: {}]
  %s3 = inlined_call_operand.hbm [shape: f32[2,128], index: 3, kind: output, shape index: {}]
  %s4 = sld [smem:[#allocation0]]
  $region22: #{net_forward.17} parent=0
    _
  %s6 = ssub.s32 1, %s4
  %s7 = scalar_select 0, %s6, %s4
  $region1: #{net_forward.17} parent=0
    #allocation2 [shape = 'u8[1024]{0}', space=vmem, size = 0x400, scoped, tag = 'output window, operand 0, single buffered']
    #allocation3 [shape = 's32[1]{0}', space=sflag, size = 0x4, scoped, tag = 'scoped memory for net_forward.17']
    %8 = vsyncpa [#allocation3], 0
    // Predicated region
    $region2: #{net_forward.17} parent=1 // pred_check
      _
    $region3: #{net_forward.17} parent=1 // pred_check_branch
      %10 = sbr.rel (0) target = $region5
    $region4: #{net_forward.17} parent=1 // pred_region
      _
    $region5: #{net_forward.17} parent=1 // pred_fallthru
      _
    // Predicated region
    $region6: #{net_forward.17} parent=1 // pred_check
      _
    $region7: #{net_forward.17} parent=1 // pred_check_branch
      %12 = sbr.rel (0) target = $region9
    $region8: #{net_forward.17} parent=1 // pred_region
      _
    $region9: #{net_forward.17} parent=1 // pred_fallthru
      _
    // Predicated region
    $region10: #{net_forward.17} parent=1 // pred_check
      _
    $region11: #{net_forward.17} parent=1 // pred_check_branch
      %14 = sbr.rel (0) target = $region13
    $region12: #{net_forward.17} parent=1 // pred_region
      _
    $region13: #{net_forward.17} parent=1 // pred_fallthru
      _
    %v16 = vld [vmem:[%s0] sm:$0xf]
    %v17 = vld [vmem:[%s1] sm:$0xf]
    %v18 = vld [vmem:[%s1 + $0x4] sm:$0xf]
    %v19 = vld [vmem:[%s1 + $0x8] sm:$0xf]
    %v20 = vld [vmem:[%s1 + $0xc] sm:$0xf]
    %v21 = vld [vmem:[%s1 + $0x10] sm:$0xf]
    %v22 = vld [vmem:[%s1 + $0x14] sm:$0xf]
    %v23 = vld [vmem:[%s1 + $0x18] sm:$0xf]
    %v24 = vld [vmem:[%s1 + $0x1c] sm:$0xf]
    %v25 = vld [vmem:[%s1 + $0x20] sm:$0xf]
    %v26 = vld [vmem:[%s1 + $0x24] sm:$0xf]
    %v27 = vld [vmem:[%s1 + $0x28] sm:$0xf]
    %v28 = vld [vmem:[%s1 + $0x2c] sm:$0xf]
    %v29 = vld [vmem:[%s1 + $0x30] sm:$0xf]
    %v30 = vld [vmem:[%s1 + $0x34] sm:$0xf]
    %v31 = vld [vmem:[%s1 + $0x38] sm:$0xf]
    %v32 = vld [vmem:[%s1 + $0x3c] sm:$0xf]
    %v33 = vld [vmem:[%s1 + $0x40] sm:$0xf]
    %v34 = vld [vmem:[%s1 + $0x44] sm:$0xf]
    %v35 = vld [vmem:[%s1 + $0x48] sm:$0xf]
    %v36 = vld [vmem:[%s1 + $0x4c] sm:$0xf]
    %v37 = vld [vmem:[%s1 + $0x50] sm:$0xf]
    %v38 = vld [vmem:[%s1 + $0x54] sm:$0xf]
    %v39 = vld [vmem:[%s1 + $0x58] sm:$0xf]
    %v40 = vld [vmem:[%s1 + $0x5c] sm:$0xf]
    %v41 = vld [vmem:[%s1 + $0x60] sm:$0xf]
    %v42 = vld [vmem:[%s1 + $0x64] sm:$0xf]
    %v43 = vld [vmem:[%s1 + $0x68] sm:$0xf]
    %v44 = vld [vmem:[%s1 + $0x6c] sm:$0xf]
    %v45 = vld [vmem:[%s1 + $0x70] sm:$0xf]
    %v46 = vld [vmem:[%s1 + $0x74] sm:$0xf]
    %v47 = vld [vmem:[%s1 + $0x78] sm:$0xf]
    %v48 = vld [vmem:[%s1 + $0x7c] sm:$0xf]
    %v49 = vld [vmem:[%s1 + $0x80] sm:$0xf]
    %v50 = vld [vmem:[%s1 + $0x84] sm:$0xf]
    %v51 = vld [vmem:[%s1 + $0x88] sm:$0xf]
    %v52 = vld [vmem:[%s1 + $0x8c] sm:$0xf]
    %v53 = vld [vmem:[%s1 + $0x90] sm:$0xf]
    %v54 = vld [vmem:[%s1 + $0x94] sm:$0xf]
    %v55 = vld [vmem:[%s1 + $0x98] sm:$0xf]
    %v56 = vld [vmem:[%s1 + $0x9c] sm:$0xf]
    %v57 = vld [vmem:[%s1 + $0xa0] sm:$0xf]
    %v58 = vld [vmem:[%s1 + $0xa4] sm:$0xf]
    %v59 = vld [vmem:[%s1 + $0xa8] sm:$0xf]
    %v60 = vld [vmem:[%s1 + $0xac] sm:$0xf]
    %v61 = vld [vmem:[%s1 + $0xb0] sm:$0xf]
    %v62 = vld [vmem:[%s1 + $0xb4] sm:$0xf]
    %v63 = vld [vmem:[%s1 + $0xb8] sm:$0xf]
    %v64 = vld [vmem:[%s1 + $0xbc] sm:$0xf]
    %v65 = vld [vmem:[%s1 + $0xc0] sm:$0xf]
    %v66 = vld [vmem:[%s1 + $0xc4] sm:$0xf]
    %v67 = vld [vmem:[%s1 + $0xc8] sm:$0xf]
    %v68 = vld [vmem:[%s1 + $0xcc] sm:$0xf]
    %v69 = vld [vmem:[%s1 + $0xd0] sm:$0xf]
    %v70 = vld [vmem:[%s1 + $0xd4] sm:$0xf]
    %v71 = vld [vmem:[%s1 + $0xd8] sm:$0xf]
    %v72 = vld [vmem:[%s1 + $0xdc] sm:$0xf]
    %v73 = vld [vmem:[%s1 + $0xe0] sm:$0xf]
    %v74 = vld [vmem:[%s1 + $0xe4] sm:$0xf]
    %v75 = vld [vmem:[%s1 + $0xe8] sm:$0xf]
    %v76 = vld [vmem:[%s1 + $0xec] sm:$0xf]
    %v77 = vld [vmem:[%s1 + $0xf0] sm:$0xf]
    %v78 = vld [vmem:[%s1 + $0xf4] sm:$0xf]
    %v79 = vld [vmem:[%s1 + $0xf8] sm:$0xf]
    %v80 = vld [vmem:[%s1 + $0xfc] sm:$0xf]
    %v81 = vld [vmem:[%s2] sm:$0x1]
    %v83 = vlaneseq
    %v84 = vshrl.u32 %v83, 7
    %v85 = vsub.s32 0, %v84
    %v86 = vrot.slane %v81, %v85
    %v90 = vunpack.c.l.s4 1966171168
    %v91 = vunpack.c.0.s8 %v90
    %v92 = vlaneseq
    %v93 = vshrl.u32 %v92, 7
    %v94 = vsub.s32 %v91, %v93
    %v95 = vrot.slane %v16, %v94
    %v96 = vcombine.high %v95, %v95
    %v98 = vunpack.c.l.s4 1966171168
    %v99 = vunpack.c.0.s8 %v98
    %v100 = vlaneseq
    %v101 = vshrl.u32 %v100, 7
    %v102 = vsub.s32 %v99, %v101
    %v103 = vrot.slane %v95, %v102
    %v105 = vunpack.c.l.s4 1966171168
    %v106 = vunpack.c.0.s8 %v105
    %v107 = vlaneseq
    %v108 = vshrl.u32 %v107, 7
    %v109 = vsub.s32 %v106, %v108
    %v110 = vrot.slane %v96, %v109
    %v111 = vcombine.high %v103, %v103
    %v112 = vcombine.high %v110, %v110
    %v181 = vunpack.c.l.b16 %v17
    %v182 = vunpack.c.l.b16 %v18
    %v183 = vunpack.c.l.b16 %v19
    %v184 = vunpack.c.l.b16 %v20
    %v185 = vunpack.c.l.b16 %v21
    %v186 = vunpack.c.l.b16 %v22
    %v187 = vunpack.c.l.b16 %v23
    %v188 = vunpack.c.l.b16 %v24
    %v189 = vunpack.c.l.b16 %v25
    %v190 = vunpack.c.l.b16 %v26
    %v191 = vunpack.c.l.b16 %v27
    %v192 = vunpack.c.l.b16 %v28
    %v193 = vunpack.c.l.b16 %v29
    %v194 = vunpack.c.l.b16 %v30
    %v195 = vunpack.c.l.b16 %v31
    %v196 = vunpack.c.l.b16 %v32
    %v197 = vunpack.c.l.b16 %v33
    %v198 = vunpack.c.l.b16 %v34
    %v199 = vunpack.c.l.b16 %v35
    %v200 = vunpack.c.l.b16 %v36
    %v201 = vunpack.c.l.b16 %v37
    %v202 = vunpack.c.l.b16 %v38
    %v203 = vunpack.c.l.b16 %v39
    %v204 = vunpack.c.l.b16 %v40
    %v205 = vunpack.c.l.b16 %v41
    %v206 = vunpack.c.l.b16 %v42
    %v207 = vunpack.c.l.b16 %v43
    %v208 = vunpack.c.l.b16 %v44
    %v209 = vunpack.c.l.b16 %v45
    %v210 = vunpack.c.l.b16 %v46
    %v211 = vunpack.c.l.b16 %v47
    %v212 = vunpack.c.l.b16 %v48
    %v213 = vunpack.c.l.b16 %v49
    %v214 = vunpack.c.l.b16 %v50
    %v215 = vunpack.c.l.b16 %v51
    %v216 = vunpack.c.l.b16 %v52
    %v217 = vunpack.c.l.b16 %v53
    %v218 = vunpack.c.l.b16 %v54
    %v219 = vunpack.c.l.b16 %v55
    %v220 = vunpack.c.l.b16 %v56
    %v221 = vunpack.c.l.b16 %v57
    %v222 = vunpack.c.l.b16 %v58
    %v223 = vunpack.c.l.b16 %v59
    %v224 = vunpack.c.l.b16 %v60
    %v225 = vunpack.c.l.b16 %v61
    %v226 = vunpack.c.l.b16 %v62
    %v227 = vunpack.c.l.b16 %v63
    %v228 = vunpack.c.l.b16 %v64
    %v229 = vunpack.c.l.b16 %v65
    %v230 = vunpack.c.l.b16 %v66
    %v231 = vunpack.c.l.b16 %v67
    %v232 = vunpack.c.l.b16 %v68
    %v233 = vunpack.c.l.b16 %v69
    %v234 = vunpack.c.l.b16 %v70
    %v235 = vunpack.c.l.b16 %v71
    %v236 = vunpack.c.l.b16 %v72
    %v237 = vunpack.c.l.b16 %v73
    %v238 = vunpack.c.l.b16 %v74
    %v239 = vunpack.c.l.b16 %v75
    %v240 = vunpack.c.l.b16 %v76
    %v241 = vunpack.c.l.b16 %v77
    %v242 = vunpack.c.l.b16 %v78
    %v243 = vunpack.c.l.b16 %v79
    %v244 = vunpack.c.l.b16 %v80
    %v245 = vpack.c.b16 %v182, %v181
    %v246 = vpack.c.b16 %v184, %v183
    %v247 = vpack.c.b16 %v186, %v185
    %v248 = vpack.c.b16 %v188, %v187
    %v249 = vpack.c.b16 %v190, %v189
    %v250 = vpack.c.b16 %v192, %v191
    %v251 = vpack.c.b16 %v194, %v193
    %v252 = vpack.c.b16 %v196, %v195
    %v253 = vpack.c.b16 %v198, %v197
    %v254 = vpack.c.b16 %v200, %v199
    %v255 = vpack.c.b16 %v202, %v201
    %v256 = vpack.c.b16 %v204, %v203
    %v257 = vpack.c.b16 %v206, %v205
    %v258 = vpack.c.b16 %v208, %v207
    %v259 = vpack.c.b16 %v210, %v209
    %v260 = vpack.c.b16 %v212, %v211
    %v261 = vpack.c.b16 %v214, %v213
    %v262 = vpack.c.b16 %v216, %v215
    %v263 = vpack.c.b16 %v218, %v217
    %v264 = vpack.c.b16 %v220, %v219
    %v265 = vpack.c.b16 %v222, %v221
    %v266 = vpack.c.b16 %v224, %v223
    %v267 = vpack.c.b16 %v226, %v225
    %v268 = vpack.c.b16 %v228, %v227
    %v269 = vpack.c.b16 %v230, %v229
    %v270 = vpack.c.b16 %v232, %v231
    %v271 = vpack.c.b16 %v234, %v233
    %v272 = vpack.c.b16 %v236, %v235
    %v273 = vpack.c.b16 %v238, %v237
    %v274 = vpack.c.b16 %v240, %v239
    %v275 = vpack.c.b16 %v242, %v241
    %v276 = vpack.c.b16 %v244, %v243
    %309 = vmatprep.subr.bf16.mxu0 0
    %310 = vmatpush1.bf16.msra.mxu0 %v252
    %311 = vmatprep.subr.bf16.mxu0 0
    %312 = vmatpush1.bf16.msra.mxu0 %v251
    %313 = vmatprep.subr.bf16.mxu0 0
    %314 = vmatpush1.bf16.msra.mxu0 %v250
    %315 = vmatprep.subr.bf16.mxu0 0
    %316 = vmatpush1.bf16.msra.mxu0 %v249
    %317 = vmatprep.subr.bf16.mxu0 0
    %318 = vmatpush1.bf16.msra.mxu0 %v248
    %319 = vmatprep.subr.bf16.mxu0 0
    %320 = vmatpush1.bf16.msra.mxu0 %v247
    %321 = vmatprep.subr.bf16.mxu0 0
    %322 = vmatpush1.bf16.msra.mxu0 %v246
    %323 = vmatprep.subr.bf16.mxu0 0
    %324 = vmatpush1.bf16.msra.mxu0 %v245
    %325 = vmatprep.subr.bf16.mxu0 0
    %326 = vmatpush2.bf16.msra.mxu0 %v260
    %327 = vmatprep.subr.bf16.mxu0 0
    %328 = vmatpush2.bf16.msra.mxu0 %v259
    %329 = vmatprep.subr.bf16.mxu0 0
    %330 = vmatpush2.bf16.msra.mxu0 %v258
    %331 = vmatprep.subr.bf16.mxu0 0
    %332 = vmatpush2.bf16.msra.mxu0 %v257
    %333 = vmatprep.subr.bf16.mxu0 0
    %334 = vmatpush2.bf16.msra.mxu0 %v256
    %335 = vmatprep.subr.bf16.mxu0 0
    %336 = vmatpush2.bf16.msra.mxu0 %v255
    %337 = vmatprep.subr.bf16.mxu0 0
    %338 = vmatpush2.bf16.msra.mxu0 %v254
    %339 = vmatprep.subr.bf16.mxu0 0
    %340 = vmatpush2.bf16.msra.mxu0 %v253
    %341 = vmatprep.mubr.bf16.mxu0 %v110
    %342 = vmatmul.mubr.bf16.gmra.mxu0 %v103
    %v343 = vpop.f32.mrf.mxu0
    %v344 = vadd.f32 %v86, %v343
    %v345 = vpop.f32.mrf.mxu0
    %v346 = vpop.f32.mrf.mxu0
    %v347 = vpop.f32.mrf.mxu0
    %348 = vdwg.mxu0
    %349 = vmatprep.subr.bf16.mxu0 0
    %350 = vmatpush1.bf16.msra.mxu0 %v268
    %351 = vmatprep.subr.bf16.mxu0 0
    %352 = vmatpush1.bf16.msra.mxu0 %v267
    %353 = vmatprep.subr.bf16.mxu0 0
    %354 = vmatpush1.bf16.msra.mxu0 %v266
    %355 = vmatprep.subr.bf16.mxu0 0
    %356 = vmatpush1.bf16.msra.mxu0 %v265
    %357 = vmatprep.subr.bf16.mxu0 0
    %358 = vmatpush1.bf16.msra.mxu0 %v264
    %359 = vmatprep.subr.bf16.mxu0 0
    %360 = vmatpush1.bf16.msra.mxu0 %v263
    %361 = vmatprep.subr.bf16.mxu0 0
    %362 = vmatpush1.bf16.msra.mxu0 %v262
    %363 = vmatprep.subr.bf16.mxu0 0
    %364 = vmatpush1.bf16.msra.mxu0 %v261
    %365 = vmatprep.subr.bf16.mxu0 0
    %366 = vmatpush2.bf16.msra.mxu0 %v276
    %367 = vmatprep.subr.bf16.mxu0 0
    %368 = vmatpush2.bf16.msra.mxu0 %v275
    %369 = vmatprep.subr.bf16.mxu0 0
    %370 = vmatpush2.bf16.msra.mxu0 %v274
    %371 = vmatprep.subr.bf16.mxu0 0
    %372 = vmatpush2.bf16.msra.mxu0 %v273
    %373 = vmatprep.subr.bf16.mxu0 0
    %374 = vmatpush2.bf16.msra.mxu0 %v272
    %375 = vmatprep.subr.bf16.mxu0 0
    %376 = vmatpush2.bf16.msra.mxu0 %v271
    %377 = vmatprep.subr.bf16.mxu0 0
    %378 = vmatpush2.bf16.msra.mxu0 %v270
    %379 = vmatprep.subr.bf16.mxu0 0
    %380 = vmatpush2.bf16.msra.mxu0 %v269
    %381 = vmatprep.mubr.bf16.mxu0 %v112
    %382 = vmatmul.mubr.bf16.gmra.mxu0 %v111
    %v383 = vpop.f32.mrf.mxu0
    %v384 = vadd.f32 %v344, %v383
    %v385 = vpop.f32.mrf.mxu0
    %v386 = vpop.f32.mrf.mxu0
    %v387 = vpop.f32.mrf.mxu0
    %388 = vdwg.mxu0
    %389 = vst [vmem:[#allocation2] sm:$0x3] %v384
    // Predicated region
    $region14: #{net_forward.17} parent=1 // pred_check
      _
    $region15: #{net_forward.17} parent=1 // pred_check_branch
      %391 = sbr.rel (0) target = $region17
    $region16: #{net_forward.17} parent=1 // pred_region
      %s393 = ssub.s32 32, 32
      %394 = vsyncadd [#allocation3], %s393
      %s396 = sshll.u32 [#allocation2], 4
      %s397 = int_to_ptr.vmem [resolvable:$true] %s396
      %399 = dma.vmem_to_hbm [thread:$0]  %s397, 32, %s3, [#allocation3]
    $region17: #{net_forward.17} parent=1 // pred_fallthru
      _
    // Predicated region
    $region18: #{net_forward.17} parent=1 // pred_check
      _
    $region19: #{net_forward.17} parent=1 // pred_check_branch
      %401 = sbr.rel (0) target = $region21
    $region20: #{net_forward.17} parent=1 // pred_region
      %402 = dma.done [#allocation3], 32
    $region21: #{net_forward.17} parent=1 // pred_fallthru
      _
    %403 = vsyncpa [#allocation3], 1

</llo_original>
